<compile_context>
chip_gen: v6e
topology: v6e:2x2x1
jax: 0.10.0
libtpu: 0.0.40
codegen_flags: <defaults>
</compile_context>

<pallas_src>
import functools

import numpy as np
import jax
import jax.numpy as jnp
from jax.experimental import pallas as pl
from jax.experimental.pallas import tpu as pltpu

# ----------------------------------------------------------------------------
# Layer catalog: (name, fan_in, fan_out) for every Linear used in forward().
LAYERS = [
    ("f_up_l1", 2, 2), ("f_up_l2", 2, 2),
    ("k_up_l1", 4, 4), ("k_up_l2", 4, 4),
    ("h_up_l1", 6, 6), ("h_up_l2", 6, 6),
    ("xf_up_l1", 2, 2), ("xf_up_l2", 2, 2),
    ("xk_up_l1", 4, 4), ("xk_up_l2", 4, 4),
    ("xh_up_l1", 6, 6), ("xh_up_l2", 6, 6),
    ("m_down_l1", 17, 32), ("m_down_l2", 32, 16),
    ("m_down_l2_1", 16, 6), ("m_down_l2_2", 16, 6),
    ("h_down_l1", 6, 6), ("h_down_l2", 6, 6),
    ("k_down_l1", 6, 4), ("k_down_l2", 4, 4),
    ("xh_down_l1", 6, 6), ("xh_down_l2", 6, 6),
    ("xk_down_l1", 6, 4), ("xk_down_l2", 4, 4),
    ("h_act_l1", 8, 4), ("h_act_l2", 4, 1),
    ("k_act_l1", 8, 4), ("k_act_l2", 4, 1),
    ("f_act_l1", 6, 4), ("f_act_l2", 4, 1),
    ("xh_act_l1", 8, 4), ("xh_act_l2", 4, 1),
    ("xk_act_l1", 8, 4), ("xk_act_l2", 4, 1),
    ("xf_act_l1", 6, 4), ("xf_act_l2", 4, 1),
]
LAYER_IDX = {name: i for i, (name, _, _) in enumerate(LAYERS)}
FAN_IN = {n: fi for n, fi, _ in LAYERS}
FAN_OUT = {n: fo for n, _, fo in LAYERS}

# Stages: mutually-independent layers at the same dependency depth, sharing one
# activation.  One block-diagonal matmul (per source half) per stage.
STAGES = [
    ("relu", ["f_up_l1", "xf_up_l1"]),
    ("relu", ["f_up_l2", "xf_up_l2"]),
    ("relu", ["k_up_l1", "xk_up_l1"]),
    ("relu", ["k_up_l2", "xk_up_l2"]),
    ("relu", ["h_up_l1", "xh_up_l1"]),
    ("relu", ["h_up_l2", "xh_up_l2"]),
    ("relu", ["m_down_l1"]),
    ("relu", ["m_down_l2"]),
    ("relu", ["m_down_l2_1", "m_down_l2_2"]),
    ("tanh", ["h_down_l1", "xh_down_l1"]),
    ("relu", ["h_down_l2", "xh_down_l2", "h_act_l1", "xh_act_l1"]),
    ("tanh", ["k_down_l1", "xk_down_l1"]),
    ("relu", ["k_down_l2", "xk_down_l2", "k_act_l1", "xk_act_l1"]),
    ("relu", ["f_act_l1", "xf_act_l1"]),
    # final heads, in torch's return order: [h_act_1, f_act_1, k_act_1,
    #                                        h_act_2, k_act_2, f_act_2]
    ("none", ["h_act_l2", "f_act_l2", "k_act_l2",
              "xh_act_l2", "xk_act_l2", "xf_act_l2"]),
]
N_STAGES = len(STAGES)

# Input sources of every layer, in the exact torch.cat(...) order.
# ("x", i)  -> raw input feature lane i ;  ("a", nm) -> output lanes of layer nm
SRC = {
    "f_up_l1": [("x", 4), ("x", 13)],
    "f_up_l2": [("a", "f_up_l1")],
    "k_up_l1": [("x", 3), ("x", 12), ("a", "f_up_l2")],
    "k_up_l2": [("a", "k_up_l1")],
    "h_up_l1": [("x", 2), ("x", 11), ("a", "k_up_l2")],
    "h_up_l2": [("a", "h_up_l1")],
    "xf_up_l1": [("x", 7), ("x", 16)],
    "xf_up_l2": [("a", "xf_up_l1")],
    "xk_up_l1": [("x", 6), ("x", 15), ("a", "xf_up_l2")],
    "xk_up_l2": [("a", "xk_up_l1")],
    "xh_up_l1": [("x", 5), ("x", 14), ("a", "xk_up_l2")],
    "xh_up_l2": [("a", "xh_up_l1")],
    "m_down_l1": [("x", 0), ("x", 1), ("x", 8), ("x", 9), ("x", 10),
                  ("a", "h_up_l2"), ("a", "xh_up_l2")],
    "m_down_l2": [("a", "m_down_l1")],
    "m_down_l2_1": [("a", "m_down_l2")],
    "m_down_l2_2": [("a", "m_down_l2")],
    "h_down_l1": [("a", "m_down_l2_1")],
    "h_down_l2": [("a", "h_down_l1")],
    "k_down_l1": [("a", "h_down_l2")],
    "k_down_l2": [("a", "k_down_l1")],
    "xh_down_l1": [("a", "m_down_l2_2")],
    "xh_down_l2": [("a", "xh_down_l1")],
    "xk_down_l1": [("a", "xh_down_l2")],
    "xk_down_l2": [("a", "xk_down_l1")],
    "h_act_l1": [("x", 2), ("x", 11), ("a", "m_down_l2_1")],
    "h_act_l2": [("a", "h_act_l1")],
    "k_act_l1": [("x", 3), ("x", 12), ("a", "h_down_l2")],
    "k_act_l2": [("a", "k_act_l1")],
    "f_act_l1": [("x", 4), ("x", 13), ("a", "k_down_l2")],
    "f_act_l2": [("a", "f_act_l1")],
    "xh_act_l1": [("x", 5), ("x", 14), ("a", "m_down_l2_2")],
    "xh_act_l2": [("a", "xh_act_l1")],
    "xk_act_l1": [("x", 6), ("x", 15), ("a", "xh_down_l2")],
    "xk_act_l2": [("a", "xk_act_l1")],
    "xf_act_l1": [("x", 7), ("x", 16), ("a", "xk_down_l2")],
    "xf_act_l2": [("a", "xf_act_l1")],
}

# ----------------------------------------------------------------------------
# Lane layout: two 128-lane state halves.
N_FEAT = 17
LO_W = 128
HI_W = 128
XPAD_W = 32                 # width of the HBM input block (x lanes + bias lane + pad)
LANE_ONE_LO = 17            # constant-1 lane in the lower half (biases)
LANE_ONE_HI = 127           # constant-1 lane in the upper half (biases of upper-only stages)

# Stages 0..8 write the lower half, stages 9..14 the upper half.
STAGE_DST_HALF = (0,) * 9 + (1,) * 6

# Destination-lane allocator with explicit overlap checking (review concern).
DST = {}                                   # name -> (half, local_offset, width)
_used = {0: set(range(N_FEAT + 1)), 1: {LANE_ONE_HI}}
_ptr = {0: N_FEAT + 1, 1: 0}
for _s, (_act, _names) in enumerate(STAGES):
    _half = STAGE_DST_HALF[_s]
    for _n in _names:
        _off, _w = _ptr[_half], FAN_OUT[_n]
        _lanes = set(range(_off, _off + _w))
        assert not (_lanes & _used[_half]), f"destination-lane overlap for {_n}"
        assert _off + _w <= (LO_W if _half == 0 else HI_W), f"half overflow at {_n}"
        _used[_half] |= _lanes
        DST[_n] = (_half, _off, _w)
        _ptr[_half] = _off + _w
assert _ptr[0] <= LO_W and _ptr[1] <= LANE_ONE_HI


def _src_lanes(name):
    """Source lanes of a layer as (half, local_lane), in torch.cat order."""
    lanes = []
    for kind, v in SRC[name]:
        if kind == "x":
            lanes.append((0, v))
        else:
            h, off, w = DST[v]
            lanes.extend((h, off + j) for j in range(w))
    assert len(lanes) == FAN_IN[name], name
    return lanes


# Per-stage plan: (activation, dst_half, ((op_index, src_half), ...)).
# One (128,128) matmul per (stage, source half) actually needed -> 18 ops total.
_STAGE_PLAN, _OP_SRC_HALF, _BIAS_HALF = [], [], []
for _s, (_act, _names) in enumerate(STAGES):
    _src_halves = {h for _n in _names for (h, _l) in _src_lanes(_n)}
    _bias_half = 1 if _src_halves == {1} else 0     # never adds an extra matmul
    _src_halves.add(_bias_half)
    _ops = []
    for _h in sorted(_src_halves):
        _ops.append((len(_OP_SRC_HALF), _h))
        _OP_SRC_HALF.append(_h)
    _BIAS_HALF.append(_bias_half)
    _STAGE_PLAN.append((_act, STAGE_DST_HALF[_s], tuple(_ops)))
STAGE_PLAN = tuple(_STAGE_PLAN)
N_OPS = len(_OP_SRC_HALF)

# The 6 action lanes are contiguous in the upper half, in torch's return order.
_ACT_ORDER = ["h_act_l2", "f_act_l2", "k_act_l2", "xh_act_l2", "xk_act_l2", "xf_act_l2"]
ACT_LOCAL = DST["h_act_l2"][1]
assert all(DST[n] == (1, ACT_LOCAL + i, 1) for i, n in enumerate(_ACT_ORDER))
assert ACT_LOCAL + 6 <= HI_W


# ----------------------------------------------------------------------------
def build_weight_slab(params):
    """Pack all 36 (W, b) into one (N_OPS, 128, 128) bf16 slab (host, once).

    slab[op, r, c]: source lane r of that op's source half -> destination lane
    c of the stage's destination half.  Biases live in a constant-1 lane of
    one source half (lower lane 17, or upper lane 127 for upper-only stages)."""
    slab = np.zeros((N_OPS, LO_W, HI_W), np.float32)
    for s, (_act, names) in enumerate(STAGES):
        _a, dst_half, ops = STAGE_PLAN[s]
        op_of_half = {h: i for (i, h) in ops}
        bias_half = _BIAS_HALF[s]
        bias_lane = LANE_ONE_LO if bias_half == 0 else LANE_ONE_HI
        for name in names:
            W, b = params[LAYER_IDX[name]]            # torch layout: (out,in),(out,)
            Wt = np.asarray(W, np.float32).T          # (in, out)
            bb = np.asarray(b, np.float32)
            h, d0, dw = DST[name]
            assert h == dst_half
            for j, (sh, sl) in enumerate(_src_lanes(name)):
                slab[op_of_half[sh], sl, d0:d0 + dw] = Wt[j]
            slab[op_of_half[bias_half], bias_lane, d0:d0 + dw] = bb
    # bf16 slab: MXU-native on v5e/v6e/v7x; accumulation stays f32 in-kernel.
    return jnp.asarray(slab, dtype=jnp.bfloat16)


# ----------------------------------------------------------------------------
def pnet2_kernel(x_ref, w_ref, out_ref, lo_ref):
    # Build the 256-lane state in VMEM from the narrow (Bt, 32) input block:
    # lower half in scratch, upper half directly in the lane-dense output block.
    lo_ref[...] = jnp.zeros(lo_ref.shape, jnp.float32)
    lo_ref[:, :XPAD_W] = x_ref[...]                  # x lanes 0..16 + bias-one at 17
    lane = jax.lax.broadcasted_iota(jnp.int32, out_ref.shape, 1)
    out_ref[...] = jnp.where(lane == LANE_ONE_HI,
                             jnp.float32(1.0), jnp.float32(0.0))

    halves = (lo_ref, out_ref)                       # (lower, upper) state halves, f32
    for act, dst_half, ops in STAGE_PLAN:            # static unroll: 15 stages / 18 matmuls
        y = None
        for op_idx, src_half in ops:
            lhs = halves[src_half][...].astype(jnp.bfloat16)
            part = jnp.dot(lhs, w_ref[op_idx], preferred_element_type=jnp.float32)
            y = part if y is None else y + part
        if act == "relu":
            y = jnp.maximum(y, 0.0)
        elif act == "tanh":
            y = jnp.tanh(y)
        # Non-destination columns of the stage's weights are all-zero and
        # relu/tanh/identity map 0 -> 0, so this add only fills the stage's
        # fresh destination lanes (constant-1 lanes included: untouched).
        halves[dst_half][...] = halves[dst_half][...] + y
    # out_ref already holds the upper half (incl. the 6 action lanes).


def _pnet2_pallas(x_in, slab, block_b):
    Bp = x_in.shape[0]
    assert Bp % block_b == 0 and block_b % 8 == 0
    grid = (Bp // block_b,)
    return pl.pallas_call(
        pnet2_kernel,
        out_shape=jax.ShapeDtypeStruct((Bp, HI_W), jnp.float32),
        grid_spec=pltpu.PrefetchScalarGridSpec(
            num_scalar_prefetch=0,
            grid=grid,
            in_specs=[
                pl.BlockSpec((block_b, XPAD_W), lambda i: (i, 0)),
                # one packed bf16 weight slab, constant block index -> DMA'd once
                pl.BlockSpec((N_OPS, LO_W, HI_W), lambda i: (0, 0, 0)),
            ],
            out_specs=pl.BlockSpec((block_b, HI_W), lambda i: (i, 0)),
            scratch_shapes=[pltpu.VMEM((block_b, LO_W), jnp.float32)],
        ),
        compiler_params=pltpu.CompilerParams(dimension_semantics=("parallel",)),
    )(x_in, slab)


def _default_block_b(B):
    # One tile up to 512 rows; larger batches use 512-row tiles so the
    # "parallel" grid has >= 2 steps and can shard across v7x's 2 TensorCores.
    return min(512, max(8, -(-B // 8) * 8))


@functools.partial(jax.jit, static_argnames=("block_b",))
def pnet2_apply(x, slab, *, block_b=None):
    """x: (B, 17) float32  ->  (B, 6) actions."""
    B, F = x.shape
    assert F == N_FEAT
    if block_b is None:
        block_b = _default_block_b(B)
    Bp = -(-B // block_b) * block_b
    # Narrow input slab only (x features + constant-1 bias lane); the 256-lane
    # state is assembled inside the kernel -> no padded-state HBM round trip.
    x_in = jnp.zeros((Bp, XPAD_W), jnp.float32)
    x_in = x_in.at[:B, :N_FEAT].set(x.astype(jnp.float32))
    x_in = x_in.at[:, LANE_ONE_LO].set(1.0)
    out = _pnet2_pallas(x_in, slab, block_b)
    return out[:B, ACT_LOCAL:ACT_LOCAL + 6]


# ----------------------------------------------------------------------------
def init_params(key):
    """Deterministic xavier-uniform weights + torch-default biases."""
    params = []
    for name, fan_in, fan_out in LAYERS:
        key, kw, kb = jax.random.split(key, 3)
        lim = float(np.sqrt(6.0 / (fan_in + fan_out)))
        W = jax.random.uniform(kw, (fan_out, fan_in), jnp.float32, -lim, lim)
        blim = float(1.0 / np.sqrt(fan_in))
        b = jax.random.uniform(kb, (fan_out,), jnp.float32, -blim, blim)
        params.append((W, b))
    return params


def _forward_body(xv, lin):
    """Exact mirror of PNet2.forward; `lin(name, v)` applies the named Linear."""
    relu = lambda v: jnp.maximum(v, 0.0)
    cat = lambda xs: jnp.concatenate(xs, axis=1)

    h1, k1, f1 = xv[:, 2:3], xv[:, 3:4], xv[:, 4:5]
    h2, k2, f2 = xv[:, 5:6], xv[:, 6:7], xv[:, 7:8]
    h1d, k1d, f1d = xv[:, 11:12], xv[:, 12:13], xv[:, 13:14]
    h2d, k2d, f2d = xv[:, 14:15], xv[:, 15:16], xv[:, 16:17]
    m_obs = cat([xv[:, 0:2], xv[:, 8:11]])            # x[:, [0,1,8,9,10]]

    f_up_1 = relu(lin("f_up_l2", relu(lin("f_up_l1", cat([f1, f1d])))))
    k_up_1 = relu(lin("k_up_l2", relu(lin("k_up_l1", cat([k1, k1d, f_up_1])))))
    h_up_1 = relu(lin("h_up_l2", relu(lin("h_up_l1", cat([h1, h1d, k_up_1])))))
    f_up_2 = relu(lin("xf_up_l2", relu(lin("xf_up_l1", cat([f2, f2d])))))
    k_up_2 = relu(lin("xk_up_l2", relu(lin("xk_up_l1", cat([k2, k2d, f_up_2])))))
    h_up_2 = relu(lin("xh_up_l2", relu(lin("xh_up_l1", cat([h2, h2d, k_up_2])))))

    m_down = relu(lin("m_down_l2",
                      relu(lin("m_down_l1", cat([m_obs, h_up_1, h_up_2])))))
    m_down_1 = relu(lin("m_down_l2_1", m_down))
    m_down_2 = relu(lin("m_down_l2_2", m_down))

    h_down_1 = relu(lin("h_down_l2", jnp.tanh(lin("h_down_l1", m_down_1))))
    k_down_1 = relu(lin("k_down_l2", jnp.tanh(lin("k_down_l1", h_down_1))))
    h_down_2 = relu(lin("xh_down_l2", jnp.tanh(lin("xh_down_l1", m_down_2))))
    k_down_2 = relu(lin("xk_down_l2", jnp.tanh(lin("xk_down_l1", h_down_2))))

    h_act_1 = lin("h_act_l2", relu(lin("h_act_l1", cat([h1, h1d, m_down_1]))))
    k_act_1 = lin("k_act_l2", relu(lin("k_act_l1", cat([k1, k1d, h_down_1]))))
    f_act_1 = lin("f_act_l2", relu(lin("f_act_l1", cat([f1, f1d, k_down_1]))))
    h_act_2 = lin("xh_act_l2", relu(lin("xh_act_l1", cat([h2, h2d, m_down_2]))))
    k_act_2 = lin("xk_act_l2", relu(lin("xk_act_l1", cat([k2, k2d, h_down_2]))))
    f_act_2 = lin("xf_act_l2", relu(lin("xf_act_l1", cat([f2, f2d, k_down_2]))))

    # Matches torch: cat([h_act_1, f_act_1, k_act_1, h_act_2, k_act_2, f_act_2])
    return jnp.concatenate([h_act_1, f_act_1, k_act_1,
                            h_act_2, k_act_2, f_act_2], axis=1)


def pnet2_reference(x, params):
    """Pure-JAX f32 reference mirroring the PyTorch forward for validation."""
    pd = {name: params[i] for i, (name, _, _) in enumerate(LAYERS)}

    def lin(name, v):
        W, b = pd[name]
        return v @ W.T + b

    return _forward_body(x, lin)


# ----------------------------------------------------------------------------
if __name__ == "__main__":
    key = jax.random.PRNGKey(0)
    pkey, xkey = jax.random.split(key)
    params = init_params(pkey)
    slab = build_weight_slab(params)   # packed once, outside the hot path

    B = 128   # batch; input feature dim fixed at 17 by the module
    x = jax.random.normal(xkey, (B, 17), dtype=jnp.float32)

    out = jax.block_until_ready(pnet2_apply(x, slab))
    ref = pnet2_reference(x, params)
    # bf16 MXU operands, f32 accumulation -> relaxed tolerance vs. f32 reference.
    np.testing.assert_allclose(np.asarray(out), np.asarray(ref),
                               rtol=3e-2, atol=3e-2)
    assert out.shape == (B, 6)

    # Exercise the ragged-batch padding path too.
    out2 = jax.block_until_ready(pnet2_apply(x[:20], slab))
    np.testing.assert_allclose(np.asarray(out2), np.asarray(ref)[:20],
                               rtol=3e-2, atol=3e-2)

    print("KERNEL_OK")
</pallas_src>

<mosaic_0001>
module attributes {stable_mosaic.version = 11 : i64} {
  func.func @pnet2_kernel(%arg0: i32, %arg1: memref<128x32xf32, #tpu.memory_space<vmem>>, %arg2: memref<18x128x128xbf16, #tpu.memory_space<vmem>>, %arg3: memref<128x128xf32, #tpu.memory_space<vmem>>, %arg4: memref<128x128xf32, #tpu.memory_space<vmem>>) attributes {dimension_semantics = [#tpu.dimension_semantics<parallel>], iteration_bounds = array<i64: 1>, scalar_prefetch = 0 : i64, scratch_operands = 1 : i64, tpu.core_type = #tpu.core_type<tc>, window_params = [{transform_indices = @transform_0, window_bounds = array<i64: 128, 32>}, {pipeline_mode = #tpu.pipeline_mode<synchronous>, transform_indices = @transform_1, window_bounds = array<i64: 18, 128, 128>}, {transform_indices = @transform_2, window_bounds = array<i64: 128, 128>}]} {
    %cst = arith.constant 0.000000e+00 : f32
    %0 = vector.broadcast %cst : f32 to vector<128x128xf32>
    %c0 = arith.constant 0 : index
    %c0_0 = arith.constant 0 : index
    %1 = vector.load %arg4[%c0, %c0_0] : memref<128x128xf32, #tpu.memory_space<vmem>>, vector<128x128xf32>
    tpu.vector_store %arg4[%c0, %c0_0], %0 {strides = array<i32>} : memref<128x128xf32, #tpu.memory_space<vmem>>, vector<128x128xf32>,
    %c0_1 = arith.constant 0 : index
    %c0_2 = arith.constant 0 : index
    %2 = vector.load %arg1[%c0_1, %c0_2] : memref<128x32xf32, #tpu.memory_space<vmem>>, vector<128x32xf32>
    %c0_3 = arith.constant 0 : index
    %c0_4 = arith.constant 0 : index
    %3 = vector.load %arg4[%c0_3, %c0_4] : memref<128x128xf32, #tpu.memory_space<vmem>>, vector<128x32xf32>
    tpu.vector_store %arg4[%c0_3, %c0_4], %2 {strides = array<i32>} : memref<128x128xf32, #tpu.memory_space<vmem>>, vector<128x32xf32>,
    %4 = tpu.iota {dimensions = array<i32: 1>} : vector<128x128xi32>
    %c127_i32 = arith.constant 127 : i32
    %5 = vector.broadcast %c127_i32 : i32 to vector<128x128xi32>
    %6 = arith.cmpi eq, %4, %5 : vector<128x128xi32>
    %cst_5 = arith.constant 1.000000e+00 : f32
    %cst_6 = arith.constant 0.000000e+00 : f32
    %7 = vector.broadcast %cst_5 : f32 to vector<128x128xf32>
    %8 = vector.broadcast %cst_6 : f32 to vector<128x128xf32>
    %9 = arith.select %6, %7, %8 : vector<128x128xi1>, vector<128x128xf32>
    %c0_7 = arith.constant 0 : index
    %c0_8 = arith.constant 0 : index
    %10 = vector.load %arg3[%c0_7, %c0_8] : memref<128x128xf32, #tpu.memory_space<vmem>>, vector<128x128xf32>
    tpu.vector_store %arg3[%c0_7, %c0_8], %9 {strides = array<i32>} : memref<128x128xf32, #tpu.memory_space<vmem>>, vector<128x128xf32>,
    %c0_9 = arith.constant 0 : index
    %c0_10 = arith.constant 0 : index
    %11 = vector.load %arg4[%c0_9, %c0_10] : memref<128x128xf32, #tpu.memory_space<vmem>>, vector<128x128xf32>
    %12 = arith.truncf %11 : vector<128x128xf32> to vector<128x128xbf16>
    %c0_11 = arith.constant 0 : index
    %c0_12 = arith.constant 0 : index
    %c0_13 = arith.constant 0 : index
    %13 = vector.load %arg2[%c0_11, %c0_12, %c0_13] : memref<18x128x128xbf16, #tpu.memory_space<vmem>>, vector<1x128x128xbf16>
    %14 = vector.shape_cast %13 : vector<1x128x128xbf16> to vector<128x128xbf16>
    %cst_14 = arith.constant dense<0.000000e+00> : vector<128x128xf32>
    %15 = tpu.matmul %12, %14, %cst_14 {dimension_numbers = #tpu.dot_dimension_numbers<[1], [0], [0], [1], [0, 0, 1, 1], [], []>} : vector<128x128xbf16>, vector<128x128xbf16>, vector<128x128xf32> -> vector<128x128xf32>
    %cst_15 = arith.constant 0.000000e+00 : f32
    %16 = vector.broadcast %cst_15 : f32 to vector<128x128xf32>
    %17 = arith.maximumf %15, %16 : vector<128x128xf32>
    %c0_16 = arith.constant 0 : index
    %c0_17 = arith.constant 0 : index
    %18 = vector.load %arg4[%c0_16, %c0_17] : memref<128x128xf32, #tpu.memory_space<vmem>>, vector<128x128xf32>
    %19 = arith.addf %18, %17 : vector<128x128xf32>
    %c0_18 = arith.constant 0 : index
    %c0_19 = arith.constant 0 : index
    %20 = vector.load %arg4[%c0_18, %c0_19] : memref<128x128xf32, #tpu.memory_space<vmem>>, vector<128x128xf32>
    tpu.vector_store %arg4[%c0_18, %c0_19], %19 {strides = array<i32>} : memref<128x128xf32, #tpu.memory_space<vmem>>, vector<128x128xf32>,
    %c0_20 = arith.constant 0 : index
    %c0_21 = arith.constant 0 : index
    %21 = vector.load %arg4[%c0_20, %c0_21] : memref<128x128xf32, #tpu.memory_space<vmem>>, vector<128x128xf32>
    %22 = arith.truncf %21 : vector<128x128xf32> to vector<128x128xbf16>
    %c1 = arith.constant 1 : index
    %c0_22 = arith.constant 0 : index
    %c0_23 = arith.constant 0 : index
    %23 = vector.load %arg2[%c1, %c0_22, %c0_23] : memref<18x128x128xbf16, #tpu.memory_space<vmem>>, vector<1x128x128xbf16>
    %24 = vector.shape_cast %23 : vector<1x128x128xbf16> to vector<128x128xbf16>
    %cst_24 = arith.constant dense<0.000000e+00> : vector<128x128xf32>
    %25 = tpu.matmul %22, %24, %cst_24 {dimension_numbers = #tpu.dot_dimension_numbers<[1], [0], [0], [1], [0, 0, 1, 1], [], []>} : vector<128x128xbf16>, vector<128x128xbf16>, vector<128x128xf32> -> vector<128x128xf32>
    %cst_25 = arith.constant 0.000000e+00 : f32
    %26 = vector.broadcast %cst_25 : f32 to vector<128x128xf32>
    %27 = arith.maximumf %25, %26 : vector<128x128xf32>
    %c0_26 = arith.constant 0 : index
    %c0_27 = arith.constant 0 : index
    %28 = vector.load %arg4[%c0_26, %c0_27] : memref<128x128xf32, #tpu.memory_space<vmem>>, vector<128x128xf32>
    %29 = arith.addf %28, %27 : vector<128x128xf32>
    %c0_28 = arith.constant 0 : index
    %c0_29 = arith.constant 0 : index
    %30 = vector.load %arg4[%c0_28, %c0_29] : memref<128x128xf32, #tpu.memory_space<vmem>>, vector<128x128xf32>
    tpu.vector_store %arg4[%c0_28, %c0_29], %29 {strides = array<i32>} : memref<128x128xf32, #tpu.memory_space<vmem>>, vector<128x128xf32>,
    %c0_30 = arith.constant 0 : index
    %c0_31 = arith.constant 0 : index
    %31 = vector.load %arg4[%c0_30, %c0_31] : memref<128x128xf32, #tpu.memory_space<vmem>>, vector<128x128xf32>
    %32 = arith.truncf %31 : vector<128x128xf32> to vector<128x128xbf16>
    %c2 = arith.constant 2 : index
    %c0_32 = arith.constant 0 : index
    %c0_33 = arith.constant 0 : index
    %33 = vector.load %arg2[%c2, %c0_32, %c0_33] : memref<18x128x128xbf16, #tpu.memory_space<vmem>>, vector<1x128x128xbf16>
    %34 = vector.shape_cast %33 : vector<1x128x128xbf16> to vector<128x128xbf16>
    %cst_34 = arith.constant dense<0.000000e+00> : vector<128x128xf32>
    %35 = tpu.matmul %32, %34, %cst_34 {dimension_numbers = #tpu.dot_dimension_numbers<[1], [0], [0], [1], [0, 0, 1, 1], [], []>} : vector<128x128xbf16>, vector<128x128xbf16>, vector<128x128xf32> -> vector<128x128xf32>
    %cst_35 = arith.constant 0.000000e+00 : f32
    %36 = vector.broadcast %cst_35 : f32 to vector<128x128xf32>
    %37 = arith.maximumf %35, %36 : vector<128x128xf32>
    %c0_36 = arith.constant 0 : index
    %c0_37 = arith.constant 0 : index
    %38 = vector.load %arg4[%c0_36, %c0_37] : memref<128x128xf32, #tpu.memory_space<vmem>>, vector<128x128xf32>
    %39 = arith.addf %38, %37 : vector<128x128xf32>
    %c0_38 = arith.constant 0 : index
    %c0_39 = arith.constant 0 : index
    %40 = vector.load %arg4[%c0_38, %c0_39] : memref<128x128xf32, #tpu.memory_space<vmem>>, vector<128x128xf32>
    tpu.vector_store %arg4[%c0_38, %c0_39], %39 {strides = array<i32>} : memref<128x128xf32, #tpu.memory_space<vmem>>, vector<128x128xf32>,
    %c0_40 = arith.constant 0 : index
    %c0_41 = arith.constant 0 : index
    %41 = vector.load %arg4[%c0_40, %c0_41] : memref<128x128xf32, #tpu.memory_space<vmem>>, vector<128x128xf32>
    %42 = arith.truncf %41 : vector<128x128xf32> to vector<128x128xbf16>
    %c3 = arith.constant 3 : index
    %c0_42 = arith.constant 0 : index
    %c0_43 = arith.constant 0 : index
    %43 = vector.load %arg2[%c3, %c0_42, %c0_43] : memref<18x128x128xbf16, #tpu.memory_space<vmem>>, vector<1x128x128xbf16>
    %44 = vector.shape_cast %43 : vector<1x128x128xbf16> to vector<128x128xbf16>
    %cst_44 = arith.constant dense<0.000000e+00> : vector<128x128xf32>
    %45 = tpu.matmul %42, %44, %cst_44 {dimension_numbers = #tpu.dot_dimension_numbers<[1], [0], [0], [1], [0, 0, 1, 1], [], []>} : vector<128x128xbf16>, vector<128x128xbf16>, vector<128x128xf32> -> vector<128x128xf32>
    %cst_45 = arith.constant 0.000000e+00 : f32
    %46 = vector.broadcast %cst_45 : f32 to vector<128x128xf32>
    %47 = arith.maximumf %45, %46 : vector<128x128xf32>
    %c0_46 = arith.constant 0 : index
    %c0_47 = arith.constant 0 : index
    %48 = vector.load %arg4[%c0_46, %c0_47] : memref<128x128xf32, #tpu.memory_space<vmem>>, vector<128x128xf32>
    %49 = arith.addf %48, %47 : vector<128x128xf32>
    %c0_48 = arith.constant 0 : index
    %c0_49 = arith.constant 0 : index
    %50 = vector.load %arg4[%c0_48, %c0_49] : memref<128x128xf32, #tpu.memory_space<vmem>>, vector<128x128xf32>
    tpu.vector_store %arg4[%c0_48, %c0_49], %49 {strides = array<i32>} : memref<128x128xf32, #tpu.memory_space<vmem>>, vector<128x128xf32>,
    %c0_50 = arith.constant 0 : index
    %c0_51 = arith.constant 0 : index
    %51 = vector.load %arg4[%c0_50, %c0_51] : memref<128x128xf32, #tpu.memory_space<vmem>>, vector<128x128xf32>
    %52 = arith.truncf %51 : vector<128x128xf32> to vector<128x128xbf16>
    %c4 = arith.constant 4 : index
    %c0_52 = arith.constant 0 : index
    %c0_53 = arith.constant 0 : index
    %53 = vector.load %arg2[%c4, %c0_52, %c0_53] : memref<18x128x128xbf16, #tpu.memory_space<vmem>>, vector<1x128x128xbf16>
    %54 = vector.shape_cast %53 : vector<1x128x128xbf16> to vector<128x128xbf16>
    %cst_54 = arith.constant dense<0.000000e+00> : vector<128x128xf32>
    %55 = tpu.matmul %52, %54, %cst_54 {dimension_numbers = #tpu.dot_dimension_numbers<[1], [0], [0], [1], [0, 0, 1, 1], [], []>} : vector<128x128xbf16>, vector<128x128xbf16>, vector<128x128xf32> -> vector<128x128xf32>
    %cst_55 = arith.constant 0.000000e+00 : f32
    %56 = vector.broadcast %cst_55 : f32 to vector<128x128xf32>
    %57 = arith.maximumf %55, %56 : vector<128x128xf32>
    %c0_56 = arith.constant 0 : index
    %c0_57 = arith.constant 0 : index
    %58 = vector.load %arg4[%c0_56, %c0_57] : memref<128x128xf32, #tpu.memory_space<vmem>>, vector<128x128xf32>
    %59 = arith.addf %58, %57 : vector<128x128xf32>
    %c0_58 = arith.constant 0 : index
    %c0_59 = arith.constant 0 : index
    %60 = vector.load %arg4[%c0_58, %c0_59] : memref<128x128xf32, #tpu.memory_space<vmem>>, vector<128x128xf32>
    tpu.vector_store %arg4[%c0_58, %c0_59], %59 {strides = array<i32>} : memref<128x128xf32, #tpu.memory_space<vmem>>, vector<128x128xf32>,
    %c0_60 = arith.constant 0 : index
    %c0_61 = arith.constant 0 : index
    %61 = vector.load %arg4[%c0_60, %c0_61] : memref<128x128xf32, #tpu.memory_space<vmem>>, vector<128x128xf32>
    %62 = arith.truncf %61 : vector<128x128xf32> to vector<128x128xbf16>
    %c5 = arith.constant 5 : index
    %c0_62 = arith.constant 0 : index
    %c0_63 = arith.constant 0 : index
    %63 = vector.load %arg2[%c5, %c0_62, %c0_63] : memref<18x128x128xbf16, #tpu.memory_space<vmem>>, vector<1x128x128xbf16>
    %64 = vector.shape_cast %63 : vector<1x128x128xbf16> to vector<128x128xbf16>
    %cst_64 = arith.constant dense<0.000000e+00> : vector<128x128xf32>
    %65 = tpu.matmul %62, %64, %cst_64 {dimension_numbers = #tpu.dot_dimension_numbers<[1], [0], [0], [1], [0, 0, 1, 1], [], []>} : vector<128x128xbf16>, vector<128x128xbf16>, vector<128x128xf32> -> vector<128x128xf32>
    %cst_65 = arith.constant 0.000000e+00 : f32
    %66 = vector.broadcast %cst_65 : f32 to vector<128x128xf32>
    %67 = arith.maximumf %65, %66 : vector<128x128xf32>
    %c0_66 = arith.constant 0 : index
    %c0_67 = arith.constant 0 : index
    %68 = vector.load %arg4[%c0_66, %c0_67] : memref<128x128xf32, #tpu.memory_space<vmem>>, vector<128x128xf32>
    %69 = arith.addf %68, %67 : vector<128x128xf32>
    %c0_68 = arith.constant 0 : index
    %c0_69 = arith.constant 0 : index
    %70 = vector.load %arg4[%c0_68, %c0_69] : memref<128x128xf32, #tpu.memory_space<vmem>>, vector<128x128xf32>
    tpu.vector_store %arg4[%c0_68, %c0_69], %69 {strides = array<i32>} : memref<128x128xf32, #tpu.memory_space<vmem>>, vector<128x128xf32>,
    %c0_70 = arith.constant 0 : index
    %c0_71 = arith.constant 0 : index
    %71 = vector.load %arg4[%c0_70, %c0_71] : memref<128x128xf32, #tpu.memory_space<vmem>>, vector<128x128xf32>
    %72 = arith.truncf %71 : vector<128x128xf32> to vector<128x128xbf16>
    %c6 = arith.constant 6 : index
    %c0_72 = arith.constant 0 : index
    %c0_73 = arith.constant 0 : index
    %73 = vector.load %arg2[%c6, %c0_72, %c0_73] : memref<18x128x128xbf16, #tpu.memory_space<vmem>>, vector<1x128x128xbf16>
    %74 = vector.shape_cast %73 : vector<1x128x128xbf16> to vector<128x128xbf16>
    %cst_74 = arith.constant dense<0.000000e+00> : vector<128x128xf32>
    %75 = tpu.matmul %72, %74, %cst_74 {dimension_numbers = #tpu.dot_dimension_numbers<[1], [0], [0], [1], [0, 0, 1, 1], [], []>} : vector<128x128xbf16>, vector<128x128xbf16>, vector<128x128xf32> -> vector<128x128xf32>
    %cst_75 = arith.constant 0.000000e+00 : f32
    %76 = vector.broadcast %cst_75 : f32 to vector<128x128xf32>
    %77 = arith.maximumf %75, %76 : vector<128x128xf32>
    %c0_76 = arith.constant 0 : index
    %c0_77 = arith.constant 0 : index
    %78 = vector.load %arg4[%c0_76, %c0_77] : memref<128x128xf32, #tpu.memory_space<vmem>>, vector<128x128xf32>
    %79 = arith.addf %78, %77 : vector<128x128xf32>
    %c0_78 = arith.constant 0 : index
    %c0_79 = arith.constant 0 : index
    %80 = vector.load %arg4[%c0_78, %c0_79] : memref<128x128xf32, #tpu.memory_space<vmem>>, vector<128x128xf32>
    tpu.vector_store %arg4[%c0_78, %c0_79], %79 {strides = array<i32>} : memref<128x128xf32, #tpu.memory_space<vmem>>, vector<128x128xf32>,
    %c0_80 = arith.constant 0 : index
    %c0_81 = arith.constant 0 : index
    %81 = vector.load %arg4[%c0_80, %c0_81] : memref<128x128xf32, #tpu.memory_space<vmem>>, vector<128x128xf32>
    %82 = arith.truncf %81 : vector<128x128xf32> to vector<128x128xbf16>
    %c7 = arith.constant 7 : index
    %c0_82 = arith.constant 0 : index
    %c0_83 = arith.constant 0 : index
    %83 = vector.load %arg2[%c7, %c0_82, %c0_83] : memref<18x128x128xbf16, #tpu.memory_space<vmem>>, vector<1x128x128xbf16>
    %84 = vector.shape_cast %83 : vector<1x128x128xbf16> to vector<128x128xbf16>
    %cst_84 = arith.constant dense<0.000000e+00> : vector<128x128xf32>
    %85 = tpu.matmul %82, %84, %cst_84 {dimension_numbers = #tpu.dot_dimension_numbers<[1], [0], [0], [1], [0, 0, 1, 1], [], []>} : vector<128x128xbf16>, vector<128x128xbf16>, vector<128x128xf32> -> vector<128x128xf32>
    %cst_85 = arith.constant 0.000000e+00 : f32
    %86 = vector.broadcast %cst_85 : f32 to vector<128x128xf32>
    %87 = arith.maximumf %85, %86 : vector<128x128xf32>
    %c0_86 = arith.constant 0 : index
    %c0_87 = arith.constant 0 : index
    %88 = vector.load %arg4[%c0_86, %c0_87] : memref<128x128xf32, #tpu.memory_space<vmem>>, vector<128x128xf32>
    %89 = arith.addf %88, %87 : vector<128x128xf32>
    %c0_88 = arith.constant 0 : index
    %c0_89 = arith.constant 0 : index
    %90 = vector.load %arg4[%c0_88, %c0_89] : memref<128x128xf32, #tpu.memory_space<vmem>>, vector<128x128xf32>
    tpu.vector_store %arg4[%c0_88, %c0_89], %89 {strides = array<i32>} : memref<128x128xf32, #tpu.memory_space<vmem>>, vector<128x128xf32>,
    %c0_90 = arith.constant 0 : index
    %c0_91 = arith.constant 0 : index
    %91 = vector.load %arg4[%c0_90, %c0_91] : memref<128x128xf32, #tpu.memory_space<vmem>>, vector<128x128xf32>
    %92 = arith.truncf %91 : vector<128x128xf32> to vector<128x128xbf16>
    %c8 = arith.constant 8 : index
    %c0_92 = arith.constant 0 : index
    %c0_93 = arith.constant 0 : index
    %93 = vector.load %arg2[%c8, %c0_92, %c0_93] : memref<18x128x128xbf16, #tpu.memory_space<vmem>>, vector<1x128x128xbf16>
    %94 = vector.shape_cast %93 : vector<1x128x128xbf16> to vector<128x128xbf16>
    %cst_94 = arith.constant dense<0.000000e+00> : vector<128x128xf32>
    %95 = tpu.matmul %92, %94, %cst_94 {dimension_numbers = #tpu.dot_dimension_numbers<[1], [0], [0], [1], [0, 0, 1, 1], [], []>} : vector<128x128xbf16>, vector<128x128xbf16>, vector<128x128xf32> -> vector<128x128xf32>
    %cst_95 = arith.constant 0.000000e+00 : f32
    %96 = vector.broadcast %cst_95 : f32 to vector<128x128xf32>
    %97 = arith.maximumf %95, %96 : vector<128x128xf32>
    %c0_96 = arith.constant 0 : index
    %c0_97 = arith.constant 0 : index
    %98 = vector.load %arg4[%c0_96, %c0_97] : memref<128x128xf32, #tpu.memory_space<vmem>>, vector<128x128xf32>
    %99 = arith.addf %98, %97 : vector<128x128xf32>
    %c0_98 = arith.constant 0 : index
    %c0_99 = arith.constant 0 : index
    %100 = vector.load %arg4[%c0_98, %c0_99] : memref<128x128xf32, #tpu.memory_space<vmem>>, vector<128x128xf32>
    tpu.vector_store %arg4[%c0_98, %c0_99], %99 {strides = array<i32>} : memref<128x128xf32, #tpu.memory_space<vmem>>, vector<128x128xf32>,
    %c0_100 = arith.constant 0 : index
    %c0_101 = arith.constant 0 : index
    %101 = vector.load %arg4[%c0_100, %c0_101] : memref<128x128xf32, #tpu.memory_space<vmem>>, vector<128x128xf32>
    %102 = arith.truncf %101 : vector<128x128xf32> to vector<128x128xbf16>
    %c9 = arith.constant 9 : index
    %c0_102 = arith.constant 0 : index
    %c0_103 = arith.constant 0 : index
    %103 = vector.load %arg2[%c9, %c0_102, %c0_103] : memref<18x128x128xbf16, #tpu.memory_space<vmem>>, vector<1x128x128xbf16>
    %104 = vector.shape_cast %103 : vector<1x128x128xbf16> to vector<128x128xbf16>
    %cst_104 = arith.constant dense<0.000000e+00> : vector<128x128xf32>
    %105 = tpu.matmul %102, %104, %cst_104 {dimension_numbers = #tpu.dot_dimension_numbers<[1], [0], [0], [1], [0, 0, 1, 1], [], []>} : vector<128x128xbf16>, vector<128x128xbf16>, vector<128x128xf32> -> vector<128x128xf32>
    %106 = math.tanh %105 : vector<128x128xf32>
    %c0_105 = arith.constant 0 : index
    %c0_106 = arith.constant 0 : index
    %107 = vector.load %arg3[%c0_105, %c0_106] : memref<128x128xf32, #tpu.memory_space<vmem>>, vector<128x128xf32>
    %108 = arith.addf %107, %106 : vector<128x128xf32>
    %c0_107 = arith.constant 0 : index
    %c0_108 = arith.constant 0 : index
    %109 = vector.load %arg3[%c0_107, %c0_108] : memref<128x128xf32, #tpu.memory_space<vmem>>, vector<128x128xf32>
    tpu.vector_store %arg3[%c0_107, %c0_108], %108 {strides = array<i32>} : memref<128x128xf32, #tpu.memory_space<vmem>>, vector<128x128xf32>,
    %c0_109 = arith.constant 0 : index
    %c0_110 = arith.constant 0 : index
    %110 = vector.load %arg4[%c0_109, %c0_110] : memref<128x128xf32, #tpu.memory_space<vmem>>, vector<128x128xf32>
    %111 = arith.truncf %110 : vector<128x128xf32> to vector<128x128xbf16>
    %c10 = arith.constant 10 : index
    %c0_111 = arith.constant 0 : index
    %c0_112 = arith.constant 0 : index
    %112 = vector.load %arg2[%c10, %c0_111, %c0_112] : memref<18x128x128xbf16, #tpu.memory_space<vmem>>, vector<1x128x128xbf16>
    %113 = vector.shape_cast %112 : vector<1x128x128xbf16> to vector<128x128xbf16>
    %cst_113 = arith.constant dense<0.000000e+00> : vector<128x128xf32>
    %114 = tpu.matmul %111, %113, %cst_113 {dimension_numbers = #tpu.dot_dimension_numbers<[1], [0], [0], [1], [0, 0, 1, 1], [], []>} : vector<128x128xbf16>, vector<128x128xbf16>, vector<128x128xf32> -> vector<128x128xf32>
    %c0_114 = arith.constant 0 : index
    %c0_115 = arith.constant 0 : index
    %115 = vector.load %arg3[%c0_114, %c0_115] : memref<128x128xf32, #tpu.memory_space<vmem>>, vector<128x128xf32>
    %116 = arith.truncf %115 : vector<128x128xf32> to vector<128x128xbf16>
    %c11 = arith.constant 11 : index
    %c0_116 = arith.constant 0 : index
    %c0_117 = arith.constant 0 : index
    %117 = vector.load %arg2[%c11, %c0_116, %c0_117] : memref<18x128x128xbf16, #tpu.memory_space<vmem>>, vector<1x128x128xbf16>
    %118 = vector.shape_cast %117 : vector<1x128x128xbf16> to vector<128x128xbf16>
    %cst_118 = arith.constant dense<0.000000e+00> : vector<128x128xf32>
    %119 = tpu.matmul %116, %118, %cst_118 {dimension_numbers = #tpu.dot_dimension_numbers<[1], [0], [0], [1], [0, 0, 1, 1], [], []>} : vector<128x128xbf16>, vector<128x128xbf16>, vector<128x128xf32> -> vector<128x128xf32>
    %120 = arith.addf %114, %119 : vector<128x128xf32>
    %cst_119 = arith.constant 0.000000e+00 : f32
    %121 = vector.broadcast %cst_119 : f32 to vector<128x128xf32>
    %122 = arith.maximumf %120, %121 : vector<128x128xf32>
    %c0_120 = arith.constant 0 : index
    %c0_121 = arith.constant 0 : index
    %123 = vector.load %arg3[%c0_120, %c0_121] : memref<128x128xf32, #tpu.memory_space<vmem>>, vector<128x128xf32>
    %124 = arith.addf %123, %122 : vector<128x128xf32>
    %c0_122 = arith.constant 0 : index
    %c0_123 = arith.constant 0 : index
    %125 = vector.load %arg3[%c0_122, %c0_123] : memref<128x128xf32, #tpu.memory_space<vmem>>, vector<128x128xf32>
    tpu.vector_store %arg3[%c0_122, %c0_123], %124 {strides = array<i32>} : memref<128x128xf32, #tpu.memory_space<vmem>>, vector<128x128xf32>,
    %c0_124 = arith.constant 0 : index
    %c0_125 = arith.constant 0 : index
    %126 = vector.load %arg3[%c0_124, %c0_125] : memref<128x128xf32, #tpu.memory_space<vmem>>, vector<128x128xf32>
    %127 = arith.truncf %126 : vector<128x128xf32> to vector<128x128xbf16>
    %c12 = arith.constant 12 : index
    %c0_126 = arith.constant 0 : index
    %c0_127 = arith.constant 0 : index
    %128 = vector.load %arg2[%c12, %c0_126, %c0_127] : memref<18x128x128xbf16, #tpu.memory_space<vmem>>, vector<1x128x128xbf16>
    %129 = vector.shape_cast %128 : vector<1x128x128xbf16> to vector<128x128xbf16>
    %cst_128 = arith.constant dense<0.000000e+00> : vector<128x128xf32>
    %130 = tpu.matmul %127, %129, %cst_128 {dimension_numbers = #tpu.dot_dimension_numbers<[1], [0], [0], [1], [0, 0, 1, 1], [], []>} : vector<128x128xbf16>, vector<128x128xbf16>, vector<128x128xf32> -> vector<128x128xf32>
    %131 = math.tanh %130 : vector<128x128xf32>
    %c0_129 = arith.constant 0 : index
    %c0_130 = arith.constant 0 : index
    %132 = vector.load %arg3[%c0_129, %c0_130] : memref<128x128xf32, #tpu.memory_space<vmem>>, vector<128x128xf32>
    %133 = arith.addf %132, %131 : vector<128x128xf32>
    %c0_131 = arith.constant 0 : index
    %c0_132 = arith.constant 0 : index
    %134 = vector.load %arg3[%c0_131, %c0_132] : memref<128x128xf32, #tpu.memory_space<vmem>>, vector<128x128xf32>
    tpu.vector_store %arg3[%c0_131, %c0_132], %133 {strides = array<i32>} : memref<128x128xf32, #tpu.memory_space<vmem>>, vector<128x128xf32>,
    %c0_133 = arith.constant 0 : index
    %c0_134 = arith.constant 0 : index
    %135 = vector.load %arg4[%c0_133, %c0_134] : memref<128x128xf32, #tpu.memory_space<vmem>>, vector<128x128xf32>
    %136 = arith.truncf %135 : vector<128x128xf32> to vector<128x128xbf16>
    %c13 = arith.constant 13 : index
    %c0_135 = arith.constant 0 : index
    %c0_136 = arith.constant 0 : index
    %137 = vector.load %arg2[%c13, %c0_135, %c0_136] : memref<18x128x128xbf16, #tpu.memory_space<vmem>>, vector<1x128x128xbf16>
    %138 = vector.shape_cast %137 : vector<1x128x128xbf16> to vector<128x128xbf16>
    %cst_137 = arith.constant dense<0.000000e+00> : vector<128x128xf32>
    %139 = tpu.matmul %136, %138, %cst_137 {dimension_numbers = #tpu.dot_dimension_numbers<[1], [0], [0], [1], [0, 0, 1, 1], [], []>} : vector<128x128xbf16>, vector<128x128xbf16>, vector<128x128xf32> -> vector<128x128xf32>
    %c0_138 = arith.constant 0 : index
    %c0_139 = arith.constant 0 : index
    %140 = vector.load %arg3[%c0_138, %c0_139] : memref<128x128xf32, #tpu.memory_space<vmem>>, vector<128x128xf32>
    %141 = arith.truncf %140 : vector<128x128xf32> to vector<128x128xbf16>
    %c14 = arith.constant 14 : index
    %c0_140 = arith.constant 0 : index
    %c0_141 = arith.constant 0 : index
    %142 = vector.load %arg2[%c14, %c0_140, %c0_141] : memref<18x128x128xbf16, #tpu.memory_space<vmem>>, vector<1x128x128xbf16>
    %143 = vector.shape_cast %142 : vector<1x128x128xbf16> to vector<128x128xbf16>
    %cst_142 = arith.constant dense<0.000000e+00> : vector<128x128xf32>
    %144 = tpu.matmul %141, %143, %cst_142 {dimension_numbers = #tpu.dot_dimension_numbers<[1], [0], [0], [1], [0, 0, 1, 1], [], []>} : vector<128x128xbf16>, vector<128x128xbf16>, vector<128x128xf32> -> vector<128x128xf32>
    %145 = arith.addf %139, %144 : vector<128x128xf32>
    %cst_143 = arith.constant 0.000000e+00 : f32
    %146 = vector.broadcast %cst_143 : f32 to vector<128x128xf32>
    %147 = arith.maximumf %145, %146 : vector<128x128xf32>
    %c0_144 = arith.constant 0 : index
    %c0_145 = arith.constant 0 : index
    %148 = vector.load %arg3[%c0_144, %c0_145] : memref<128x128xf32, #tpu.memory_space<vmem>>, vector<128x128xf32>
    %149 = arith.addf %148, %147 : vector<128x128xf32>
    %c0_146 = arith.constant 0 : index
    %c0_147 = arith.constant 0 : index
    %150 = vector.load %arg3[%c0_146, %c0_147] : memref<128x128xf32, #tpu.memory_space<vmem>>, vector<128x128xf32>
    tpu.vector_store %arg3[%c0_146, %c0_147], %149 {strides = array<i32>} : memref<128x128xf32, #tpu.memory_space<vmem>>, vector<128x128xf32>,
    %c0_148 = arith.constant 0 : index
    %c0_149 = arith.constant 0 : index
    %151 = vector.load %arg4[%c0_148, %c0_149] : memref<128x128xf32, #tpu.memory_space<vmem>>, vector<128x128xf32>
    %152 = arith.truncf %151 : vector<128x128xf32> to vector<128x128xbf16>
    %c15 = arith.constant 15 : index
    %c0_150 = arith.constant 0 : index
    %c0_151 = arith.constant 0 : index
    %153 = vector.load %arg2[%c15, %c0_150, %c0_151] : memref<18x128x128xbf16, #tpu.memory_space<vmem>>, vector<1x128x128xbf16>
    %154 = vector.shape_cast %153 : vector<1x128x128xbf16> to vector<128x128xbf16>
    %cst_152 = arith.constant dense<0.000000e+00> : vector<128x128xf32>
    %155 = tpu.matmul %152, %154, %cst_152 {dimension_numbers = #tpu.dot_dimension_numbers<[1], [0], [0], [1], [0, 0, 1, 1], [], []>} : vector<128x128xbf16>, vector<128x128xbf16>, vector<128x128xf32> -> vector<128x128xf32>
    %c0_153 = arith.constant 0 : index
    %c0_154 = arith.constant 0 : index
    %156 = vector.load %arg3[%c0_153, %c0_154] : memref<128x128xf32, #tpu.memory_space<vmem>>, vector<128x128xf32>
    %157 = arith.truncf %156 : vector<128x128xf32> to vector<128x128xbf16>
    %c16 = arith.constant 16 : index
    %c0_155 = arith.constant 0 : index
    %c0_156 = arith.constant 0 : index
    %158 = vector.load %arg2[%c16, %c0_155, %c0_156] : memref<18x128x128xbf16, #tpu.memory_space<vmem>>, vector<1x128x128xbf16>
    %159 = vector.shape_cast %158 : vector<1x128x128xbf16> to vector<128x128xbf16>
    %cst_157 = arith.constant dense<0.000000e+00> : vector<128x128xf32>
    %160 = tpu.matmul %157, %159, %cst_157 {dimension_numbers = #tpu.dot_dimension_numbers<[1], [0], [0], [1], [0, 0, 1, 1], [], []>} : vector<128x128xbf16>, vector<128x128xbf16>, vector<128x128xf32> -> vector<128x128xf32>
    %161 = arith.addf %155, %160 : vector<128x128xf32>
    %cst_158 = arith.constant 0.000000e+00 : f32
    %162 = vector.broadcast %cst_158 : f32 to vector<128x128xf32>
    %163 = arith.maximumf %161, %162 : vector<128x128xf32>
    %c0_159 = arith.constant 0 : index
    %c0_160 = arith.constant 0 : index
    %164 = vector.load %arg3[%c0_159, %c0_160] : memref<128x128xf32, #tpu.memory_space<vmem>>, vector<128x128xf32>
    %165 = arith.addf %164, %163 : vector<128x128xf32>
    %c0_161 = arith.constant 0 : index
    %c0_162 = arith.constant 0 : index
    %166 = vector.load %arg3[%c0_161, %c0_162] : memref<128x128xf32, #tpu.memory_space<vmem>>, vector<128x128xf32>
    tpu.vector_store %arg3[%c0_161, %c0_162], %165 {strides = array<i32>} : memref<128x128xf32, #tpu.memory_space<vmem>>, vector<128x128xf32>,
    %c0_163 = arith.constant 0 : index
    %c0_164 = arith.constant 0 : index
    %167 = vector.load %arg3[%c0_163, %c0_164] : memref<128x128xf32, #tpu.memory_space<vmem>>, vector<128x128xf32>
    %168 = arith.truncf %167 : vector<128x128xf32> to vector<128x128xbf16>
    %c17 = arith.constant 17 : index
    %c0_165 = arith.constant 0 : index
    %c0_166 = arith.constant 0 : index
    %169 = vector.load %arg2[%c17, %c0_165, %c0_166] : memref<18x128x128xbf16, #tpu.memory_space<vmem>>, vector<1x128x128xbf16>
    %170 = vector.shape_cast %169 : vector<1x128x128xbf16> to vector<128x128xbf16>
    %cst_167 = arith.constant dense<0.000000e+00> : vector<128x128xf32>
    %171 = tpu.matmul %168, %170, %cst_167 {dimension_numbers = #tpu.dot_dimension_numbers<[1], [0], [0], [1], [0, 0, 1, 1], [], []>} : vector<128x128xbf16>, vector<128x128xbf16>, vector<128x128xf32> -> vector<128x128xf32>
    %c0_168 = arith.constant 0 : index
    %c0_169 = arith.constant 0 : index
    %172 = vector.load %arg3[%c0_168, %c0_169] : memref<128x128xf32, #tpu.memory_space<vmem>>, vector<128x128xf32>
    %173 = arith.addf %172, %171 : vector<128x128xf32>
    %c0_170 = arith.constant 0 : index
    %c0_171 = arith.constant 0 : index
    %174 = vector.load %arg3[%c0_170, %c0_171] : memref<128x128xf32, #tpu.memory_space<vmem>>, vector<128x128xf32>
    tpu.vector_store %arg3[%c0_170, %c0_171], %173 {strides = array<i32>} : memref<128x128xf32, #tpu.memory_space<vmem>>, vector<128x128xf32>,
    return
  }
  func.func @transform_0(%arg0: i32) -> (i32, i32) {
    %c0_i32 = arith.constant 0 : i32
    %c0_i32_0 = arith.constant 0 : i32
    return %arg0, %c0_i32 : i32, i32
  }
  func.func @transform_1(%arg0: i32) -> (i32, i32, i32) {
    %c0_i32 = arith.constant 0 : i32
    %c0_i32_0 = arith.constant 0 : i32
    %c0_i32_1 = arith.constant 0 : i32
    %c0_i32_2 = arith.constant 0 : i32
    return %c0_i32, %c0_i32_0, %c0_i32_1 : i32, i32, i32
  }
  func.func @transform_2(%arg0: i32) -> (i32, i32) {
    %c0_i32 = arith.constant 0 : i32
    %c0_i32_0 = arith.constant 0 : i32
    return %arg0, %c0_i32 : i32, i32
  }
}

</mosaic_0001>

<llo_original>
// kernel: pnet2_apply.1
$region0: #{pnet2_apply.1}
  #allocation0 [shape = 'u32[]', space=smem, size = 0x4, offset = 0x4, fixed_abs, tag = 'smem constant byte address 0x4 - core index']
  #allocation1 [shape = 'u32[144,128]{1,0:T(1,128)}', space=vmem, size = 0x12000, scoped, tag = 'internal scratch']
  #allocation2 [shape = 'f32[128,128]{1,0:T(8,128)}', space=vmem, size = 0x10000, scoped, tag = 'scratch operand']
  %s0 = inlined_call_operand.vmem [shape: f32[128,32], index: 0, kind: input, shape index: {}]
  %s1 = inlined_call_operand.hbm [shape: bf16[18,128,128], index: 1, kind: input, shape index: {}]
  %s2 = inlined_call_operand.vmem [shape: f32[128,128], index: 2, kind: output, shape index: {}]
  %s3 = sld [smem:[#allocation0]]
  $region22: #{pnet2_apply.1} parent=0
    _
  %s5 = ssub.s32 1, %s3
  %s6 = scalar_select 0, %s5, %s3
  $region1: #{pnet2_apply.1} parent=0
    #allocation3 [shape = 'u8[589824]{0}', space=vmem, size = 0x90000, scoped, tag = 'input window, operand 1, single buffered']
    #allocation4 [shape = 's32[1]{0}', space=sflag, size = 0x4, scoped, tag = 'scoped memory for pnet2_apply.1']
    %7 = vsyncpa [#allocation4], 0
    // Predicated region
    $region2: #{pnet2_apply.1} parent=1 // pred_check
      _
    $region3: #{pnet2_apply.1} parent=1 // pred_check_branch
      %9 = sbr.rel (0) target = $region5
    $region4: #{pnet2_apply.1} parent=1 // pred_region
      _
    $region5: #{pnet2_apply.1} parent=1 // pred_fallthru
      _
    // Predicated region
    $region6: #{pnet2_apply.1} parent=1 // pred_check
      _
    $region7: #{pnet2_apply.1} parent=1 // pred_check_branch
      %11 = sbr.rel (0) target = $region9
    $region8: #{pnet2_apply.1} parent=1 // pred_region
      %s13 = ssub.s32 18432, 18432
      %14 = vsyncadd [#allocation4], %s13
      %s15 = sshll.u32 [#allocation3], 4
      %s16 = int_to_ptr.vmem [resolvable:$true] %s15
      %21 = dma.hbm_to_vmem [thread:$0]  %s1, 18432, %s16, [#allocation4], 64, 64, 4
    $region9: #{pnet2_apply.1} parent=1 // pred_fallthru
      _
    // Predicated region
    $region10: #{pnet2_apply.1} parent=1 // pred_check
      _
    $region11: #{pnet2_apply.1} parent=1 // pred_check_branch
      %23 = sbr.rel (0) target = $region13
    $region12: #{pnet2_apply.1} parent=1 // pred_region
      %24 = dma.done [#allocation4], 18432
    $region13: #{pnet2_apply.1} parent=1 // pred_fallthru
      _
    %26 = vst [vmem:[#allocation2] sm:$0xff] 0.0
    %27 = vst [vmem:[#allocation2 + $0x8] sm:$0xff] 0.0
    %28 = vst [vmem:[#allocation2 + $0x10] sm:$0xff] 0.0
    %29 = vst [vmem:[#allocation2 + $0x18] sm:$0xff] 0.0
    %30 = vst [vmem:[#allocation2 + $0x20] sm:$0xff] 0.0
    %31 = vst [vmem:[#allocation2 + $0x28] sm:$0xff] 0.0
    %32 = vst [vmem:[#allocation2 + $0x30] sm:$0xff] 0.0
    %33 = vst [vmem:[#allocation2 + $0x38] sm:$0xff] 0.0
    %34 = vst [vmem:[#allocation2 + $0x40] sm:$0xff] 0.0
    %35 = vst [vmem:[#allocation2 + $0x48] sm:$0xff] 0.0
    %36 = vst [vmem:[#allocation2 + $0x50] sm:$0xff] 0.0
    %37 = vst [vmem:[#allocation2 + $0x58] sm:$0xff] 0.0
    %38 = vst [vmem:[#allocation2 + $0x60] sm:$0xff] 0.0
    %39 = vst [vmem:[#allocation2 + $0x68] sm:$0xff] 0.0
    %40 = vst [vmem:[#allocation2 + $0x70] sm:$0xff] 0.0
    %41 = vst [vmem:[#allocation2 + $0x78] sm:$0xff] 0.0
    %v42 = vld [vmem:[%s0] sm:$0xff]
    %v43 = vld [vmem:[%s0 + $0x8] sm:$0xff]
    %v44 = vld [vmem:[%s0 + $0x10] sm:$0xff]
    %v45 = vld [vmem:[%s0 + $0x18] sm:$0xff]
    %v46 = vld [vmem:[%s0 + $0x20] sm:$0xff]
    %v47 = vld [vmem:[%s0 + $0x28] sm:$0xff]
    %v48 = vld [vmem:[%s0 + $0x30] sm:$0xff]
    %v49 = vld [vmem:[%s0 + $0x38] sm:$0xff]
    %v50 = vld [vmem:[%s0 + $0x40] sm:$0xff]
    %v51 = vld [vmem:[%s0 + $0x48] sm:$0xff]
    %v52 = vld [vmem:[%s0 + $0x50] sm:$0xff]
    %v53 = vld [vmem:[%s0 + $0x58] sm:$0xff]
    %v54 = vld [vmem:[%s0 + $0x60] sm:$0xff]
    %v55 = vld [vmem:[%s0 + $0x68] sm:$0xff]
    %v56 = vld [vmem:[%s0 + $0x70] sm:$0xff]
    %v57 = vld [vmem:[%s0 + $0x78] sm:$0xff]
    %vm58 = vcmask 261120
    %59 = vst.msk [vmem:[#allocation2] sm:$0xff] %vm58, %v42
    %60 = vst.msk [vmem:[#allocation2 + $0x8] sm:$0xff] %vm58, %v43
    %61 = vst.msk [vmem:[#allocation2 + $0x10] sm:$0xff] %vm58, %v44
    %62 = vst.msk [vmem:[#allocation2 + $0x18] sm:$0xff] %vm58, %v45
    %63 = vst.msk [vmem:[#allocation2 + $0x20] sm:$0xff] %vm58, %v46
    %64 = vst.msk [vmem:[#allocation2 + $0x28] sm:$0xff] %vm58, %v47
    %65 = vst.msk [vmem:[#allocation2 + $0x30] sm:$0xff] %vm58, %v48
    %66 = vst.msk [vmem:[#allocation2 + $0x38] sm:$0xff] %vm58, %v49
    %67 = vst.msk [vmem:[#allocation2 + $0x40] sm:$0xff] %vm58, %v50
    %68 = vst.msk [vmem:[#allocation2 + $0x48] sm:$0xff] %vm58, %v51
    %69 = vst.msk [vmem:[#allocation2 + $0x50] sm:$0xff] %vm58, %v52
    %70 = vst.msk [vmem:[#allocation2 + $0x58] sm:$0xff] %vm58, %v53
    %71 = vst.msk [vmem:[#allocation2 + $0x60] sm:$0xff] %vm58, %v54
    %72 = vst.msk [vmem:[#allocation2 + $0x68] sm:$0xff] %vm58, %v55
    %73 = vst.msk [vmem:[#allocation2 + $0x70] sm:$0xff] %vm58, %v56
    %74 = vst.msk [vmem:[#allocation2 + $0x78] sm:$0xff] %vm58, %v57
    %v75 = vlaneseq
    %v76 = vand.u32 %v75, 127
    %vm77 = vcmp.eq.s32.totalorder %v76, 127
    %v78 = vsel %vm77, 1.0, 0.0
    %79 = vst [vmem:[%s2] sm:$0xff] %v78
    %80 = vst [vmem:[%s2 + $0x8] sm:$0xff] %v78
    %81 = vst [vmem:[%s2 + $0x10] sm:$0xff] %v78
    %82 = vst [vmem:[%s2 + $0x18] sm:$0xff] %v78
    %83 = vst [vmem:[%s2 + $0x20] sm:$0xff] %v78
    %84 = vst [vmem:[%s2 + $0x28] sm:$0xff] %v78
    %85 = vst [vmem:[%s2 + $0x30] sm:$0xff] %v78
    %86 = vst [vmem:[%s2 + $0x38] sm:$0xff] %v78
    %87 = vst [vmem:[%s2 + $0x40] sm:$0xff] %v78
    %88 = vst [vmem:[%s2 + $0x48] sm:$0xff] %v78
    %89 = vst [vmem:[%s2 + $0x50] sm:$0xff] %v78
    %90 = vst [vmem:[%s2 + $0x58] sm:$0xff] %v78
    %91 = vst [vmem:[%s2 + $0x60] sm:$0xff] %v78
    %92 = vst [vmem:[%s2 + $0x68] sm:$0xff] %v78
    %93 = vst [vmem:[%s2 + $0x70] sm:$0xff] %v78
    %94 = vst [vmem:[%s2 + $0x78] sm:$0xff] %v78
    %v95 = vld [vmem:[#allocation2] sm:$0xff]
    %v96 = vld [vmem:[#allocation2 + $0x8] sm:$0xff]
    %v97 = vld [vmem:[#allocation2 + $0x10] sm:$0xff]
    %v98 = vld [vmem:[#allocation2 + $0x18] sm:$0xff]
    %v99 = vld [vmem:[#allocation2 + $0x20] sm:$0xff]
    %v100 = vld [vmem:[#allocation2 + $0x28] sm:$0xff]
    %v101 = vld [vmem:[#allocation2 + $0x30] sm:$0xff]
    %v102 = vld [vmem:[#allocation2 + $0x38] sm:$0xff]
    %v103 = vld [vmem:[#allocation2 + $0x40] sm:$0xff]
    %v104 = vld [vmem:[#allocation2 + $0x48] sm:$0xff]
    %v105 = vld [vmem:[#allocation2 + $0x50] sm:$0xff]
    %v106 = vld [vmem:[#allocation2 + $0x58] sm:$0xff]
    %v107 = vld [vmem:[#allocation2 + $0x60] sm:$0xff]
    %v108 = vld [vmem:[#allocation2 + $0x68] sm:$0xff]
    %v109 = vld [vmem:[#allocation2 + $0x70] sm:$0xff]
    %v110 = vld [vmem:[#allocation2 + $0x78] sm:$0xff]
    %v111 = vpack.c.bf16 %v96, %v95
    %v112 = vpack.c.bf16 %v98, %v97
    %v113 = vpack.c.bf16 %v100, %v99
    %v114 = vpack.c.bf16 %v102, %v101
    %v115 = vpack.c.bf16 %v104, %v103
    %v116 = vpack.c.bf16 %v106, %v105
    %v117 = vpack.c.bf16 %v108, %v107
    %v118 = vpack.c.bf16 %v110, %v109
    %v119 = vld [vmem:[#allocation3] sm:$0xf]
    %v120 = vld [vmem:[#allocation3 + $0x4] sm:$0xf]
    %v121 = vld [vmem:[#allocation3 + $0x8] sm:$0xf]
    %v122 = vld [vmem:[#allocation3 + $0xc] sm:$0xf]
    %v123 = vld [vmem:[#allocation3 + $0x10] sm:$0xf]
    %v124 = vld [vmem:[#allocation3 + $0x14] sm:$0xf]
    %v125 = vld [vmem:[#allocation3 + $0x18] sm:$0xf]
    %v126 = vld [vmem:[#allocation3 + $0x1c] sm:$0xf]
    %v127 = vld [vmem:[#allocation3 + $0x20] sm:$0xf]
    %v128 = vld [vmem:[#allocation3 + $0x24] sm:$0xf]
    %v129 = vld [vmem:[#allocation3 + $0x28] sm:$0xf]
    %v130 = vld [vmem:[#allocation3 + $0x2c] sm:$0xf]
    %v131 = vld [vmem:[#allocation3 + $0x30] sm:$0xf]
    %v132 = vld [vmem:[#allocation3 + $0x34] sm:$0xf]
    %v133 = vld [vmem:[#allocation3 + $0x38] sm:$0xf]
    %v134 = vld [vmem:[#allocation3 + $0x3c] sm:$0xf]
    %v151 = vunpack.c.l.b16 %v119
    %v152 = vunpack.c.l.b16 %v120
    %v153 = vunpack.c.l.b16 %v121
    %v154 = vunpack.c.l.b16 %v122
    %v155 = vunpack.c.l.b16 %v123
    %v156 = vunpack.c.l.b16 %v124
    %v157 = vunpack.c.l.b16 %v125
    %v158 = vunpack.c.l.b16 %v126
    %v159 = vunpack.c.l.b16 %v127
    %v160 = vunpack.c.l.b16 %v128
    %v161 = vunpack.c.l.b16 %v129
    %v162 = vunpack.c.l.b16 %v130
    %v163 = vunpack.c.l.b16 %v131
    %v164 = vunpack.c.l.b16 %v132
    %v165 = vunpack.c.l.b16 %v133
    %v166 = vunpack.c.l.b16 %v134
    %v167 = vpack.c.b16 %v152, %v151
    %v168 = vpack.c.b16 %v154, %v153
    %v169 = vpack.c.b16 %v156, %v155
    %v170 = vpack.c.b16 %v158, %v157
    %v171 = vpack.c.b16 %v160, %v159
    %v172 = vpack.c.b16 %v162, %v161
    %v173 = vpack.c.b16 %v164, %v163
    %v174 = vpack.c.b16 %v166, %v165
    %183 = vmatprep.subr.bf16.mxu0 0
    %184 = vmatpush1.bf16.msra.mxu0 %v174
    %185 = vmatprep.subr.bf16.mxu0 0
    %186 = vmatpush1.bf16.msra.mxu0 %v173
    %187 = vmatprep.subr.bf16.mxu0 0
    %188 = vmatpush1.bf16.msra.mxu0 %v172
    %189 = vmatprep.subr.bf16.mxu0 0
    %190 = vmatpush1.bf16.msra.mxu0 %v171
    %191 = vmatprep.subr.bf16.mxu0 0
    %192 = vmatpush1.bf16.msra.mxu0 %v170
    %193 = vmatprep.subr.bf16.mxu0 0
    %194 = vmatpush1.bf16.msra.mxu0 %v169
    %195 = vmatprep.subr.bf16.mxu0 0
    %196 = vmatpush1.bf16.msra.mxu0 %v168
    %197 = vmatprep.subr.bf16.mxu0 0
    %198 = vmatpush1.bf16.msra.mxu0 %v167
    %199 = vmatprep.subr.bf16.mxu0 0
    %200 = vmatpush2.bf16.msra.mxu0 0
    %201 = vmatprep.subr.bf16.mxu0 0
    %202 = vmatpush2.bf16.msra.mxu0 0
    %203 = vmatprep.subr.bf16.mxu0 0
    %204 = vmatpush2.bf16.msra.mxu0 0
    %205 = vmatprep.subr.bf16.mxu0 0
    %206 = vmatpush2.bf16.msra.mxu0 0
    %207 = vmatprep.subr.bf16.mxu0 0
    %208 = vmatpush2.bf16.msra.mxu0 0
    %209 = vmatprep.subr.bf16.mxu0 0
    %210 = vmatpush2.bf16.msra.mxu0 0
    %211 = vmatprep.subr.bf16.mxu0 0
    %212 = vmatpush2.bf16.msra.mxu0 0
    %213 = vmatprep.subr.bf16.mxu0 0
    %214 = vmatpush2.bf16.msra.mxu0 0
    %215 = vmatprep.mubr.bf16.mxu0 0
    %216 = vmatmul.mubr.bf16.gmra.mxu0 %v111
    %v217 = vpop.f32.mrf.mxu0
    %v218 = vadd.f32 0.0, %v217
    %v219 = vpop.f32.mrf.mxu0
    %v220 = vpop.f32.mrf.mxu0
    %v221 = vadd.f32 0.0, %v220
    %v222 = vpop.f32.mrf.mxu0
    %223 = vmatprep.mubr.bf16.mxu0 0
    %224 = vmatmul.mubr.bf16.gmra.mxu0 %v112
    %v225 = vpop.f32.mrf.mxu0
    %v226 = vadd.f32 0.0, %v225
    %v227 = vpop.f32.mrf.mxu0
    %v228 = vpop.f32.mrf.mxu0
    %v229 = vadd.f32 0.0, %v228
    %v230 = vpop.f32.mrf.mxu0
    %231 = vmatprep.mubr.bf16.mxu0 0
    %232 = vmatmul.mubr.bf16.gmra.mxu0 %v113
    %v233 = vpop.f32.mrf.mxu0
    %v234 = vadd.f32 0.0, %v233
    %v235 = vpop.f32.mrf.mxu0
    %v236 = vpop.f32.mrf.mxu0
    %v237 = vadd.f32 0.0, %v236
    %v238 = vpop.f32.mrf.mxu0
    %239 = vmatprep.mubr.bf16.mxu0 0
    %240 = vmatmul.mubr.bf16.gmra.mxu0 %v114
    %v241 = vpop.f32.mrf.mxu0
    %v242 = vadd.f32 0.0, %v241
    %v243 = vpop.f32.mrf.mxu0
    %v244 = vpop.f32.mrf.mxu0
    %v245 = vadd.f32 0.0, %v244
    %v246 = vpop.f32.mrf.mxu0
    %247 = vmatprep.mubr.bf16.mxu0 0
    %248 = vmatmul.mubr.bf16.gmra.mxu0 %v115
    %v249 = vpop.f32.mrf.mxu0
    %v250 = vadd.f32 0.0, %v249
    %v251 = vpop.f32.mrf.mxu0
    %v252 = vpop.f32.mrf.mxu0
    %v253 = vadd.f32 0.0, %v252
    %v254 = vpop.f32.mrf.mxu0
    %255 = vmatprep.mubr.bf16.mxu0 0
    %256 = vmatmul.mubr.bf16.gmra.mxu0 %v116
    %v257 = vpop.f32.mrf.mxu0
    %v258 = vadd.f32 0.0, %v257
    %v259 = vpop.f32.mrf.mxu0
    %v260 = vpop.f32.mrf.mxu0
    %v261 = vadd.f32 0.0, %v260
    %v262 = vpop.f32.mrf.mxu0
    %263 = vmatprep.mubr.bf16.mxu0 0
    %264 = vmatmul.mubr.bf16.gmra.mxu0 %v117
    %v265 = vpop.f32.mrf.mxu0
    %v266 = vadd.f32 0.0, %v265
    %v267 = vpop.f32.mrf.mxu0
    %v268 = vpop.f32.mrf.mxu0
    %v269 = vadd.f32 0.0, %v268
    %v270 = vpop.f32.mrf.mxu0
    %271 = vmatprep.mubr.bf16.mxu0 0
    %272 = vmatmul.mubr.bf16.gmra.mxu0 %v118
    %v273 = vpop.f32.mrf.mxu0
    %v274 = vadd.f32 0.0, %v273
    %v275 = vpop.f32.mrf.mxu0
    %v276 = vpop.f32.mrf.mxu0
    %v277 = vadd.f32 0.0, %v276
    %v278 = vpop.f32.mrf.mxu0
    %279 = vdwg.mxu0
    %v280 = vmax.f32 %v218, 0.0
    %v281 = vmax.f32 %v221, 0.0
    %v282 = vmax.f32 %v226, 0.0
    %v283 = vmax.f32 %v229, 0.0
    %v284 = vmax.f32 %v234, 0.0
    %v285 = vmax.f32 %v237, 0.0
    %v286 = vmax.f32 %v242, 0.0
    %v287 = vmax.f32 %v245, 0.0
    %v288 = vmax.f32 %v250, 0.0
    %v289 = vmax.f32 %v253, 0.0
    %v290 = vmax.f32 %v258, 0.0
    %v291 = vmax.f32 %v261, 0.0
    %v292 = vmax.f32 %v266, 0.0
    %v293 = vmax.f32 %v269, 0.0
    %v294 = vmax.f32 %v274, 0.0
    %v295 = vmax.f32 %v277, 0.0
    %v296 = vadd.f32 %v95, %v280
    %v297 = vadd.f32 %v96, %v281
    %v298 = vadd.f32 %v97, %v282
    %v299 = vadd.f32 %v98, %v283
    %v300 = vadd.f32 %v99, %v284
    %v301 = vadd.f32 %v100, %v285
    %v302 = vadd.f32 %v101, %v286
    %v303 = vadd.f32 %v102, %v287
    %v304 = vadd.f32 %v103, %v288
    %v305 = vadd.f32 %v104, %v289
    %v306 = vadd.f32 %v105, %v290
    %v307 = vadd.f32 %v106, %v291
    %v308 = vadd.f32 %v107, %v292
    %v309 = vadd.f32 %v108, %v293
    %v310 = vadd.f32 %v109, %v294
    %v311 = vadd.f32 %v110, %v295
    %312 = vst [vmem:[#allocation2] sm:$0xff] %v296
    %313 = vst [vmem:[#allocation2 + $0x8] sm:$0xff] %v297
    %314 = vst [vmem:[#allocation2 + $0x10] sm:$0xff] %v298
    %315 = vst [vmem:[#allocation2 + $0x18] sm:$0xff] %v299
    %316 = vst [vmem:[#allocation2 + $0x20] sm:$0xff] %v300
    %317 = vst [vmem:[#allocation2 + $0x28] sm:$0xff] %v301
    %318 = vst [vmem:[#allocation2 + $0x30] sm:$0xff] %v302
    %319 = vst [vmem:[#allocation2 + $0x38] sm:$0xff] %v303
    %320 = vst [vmem:[#allocation2 + $0x40] sm:$0xff] %v304
    %321 = vst [vmem:[#allocation2 + $0x48] sm:$0xff] %v305
    %322 = vst [vmem:[#allocation2 + $0x50] sm:$0xff] %v306
    %323 = vst [vmem:[#allocation2 + $0x58] sm:$0xff] %v307
    %324 = vst [vmem:[#allocation2 + $0x60] sm:$0xff] %v308
    %325 = vst [vmem:[#allocation2 + $0x68] sm:$0xff] %v309
    %326 = vst [vmem:[#allocation2 + $0x70] sm:$0xff] %v310
    %327 = vst [vmem:[#allocation2 + $0x78] sm:$0xff] %v311
    %v328 = vld [vmem:[#allocation2] sm:$0xff]
    %v329 = vld [vmem:[#allocation2 + $0x8] sm:$0xff]
    %v330 = vld [vmem:[#allocation2 + $0x10] sm:$0xff]
    %v331 = vld [vmem:[#allocation2 + $0x18] sm:$0xff]
    %v332 = vld [vmem:[#allocation2 + $0x20] sm:$0xff]
    %v333 = vld [vmem:[#allocation2 + $0x28] sm:$0xff]
    %v334 = vld [vmem:[#allocation2 + $0x30] sm:$0xff]
    %v335 = vld [vmem:[#allocation2 + $0x38] sm:$0xff]
    %v336 = vld [vmem:[#allocation2 + $0x40] sm:$0xff]
    %v337 = vld [vmem:[#allocation2 + $0x48] sm:$0xff]
    %v338 = vld [vmem:[#allocation2 + $0x50] sm:$0xff]
    %v339 = vld [vmem:[#allocation2 + $0x58] sm:$0xff]
    %v340 = vld [vmem:[#allocation2 + $0x60] sm:$0xff]
    %v341 = vld [vmem:[#allocation2 + $0x68] sm:$0xff]
    %v342 = vld [vmem:[#allocation2 + $0x70] sm:$0xff]
    %v343 = vld [vmem:[#allocation2 + $0x78] sm:$0xff]
    %v344 = vpack.c.bf16 %v329, %v328
    %v345 = vpack.c.bf16 %v331, %v330
    %v346 = vpack.c.bf16 %v333, %v332
    %v347 = vpack.c.bf16 %v335, %v334
    %v348 = vpack.c.bf16 %v337, %v336
    %v349 = vpack.c.bf16 %v339, %v338
    %v350 = vpack.c.bf16 %v341, %v340
    %v351 = vpack.c.bf16 %v343, %v342
    %s352 = scalar_lea.vmem [#allocation3], 64
    %v353 = vld [vmem:[%s352] sm:$0xf]
    %v354 = vld [vmem:[%s352 + $0x4] sm:$0xf]
    %v355 = vld [vmem:[%s352 + $0x8] sm:$0xf]
    %v356 = vld [vmem:[%s352 + $0xc] sm:$0xf]
    %v357 = vld [vmem:[%s352 + $0x10] sm:$0xf]
    %v358 = vld [vmem:[%s352 + $0x14] sm:$0xf]
    %v359 = vld [vmem:[%s352 + $0x18] sm:$0xf]
    %v360 = vld [vmem:[%s352 + $0x1c] sm:$0xf]
    %v361 = vld [vmem:[%s352 + $0x20] sm:$0xf]
    %v362 = vld [vmem:[%s352 + $0x24] sm:$0xf]
    %v363 = vld [vmem:[%s352 + $0x28] sm:$0xf]
    %v364 = vld [vmem:[%s352 + $0x2c] sm:$0xf]
    %v365 = vld [vmem:[%s352 + $0x30] sm:$0xf]
    %v366 = vld [vmem:[%s352 + $0x34] sm:$0xf]
    %v367 = vld [vmem:[%s352 + $0x38] sm:$0xf]
    %v368 = vld [vmem:[%s352 + $0x3c] sm:$0xf]
    %v385 = vunpack.c.l.b16 %v353
    %v386 = vunpack.c.l.b16 %v354
    %v387 = vunpack.c.l.b16 %v355
    %v388 = vunpack.c.l.b16 %v356
    %v389 = vunpack.c.l.b16 %v357
    %v390 = vunpack.c.l.b16 %v358
    %v391 = vunpack.c.l.b16 %v359
    %v392 = vunpack.c.l.b16 %v360
    %v393 = vunpack.c.l.b16 %v361
    %v394 = vunpack.c.l.b16 %v362
    %v395 = vunpack.c.l.b16 %v363
    %v396 = vunpack.c.l.b16 %v364
    %v397 = vunpack.c.l.b16 %v365
    %v398 = vunpack.c.l.b16 %v366
    %v399 = vunpack.c.l.b16 %v367
    %v400 = vunpack.c.l.b16 %v368
    %v401 = vpack.c.b16 %v386, %v385
    %v402 = vpack.c.b16 %v388, %v387
    %v403 = vpack.c.b16 %v390, %v389
    %v404 = vpack.c.b16 %v392, %v391
    %v405 = vpack.c.b16 %v394, %v393
    %v406 = vpack.c.b16 %v396, %v395
    %v407 = vpack.c.b16 %v398, %v397
    %v408 = vpack.c.b16 %v400, %v399
    %417 = vmatprep.subr.bf16.mxu0 0
    %418 = vmatpush1.bf16.msra.mxu0 %v408
    %419 = vmatprep.subr.bf16.mxu0 0
    %420 = vmatpush1.bf16.msra.mxu0 %v407
    %421 = vmatprep.subr.bf16.mxu0 0
    %422 = vmatpush1.bf16.msra.mxu0 %v406
    %423 = vmatprep.subr.bf16.mxu0 0
    %424 = vmatpush1.bf16.msra.mxu0 %v405
    %425 = vmatprep.subr.bf16.mxu0 0
    %426 = vmatpush1.bf16.msra.mxu0 %v404
    %427 = vmatprep.subr.bf16.mxu0 0
    %428 = vmatpush1.bf16.msra.mxu0 %v403
    %429 = vmatprep.subr.bf16.mxu0 0
    %430 = vmatpush1.bf16.msra.mxu0 %v402
    %431 = vmatprep.subr.bf16.mxu0 0
    %432 = vmatpush1.bf16.msra.mxu0 %v401
    %433 = vmatprep.subr.bf16.mxu0 0
    %434 = vmatpush2.bf16.msra.mxu0 0
    %435 = vmatprep.subr.bf16.mxu0 0
    %436 = vmatpush2.bf16.msra.mxu0 0
    %437 = vmatprep.subr.bf16.mxu0 0
    %438 = vmatpush2.bf16.msra.mxu0 0
    %439 = vmatprep.subr.bf16.mxu0 0
    %440 = vmatpush2.bf16.msra.mxu0 0
    %441 = vmatprep.subr.bf16.mxu0 0
    %442 = vmatpush2.bf16.msra.mxu0 0
    %443 = vmatprep.subr.bf16.mxu0 0
    %444 = vmatpush2.bf16.msra.mxu0 0
    %445 = vmatprep.subr.bf16.mxu0 0
    %446 = vmatpush2.bf16.msra.mxu0 0
    %447 = vmatprep.subr.bf16.mxu0 0
    %448 = vmatpush2.bf16.msra.mxu0 0
    %449 = vmatprep.mubr.bf16.mxu0 0
    %450 = vmatmul.mubr.bf16.gmra.mxu0 %v344
    %v451 = vpop.f32.mrf.mxu0
    %v452 = vadd.f32 0.0, %v451
    %v453 = vpop.f32.mrf.mxu0
    %v454 = vpop.f32.mrf.mxu0
    %v455 = vadd.f32 0.0, %v454
    %v456 = vpop.f32.mrf.mxu0
    %457 = vmatprep.mubr.bf16.mxu0 0
    %458 = vmatmul.mubr.bf16.gmra.mxu0 %v345
    %v459 = vpop.f32.mrf.mxu0
    %v460 = vadd.f32 0.0, %v459
    %v461 = vpop.f32.mrf.mxu0
    %v462 = vpop.f32.mrf.mxu0
    %v463 = vadd.f32 0.0, %v462
    %v464 = vpop.f32.mrf.mxu0
    %465 = vmatprep.mubr.bf16.mxu0 0
    %466 = vmatmul.mubr.bf16.gmra.mxu0 %v346
    %v467 = vpop.f32.mrf.mxu0
    %v468 = vadd.f32 0.0, %v467
    %v469 = vpop.f32.mrf.mxu0
    %v470 = vpop.f32.mrf.mxu0
    %v471 = vadd.f32 0.0, %v470
    %v472 = vpop.f32.mrf.mxu0
    %473 = vmatprep.mubr.bf16.mxu0 0
    %474 = vmatmul.mubr.bf16.gmra.mxu0 %v347
    %v475 = vpop.f32.mrf.mxu0
    %v476 = vadd.f32 0.0, %v475
    %v477 = vpop.f32.mrf.mxu0
    %v478 = vpop.f32.mrf.mxu0
    %v479 = vadd.f32 0.0, %v478
    %v480 = vpop.f32.mrf.mxu0
    %481 = vmatprep.mubr.bf16.mxu0 0
    %482 = vmatmul.mubr.bf16.gmra.mxu0 %v348
    %v483 = vpop.f32.mrf.mxu0
    %v484 = vadd.f32 0.0, %v483
    %v485 = vpop.f32.mrf.mxu0
    %v486 = vpop.f32.mrf.mxu0
    %v487 = vadd.f32 0.0, %v486
    %v488 = vpop.f32.mrf.mxu0
    %489 = vmatprep.mubr.bf16.mxu0 0
    %490 = vmatmul.mubr.bf16.gmra.mxu0 %v349
    %v491 = vpop.f32.mrf.mxu0
    %v492 = vadd.f32 0.0, %v491
    %v493 = vpop.f32.mrf.mxu0
    %v494 = vpop.f32.mrf.mxu0
    %v495 = vadd.f32 0.0, %v494
    %v496 = vpop.f32.mrf.mxu0
    %497 = vmatprep.mubr.bf16.mxu0 0
    %498 = vmatmul.mubr.bf16.gmra.mxu0 %v350
    %v499 = vpop.f32.mrf.mxu0
    %v500 = vadd.f32 0.0, %v499
    %v501 = vpop.f32.mrf.mxu0
    %v502 = vpop.f32.mrf.mxu0
    %v503 = vadd.f32 0.0, %v502
    %v504 = vpop.f32.mrf.mxu0
    %505 = vmatprep.mubr.bf16.mxu0 0
    %506 = vmatmul.mubr.bf16.gmra.mxu0 %v351
    %v507 = vpop.f32.mrf.mxu0
    %v508 = vadd.f32 0.0, %v507
    %v509 = vpop.f32.mrf.mxu0
    %v510 = vpop.f32.mrf.mxu0
    %v511 = vadd.f32 0.0, %v510
    %v512 = vpop.f32.mrf.mxu0
    %513 = vdwg.mxu0
    %v514 = vmax.f32 %v452, 0.0
    %v515 = vmax.f32 %v455, 0.0
    %v516 = vmax.f32 %v460, 0.0
    %v517 = vmax.f32 %v463, 0.0
    %v518 = vmax.f32 %v468, 0.0
    %v519 = vmax.f32 %v471, 0.0
    %v520 = vmax.f32 %v476, 0.0
    %v521 = vmax.f32 %v479, 0.0
    %v522 = vmax.f32 %v484, 0.0
    %v523 = vmax.f32 %v487, 0.0
    %v524 = vmax.f32 %v492, 0.0
    %v525 = vmax.f32 %v495, 0.0
    %v526 = vmax.f32 %v500, 0.0
    %v527 = vmax.f32 %v503, 0.0
    %v528 = vmax.f32 %v508, 0.0
    %v529 = vmax.f32 %v511, 0.0
    %v530 = vadd.f32 %v328, %v514
    %v531 = vadd.f32 %v329, %v515
    %v532 = vadd.f32 %v330, %v516
    %v533 = vadd.f32 %v331, %v517
    %v534 = vadd.f32 %v332, %v518
    %v535 = vadd.f32 %v333, %v519
    %v536 = vadd.f32 %v334, %v520
    %v537 = vadd.f32 %v335, %v521
    %v538 = vadd.f32 %v336, %v522
    %v539 = vadd.f32 %v337, %v523
    %v540 = vadd.f32 %v338, %v524
    %v541 = vadd.f32 %v339, %v525
    %v542 = vadd.f32 %v340, %v526
    %v543 = vadd.f32 %v341, %v527
    %v544 = vadd.f32 %v342, %v528
    %v545 = vadd.f32 %v343, %v529
    %546 = vst [vmem:[#allocation2] sm:$0xff] %v530
    %547 = vst [vmem:[#allocation2 + $0x8] sm:$0xff] %v531
    %548 = vst [vmem:[#allocation2 + $0x10] sm:$0xff] %v532
    %549 = vst [vmem:[#allocation2 + $0x18] sm:$0xff] %v533
    %550 = vst [vmem:[#allocation2 + $0x20] sm:$0xff] %v534
    %551 = vst [vmem:[#allocation2 + $0x28] sm:$0xff] %v535
    %552 = vst [vmem:[#allocation2 + $0x30] sm:$0xff] %v536
    %553 = vst [vmem:[#allocation2 + $0x38] sm:$0xff] %v537
    %554 = vst [vmem:[#allocation2 + $0x40] sm:$0xff] %v538
    %555 = vst [vmem:[#allocation2 + $0x48] sm:$0xff] %v539
    %556 = vst [vmem:[#allocation2 + $0x50] sm:$0xff] %v540
    %557 = vst [vmem:[#allocation2 + $0x58] sm:$0xff] %v541
    %558 = vst [vmem:[#allocation2 + $0x60] sm:$0xff] %v542
    %559 = vst [vmem:[#allocation2 + $0x68] sm:$0xff] %v543
    %560 = vst [vmem:[#allocation2 + $0x70] sm:$0xff] %v544
    %561 = vst [vmem:[#allocation2 + $0x78] sm:$0xff] %v545
    %v562 = vld [vmem:[#allocation2] sm:$0xff]
    %v563 = vld [vmem:[#allocation2 + $0x8] sm:$0xff]
    %v564 = vld [vmem:[#allocation2 + $0x10] sm:$0xff]
    %v565 = vld [vmem:[#allocation2 + $0x18] sm:$0xff]
    %v566 = vld [vmem:[#allocation2 + $0x20] sm:$0xff]
    %v567 = vld [vmem:[#allocation2 + $0x28] sm:$0xff]
    %v568 = vld [vmem:[#allocation2 + $0x30] sm:$0xff]
    %v569 = vld [vmem:[#allocation2 + $0x38] sm:$0xff]
    %v570 = vld [vmem:[#allocation2 + $0x40] sm:$0xff]
    %v571 = vld [vmem:[#allocation2 + $0x48] sm:$0xff]
    %v572 = vld [vmem:[#allocation2 + $0x50] sm:$0xff]
    %v573 = vld [vmem:[#allocation2 + $0x58] sm:$0xff]
    %v574 = vld [vmem:[#allocation2 + $0x60] sm:$0xff]
    %v575 = vld [vmem:[#allocation2 + $0x68] sm:$0xff]
    %v576 = vld [vmem:[#allocation2 + $0x70] sm:$0xff]
    %v577 = vld [vmem:[#allocation2 + $0x78] sm:$0xff]
    %v578 = vpack.c.bf16 %v563, %v562
    %v579 = vpack.c.bf16 %v565, %v564
    %v580 = vpack.c.bf16 %v567, %v566
    %v581 = vpack.c.bf16 %v569, %v568
    %v582 = vpack.c.bf16 %v571, %v570
    %v583 = vpack.c.bf16 %v573, %v572
    %v584 = vpack.c.bf16 %v575, %v574
    %v585 = vpack.c.bf16 %v577, %v576
    %s586 = scalar_lea.vmem [#allocation3], 128
    %v587 = vld [vmem:[%s586] sm:$0xf]
    %v588 = vld [vmem:[%s586 + $0x4] sm:$0xf]
    %v589 = vld [vmem:[%s586 + $0x8] sm:$0xf]
    %v590 = vld [vmem:[%s586 + $0xc] sm:$0xf]
    %v591 = vld [vmem:[%s586 + $0x10] sm:$0xf]
    %v592 = vld [vmem:[%s586 + $0x14] sm:$0xf]
    %v593 = vld [vmem:[%s586 + $0x18] sm:$0xf]
    %v594 = vld [vmem:[%s586 + $0x1c] sm:$0xf]
    %v595 = vld [vmem:[%s586 + $0x20] sm:$0xf]
    %v596 = vld [vmem:[%s586 + $0x24] sm:$0xf]
    %v597 = vld [vmem:[%s586 + $0x28] sm:$0xf]
    %v598 = vld [vmem:[%s586 + $0x2c] sm:$0xf]
    %v599 = vld [vmem:[%s586 + $0x30] sm:$0xf]
    %v600 = vld [vmem:[%s586 + $0x34] sm:$0xf]
    %v601 = vld [vmem:[%s586 + $0x38] sm:$0xf]
    %v602 = vld [vmem:[%s586 + $0x3c] sm:$0xf]
    %v619 = vunpack.c.l.b16 %v587
    %v620 = vunpack.c.l.b16 %v588
    %v621 = vunpack.c.l.b16 %v589
    %v622 = vunpack.c.l.b16 %v590
    %v623 = vunpack.c.l.b16 %v591
    %v624 = vunpack.c.l.b16 %v592
    %v625 = vunpack.c.l.b16 %v593
    %v626 = vunpack.c.l.b16 %v594
    %v627 = vunpack.c.l.b16 %v595
    %v628 = vunpack.c.l.b16 %v596
    %v629 = vunpack.c.l.b16 %v597
    %v630 = vunpack.c.l.b16 %v598
    %v631 = vunpack.c.l.b16 %v599
    %v632 = vunpack.c.l.b16 %v600
    %v633 = vunpack.c.l.b16 %v601
    %v634 = vunpack.c.l.b16 %v602
    %v635 = vpack.c.b16 %v620, %v619
    %v636 = vpack.c.b16 %v622, %v621
    %v637 = vpack.c.b16 %v624, %v623
    %v638 = vpack.c.b16 %v626, %v625
    %v639 = vpack.c.b16 %v628, %v627
    %v640 = vpack.c.b16 %v630, %v629
    %v641 = vpack.c.b16 %v632, %v631
    %v642 = vpack.c.b16 %v634, %v633
    %651 = vmatprep.subr.bf16.mxu0 0
    %652 = vmatpush1.bf16.msra.mxu0 %v642
    %653 = vmatprep.subr.bf16.mxu0 0
    %654 = vmatpush1.bf16.msra.mxu0 %v641
    %655 = vmatprep.subr.bf16.mxu0 0
    %656 = vmatpush1.bf16.msra.mxu0 %v640
    %657 = vmatprep.subr.bf16.mxu0 0
    %658 = vmatpush1.bf16.msra.mxu0 %v639
    %659 = vmatprep.subr.bf16.mxu0 0
    %660 = vmatpush1.bf16.msra.mxu0 %v638
    %661 = vmatprep.subr.bf16.mxu0 0
    %662 = vmatpush1.bf16.msra.mxu0 %v637
    %663 = vmatprep.subr.bf16.mxu0 0
    %664 = vmatpush1.bf16.msra.mxu0 %v636
    %665 = vmatprep.subr.bf16.mxu0 0
    %666 = vmatpush1.bf16.msra.mxu0 %v635
    %667 = vmatprep.subr.bf16.mxu0 0
    %668 = vmatpush2.bf16.msra.mxu0 0
    %669 = vmatprep.subr.bf16.mxu0 0
    %670 = vmatpush2.bf16.msra.mxu0 0
    %671 = vmatprep.subr.bf16.mxu0 0
    %672 = vmatpush2.bf16.msra.mxu0 0
    %673 = vmatprep.subr.bf16.mxu0 0
    %674 = vmatpush2.bf16.msra.mxu0 0
    %675 = vmatprep.subr.bf16.mxu0 0
    %676 = vmatpush2.bf16.msra.mxu0 0
    %677 = vmatprep.subr.bf16.mxu0 0
    %678 = vmatpush2.bf16.msra.mxu0 0
    %679 = vmatprep.subr.bf16.mxu0 0
    %680 = vmatpush2.bf16.msra.mxu0 0
    %681 = vmatprep.subr.bf16.mxu0 0
    %682 = vmatpush2.bf16.msra.mxu0 0
    %683 = vmatprep.mubr.bf16.mxu0 0
    %684 = vmatmul.mubr.bf16.gmra.mxu0 %v578
    %v685 = vpop.f32.mrf.mxu0
    %v686 = vadd.f32 0.0, %v685
    %v687 = vpop.f32.mrf.mxu0
    %v688 = vpop.f32.mrf.mxu0
    %v689 = vadd.f32 0.0, %v688
    %v690 = vpop.f32.mrf.mxu0
    %691 = vmatprep.mubr.bf16.mxu0 0
    %692 = vmatmul.mubr.bf16.gmra.mxu0 %v579
    %v693 = vpop.f32.mrf.mxu0
    %v694 = vadd.f32 0.0, %v693
    %v695 = vpop.f32.mrf.mxu0
    %v696 = vpop.f32.mrf.mxu0
    %v697 = vadd.f32 0.0, %v696
    %v698 = vpop.f32.mrf.mxu0
    %699 = vmatprep.mubr.bf16.mxu0 0
    %700 = vmatmul.mubr.bf16.gmra.mxu0 %v580
    %v701 = vpop.f32.mrf.mxu0
    %v702 = vadd.f32 0.0, %v701
    %v703 = vpop.f32.mrf.mxu0
    %v704 = vpop.f32.mrf.mxu0
    %v705 = vadd.f32 0.0, %v704
    %v706 = vpop.f32.mrf.mxu0
    %707 = vmatprep.mubr.bf16.mxu0 0
    %708 = vmatmul.mubr.bf16.gmra.mxu0 %v581
    %v709 = vpop.f32.mrf.mxu0
    %v710 = vadd.f32 0.0, %v709
    %v711 = vpop.f32.mrf.mxu0
    %v712 = vpop.f32.mrf.mxu0
    %v713 = vadd.f32 0.0, %v712
    %v714 = vpop.f32.mrf.mxu0
    %715 = vmatprep.mubr.bf16.mxu0 0
    %716 = vmatmul.mubr.bf16.gmra.mxu0 %v582
    %v717 = vpop.f32.mrf.mxu0
    %v718 = vadd.f32 0.0, %v717
    %v719 = vpop.f32.mrf.mxu0
    %v720 = vpop.f32.mrf.mxu0
    %v721 = vadd.f32 0.0, %v720
    %v722 = vpop.f32.mrf.mxu0
    %723 = vmatprep.mubr.bf16.mxu0 0
    %724 = vmatmul.mubr.bf16.gmra.mxu0 %v583
    %v725 = vpop.f32.mrf.mxu0
    %v726 = vadd.f32 0.0, %v725
    %v727 = vpop.f32.mrf.mxu0
    %v728 = vpop.f32.mrf.mxu0
    %v729 = vadd.f32 0.0, %v728
    %v730 = vpop.f32.mrf.mxu0
    %731 = vmatprep.mubr.bf16.mxu0 0
    %732 = vmatmul.mubr.bf16.gmra.mxu0 %v584
    %v733 = vpop.f32.mrf.mxu0
    %v734 = vadd.f32 0.0, %v733
    %v735 = vpop.f32.mrf.mxu0
    %v736 = vpop.f32.mrf.mxu0
    %v737 = vadd.f32 0.0, %v736
    %v738 = vpop.f32.mrf.mxu0
    %739 = vmatprep.mubr.bf16.mxu0 0
    %740 = vmatmul.mubr.bf16.gmra.mxu0 %v585
    %v741 = vpop.f32.mrf.mxu0
    %v742 = vadd.f32 0.0, %v741
    %v743 = vpop.f32.mrf.mxu0
    %v744 = vpop.f32.mrf.mxu0
    %v745 = vadd.f32 0.0, %v744
    %v746 = vpop.f32.mrf.mxu0
    %747 = vdwg.mxu0
    %v748 = vmax.f32 %v686, 0.0
    %v749 = vmax.f32 %v689, 0.0
    %v750 = vmax.f32 %v694, 0.0
    %v751 = vmax.f32 %v697, 0.0
    %v752 = vmax.f32 %v702, 0.0
    %v753 = vmax.f32 %v705, 0.0
    %v754 = vmax.f32 %v710, 0.0
    %v755 = vmax.f32 %v713, 0.0
    %v756 = vmax.f32 %v718, 0.0
    %v757 = vmax.f32 %v721, 0.0
    %v758 = vmax.f32 %v726, 0.0
    %v759 = vmax.f32 %v729, 0.0
    %v760 = vmax.f32 %v734, 0.0
    %v761 = vmax.f32 %v737, 0.0
    %v762 = vmax.f32 %v742, 0.0
    %v763 = vmax.f32 %v745, 0.0
    %v764 = vadd.f32 %v562, %v748
    %v765 = vadd.f32 %v563, %v749
    %v766 = vadd.f32 %v564, %v750
    %v767 = vadd.f32 %v565, %v751
    %v768 = vadd.f32 %v566, %v752
    %v769 = vadd.f32 %v567, %v753
    %v770 = vadd.f32 %v568, %v754
    %v771 = vadd.f32 %v569, %v755
    %v772 = vadd.f32 %v570, %v756
    %v773 = vadd.f32 %v571, %v757
    %v774 = vadd.f32 %v572, %v758
    %v775 = vadd.f32 %v573, %v759
    %v776 = vadd.f32 %v574, %v760
    %v777 = vadd.f32 %v575, %v761
    %v778 = vadd.f32 %v576, %v762
    %v779 = vadd.f32 %v577, %v763
    %780 = vst [vmem:[#allocation2] sm:$0xff] %v764
    %781 = vst [vmem:[#allocation2 + $0x8] sm:$0xff] %v765
    %782 = vst [vmem:[#allocation2 + $0x10] sm:$0xff] %v766
    %783 = vst [vmem:[#allocation2 + $0x18] sm:$0xff] %v767
    %784 = vst [vmem:[#allocation2 + $0x20] sm:$0xff] %v768
    %785 = vst [vmem:[#allocation2 + $0x28] sm:$0xff] %v769
    %786 = vst [vmem:[#allocation2 + $0x30] sm:$0xff] %v770
    %787 = vst [vmem:[#allocation2 + $0x38] sm:$0xff] %v771
    %788 = vst [vmem:[#allocation2 + $0x40] sm:$0xff] %v772
    %789 = vst [vmem:[#allocation2 + $0x48] sm:$0xff] %v773
    %790 = vst [vmem:[#allocation2 + $0x50] sm:$0xff] %v774
    %791 = vst [vmem:[#allocation2 + $0x58] sm:$0xff] %v775
    %792 = vst [vmem:[#allocation2 + $0x60] sm:$0xff] %v776
    %793 = vst [vmem:[#allocation2 + $0x68] sm:$0xff] %v777
    %794 = vst [vmem:[#allocation2 + $0x70] sm:$0xff] %v778
    %795 = vst [vmem:[#allocation2 + $0x78] sm:$0xff] %v779
    %v796 = vld [vmem:[#allocation2] sm:$0xff]
    %v797 = vld [vmem:[#allocation2 + $0x8] sm:$0xff]
    %v798 = vld [vmem:[#allocation2 + $0x10] sm:$0xff]
    %v799 = vld [vmem:[#allocation2 + $0x18] sm:$0xff]
    %v800 = vld [vmem:[#allocation2 + $0x20] sm:$0xff]
    %v801 = vld [vmem:[#allocation2 + $0x28] sm:$0xff]
    %v802 = vld [vmem:[#allocation2 + $0x30] sm:$0xff]
    %v803 = vld [vmem:[#allocation2 + $0x38] sm:$0xff]
    %v804 = vld [vmem:[#allocation2 + $0x40] sm:$0xff]
    %v805 = vld [vmem:[#allocation2 + $0x48] sm:$0xff]
    %v806 = vld [vmem:[#allocation2 + $0x50] sm:$0xff]
    %v807 = vld [vmem:[#allocation2 + $0x58] sm:$0xff]
    %v808 = vld [vmem:[#allocation2 + $0x60] sm:$0xff]
    %v809 = vld [vmem:[#allocation2 + $0x68] sm:$0xff]
    %v810 = vld [vmem:[#allocation2 + $0x70] sm:$0xff]
    %v811 = vld [vmem:[#allocation2 + $0x78] sm:$0xff]
    %v812 = vpack.c.bf16 %v797, %v796
    %v813 = vpack.c.bf16 %v799, %v798
    %v814 = vpack.c.bf16 %v801, %v800
    %v815 = vpack.c.bf16 %v803, %v802
    %v816 = vpack.c.bf16 %v805, %v804
    %v817 = vpack.c.bf16 %v807, %v806
    %v818 = vpack.c.bf16 %v809, %v808
    %v819 = vpack.c.bf16 %v811, %v810
    %s820 = scalar_lea.vmem [#allocation3], 192
    %v821 = vld [vmem:[%s820] sm:$0xf]
    %v822 = vld [vmem:[%s820 + $0x4] sm:$0xf]
    %v823 = vld [vmem:[%s820 + $0x8] sm:$0xf]
    %v824 = vld [vmem:[%s820 + $0xc] sm:$0xf]
    %v825 = vld [vmem:[%s820 + $0x10] sm:$0xf]
    %v826 = vld [vmem:[%s820 + $0x14] sm:$0xf]
    %v827 = vld [vmem:[%s820 + $0x18] sm:$0xf]
    %v828 = vld [vmem:[%s820 + $0x1c] sm:$0xf]
    %v829 = vld [vmem:[%s820 + $0x20] sm:$0xf]
    %v830 = vld [vmem:[%s820 + $0x24] sm:$0xf]
    %v831 = vld [vmem:[%s820 + $0x28] sm:$0xf]
    %v832 = vld [vmem:[%s820 + $0x2c] sm:$0xf]
    %v833 = vld [vmem:[%s820 + $0x30] sm:$0xf]
    %v834 = vld [vmem:[%s820 + $0x34] sm:$0xf]
    %v835 = vld [vmem:[%s820 + $0x38] sm:$0xf]
    %v836 = vld [vmem:[%s820 + $0x3c] sm:$0xf]
    %v853 = vunpack.c.l.b16 %v821
    %v854 = vunpack.c.l.b16 %v822
    %v855 = vunpack.c.l.b16 %v823
    %v856 = vunpack.c.l.b16 %v824
    %v857 = vunpack.c.l.b16 %v825
    %v858 = vunpack.c.l.b16 %v826
    %v859 = vunpack.c.l.b16 %v827
    %v860 = vunpack.c.l.b16 %v828
    %v861 = vunpack.c.l.b16 %v829
    %v862 = vunpack.c.l.b16 %v830
    %v863 = vunpack.c.l.b16 %v831
    %v864 = vunpack.c.l.b16 %v832
    %v865 = vunpack.c.l.b16 %v833
    %v866 = vunpack.c.l.b16 %v834
    %v867 = vunpack.c.l.b16 %v835
    %v868 = vunpack.c.l.b16 %v836
    %v869 = vpack.c.b16 %v854, %v853
    %v870 = vpack.c.b16 %v856, %v855
    %v871 = vpack.c.b16 %v858, %v857
    %v872 = vpack.c.b16 %v860, %v859
    %v873 = vpack.c.b16 %v862, %v861
    %v874 = vpack.c.b16 %v864, %v863
    %v875 = vpack.c.b16 %v866, %v865
    %v876 = vpack.c.b16 %v868, %v867
    %885 = vmatprep.subr.bf16.mxu0 0
    %886 = vmatpush1.bf16.msra.mxu0 %v876
    %887 = vmatprep.subr.bf16.mxu0 0
    %888 = vmatpush1.bf16.msra.mxu0 %v875
    %889 = vmatprep.subr.bf16.mxu0 0
    %890 = vmatpush1.bf16.msra.mxu0 %v874
    %891 = vmatprep.subr.bf16.mxu0 0
    %892 = vmatpush1.bf16.msra.mxu0 %v873
    %893 = vmatprep.subr.bf16.mxu0 0
    %894 = vmatpush1.bf16.msra.mxu0 %v872
    %895 = vmatprep.subr.bf16.mxu0 0
    %896 = vmatpush1.bf16.msra.mxu0 %v871
    %897 = vmatprep.subr.bf16.mxu0 0
    %898 = vmatpush1.bf16.msra.mxu0 %v870
    %899 = vmatprep.subr.bf16.mxu0 0
    %900 = vmatpush1.bf16.msra.mxu0 %v869
    %901 = vmatprep.subr.bf16.mxu0 0
    %902 = vmatpush2.bf16.msra.mxu0 0
    %903 = vmatprep.subr.bf16.mxu0 0
    %904 = vmatpush2.bf16.msra.mxu0 0
    %905 = vmatprep.subr.bf16.mxu0 0
    %906 = vmatpush2.bf16.msra.mxu0 0
    %907 = vmatprep.subr.bf16.mxu0 0
    %908 = vmatpush2.bf16.msra.mxu0 0
    %909 = vmatprep.subr.bf16.mxu0 0
    %910 = vmatpush2.bf16.msra.mxu0 0
    %911 = vmatprep.subr.bf16.mxu0 0
    %912 = vmatpush2.bf16.msra.mxu0 0
    %913 = vmatprep.subr.bf16.mxu0 0
    %914 = vmatpush2.bf16.msra.mxu0 0
    %915 = vmatprep.subr.bf16.mxu0 0
    %916 = vmatpush2.bf16.msra.mxu0 0
    %917 = vmatprep.mubr.bf16.mxu0 0
    %918 = vmatmul.mubr.bf16.gmra.mxu0 %v812
    %v919 = vpop.f32.mrf.mxu0
    %v920 = vadd.f32 0.0, %v919
    %v921 = vpop.f32.mrf.mxu0
    %v922 = vpop.f32.mrf.mxu0
    %v923 = vadd.f32 0.0, %v922
    %v924 = vpop.f32.mrf.mxu0
    %925 = vmatprep.mubr.bf16.mxu0 0
    %926 = vmatmul.mubr.bf16.gmra.mxu0 %v813
    %v927 = vpop.f32.mrf.mxu0
    %v928 = vadd.f32 0.0, %v927
    %v929 = vpop.f32.mrf.mxu0
    %v930 = vpop.f32.mrf.mxu0
    %v931 = vadd.f32 0.0, %v930
    %v932 = vpop.f32.mrf.mxu0
    %933 = vmatprep.mubr.bf16.mxu0 0
    %934 = vmatmul.mubr.bf16.gmra.mxu0 %v814
    %v935 = vpop.f32.mrf.mxu0
    %v936 = vadd.f32 0.0, %v935
    %v937 = vpop.f32.mrf.mxu0
    %v938 = vpop.f32.mrf.mxu0
    %v939 = vadd.f32 0.0, %v938
    %v940 = vpop.f32.mrf.mxu0
    %941 = vmatprep.mubr.bf16.mxu0 0
    %942 = vmatmul.mubr.bf16.gmra.mxu0 %v815
    %v943 = vpop.f32.mrf.mxu0
    %v944 = vadd.f32 0.0, %v943
    %v945 = vpop.f32.mrf.mxu0
    %v946 = vpop.f32.mrf.mxu0
    %v947 = vadd.f32 0.0, %v946
    %v948 = vpop.f32.mrf.mxu0
    %949 = vmatprep.mubr.bf16.mxu0 0
    %950 = vmatmul.mubr.bf16.gmra.mxu0 %v816
    %v951 = vpop.f32.mrf.mxu0
    %v952 = vadd.f32 0.0, %v951
    %v953 = vpop.f32.mrf.mxu0
    %v954 = vpop.f32.mrf.mxu0
    %v955 = vadd.f32 0.0, %v954
    %v956 = vpop.f32.mrf.mxu0
    %957 = vmatprep.mubr.bf16.mxu0 0
    %958 = vmatmul.mubr.bf16.gmra.mxu0 %v817
    %v959 = vpop.f32.mrf.mxu0
    %v960 = vadd.f32 0.0, %v959
    %v961 = vpop.f32.mrf.mxu0
    %v962 = vpop.f32.mrf.mxu0
    %v963 = vadd.f32 0.0, %v962
    %v964 = vpop.f32.mrf.mxu0
    %965 = vmatprep.mubr.bf16.mxu0 0
    %966 = vmatmul.mubr.bf16.gmra.mxu0 %v818
    %v967 = vpop.f32.mrf.mxu0
    %v968 = vadd.f32 0.0, %v967
    %v969 = vpop.f32.mrf.mxu0
    %v970 = vpop.f32.mrf.mxu0
    %v971 = vadd.f32 0.0, %v970
    %v972 = vpop.f32.mrf.mxu0
    %973 = vmatprep.mubr.bf16.mxu0 0
    %974 = vmatmul.mubr.bf16.gmra.mxu0 %v819
    %v975 = vpop.f32.mrf.mxu0
    %v976 = vadd.f32 0.0, %v975
    %v977 = vpop.f32.mrf.mxu0
    %v978 = vpop.f32.mrf.mxu0
    %v979 = vadd.f32 0.0, %v978
    %v980 = vpop.f32.mrf.mxu0
    %981 = vdwg.mxu0
    %v982 = vmax.f32 %v920, 0.0
    %v983 = vmax.f32 %v923, 0.0
    %v984 = vmax.f32 %v928, 0.0
    %v985 = vmax.f32 %v931, 0.0
    %v986 = vmax.f32 %v936, 0.0
    %v987 = vmax.f32 %v939, 0.0
    %v988 = vmax.f32 %v944, 0.0
    %v989 = vmax.f32 %v947, 0.0
    %v990 = vmax.f32 %v952, 0.0
    %v991 = vmax.f32 %v955, 0.0
    %v992 = vmax.f32 %v960, 0.0
    %v993 = vmax.f32 %v963, 0.0
    %v994 = vmax.f32 %v968, 0.0
    %v995 = vmax.f32 %v971, 0.0
    %v996 = vmax.f32 %v976, 0.0
    %v997 = vmax.f32 %v979, 0.0
    %v998 = vadd.f32 %v796, %v982
    %v999 = vadd.f32 %v797, %v983
    %v1000 = vadd.f32 %v798, %v984
    %v1001 = vadd.f32 %v799, %v985
    %v1002 = vadd.f32 %v800, %v986
    %v1003 = vadd.f32 %v801, %v987
    %v1004 = vadd.f32 %v802, %v988
    %v1005 = vadd.f32 %v803, %v989
    %v1006 = vadd.f32 %v804, %v990
    %v1007 = vadd.f32 %v805, %v991
    %v1008 = vadd.f32 %v806, %v992
    %v1009 = vadd.f32 %v807, %v993
    %v1010 = vadd.f32 %v808, %v994
    %v1011 = vadd.f32 %v809, %v995
    %v1012 = vadd.f32 %v810, %v996
    %v1013 = vadd.f32 %v811, %v997
    %1014 = vst [vmem:[#allocation2] sm:$0xff] %v998
    %1015 = vst [vmem:[#allocation2 + $0x8] sm:$0xff] %v999
    %1016 = vst [vmem:[#allocation2 + $0x10] sm:$0xff] %v1000
    %1017 = vst [vmem:[#allocation2 + $0x18] sm:$0xff] %v1001
    %1018 = vst [vmem:[#allocation2 + $0x20] sm:$0xff] %v1002
    %1019 = vst [vmem:[#allocation2 + $0x28] sm:$0xff] %v1003
    %1020 = vst [vmem:[#allocation2 + $0x30] sm:$0xff] %v1004
    %1021 = vst [vmem:[#allocation2 + $0x38] sm:$0xff] %v1005
    %1022 = vst [vmem:[#allocation2 + $0x40] sm:$0xff] %v1006
    %1023 = vst [vmem:[#allocation2 + $0x48] sm:$0xff] %v1007
    %1024 = vst [vmem:[#allocation2 + $0x50] sm:$0xff] %v1008
    %1025 = vst [vmem:[#allocation2 + $0x58] sm:$0xff] %v1009
    %1026 = vst [vmem:[#allocation2 + $0x60] sm:$0xff] %v1010
    %1027 = vst [vmem:[#allocation2 + $0x68] sm:$0xff] %v1011
    %1028 = vst [vmem:[#allocation2 + $0x70] sm:$0xff] %v1012
    %1029 = vst [vmem:[#allocation2 + $0x78] sm:$0xff] %v1013
    %v1030 = vld [vmem:[#allocation2] sm:$0xff]
    %v1031 = vld [vmem:[#allocation2 + $0x8] sm:$0xff]
    %v1032 = vld [vmem:[#allocation2 + $0x10] sm:$0xff]
    %v1033 = vld [vmem:[#allocation2 + $0x18] sm:$0xff]
    %v1034 = vld [vmem:[#allocation2 + $0x20] sm:$0xff]
    %v1035 = vld [vmem:[#allocation2 + $0x28] sm:$0xff]
    %v1036 = vld [vmem:[#allocation2 + $0x30] sm:$0xff]
    %v1037 = vld [vmem:[#allocation2 + $0x38] sm:$0xff]
    %v1038 = vld [vmem:[#allocation2 + $0x40] sm:$0xff]
    %v1039 = vld [vmem:[#allocation2 + $0x48] sm:$0xff]
    %v1040 = vld [vmem:[#allocation2 + $0x50] sm:$0xff]
    %v1041 = vld [vmem:[#allocation2 + $0x58] sm:$0xff]
    %v1042 = vld [vmem:[#allocation2 + $0x60] sm:$0xff]
    %v1043 = vld [vmem:[#allocation2 + $0x68] sm:$0xff]
    %v1044 = vld [vmem:[#allocation2 + $0x70] sm:$0xff]
    %v1045 = vld [vmem:[#allocation2 + $0x78] sm:$0xff]
    %v1046 = vpack.c.bf16 %v1031, %v1030
    %v1047 = vpack.c.bf16 %v1033, %v1032
    %v1048 = vpack.c.bf16 %v1035, %v1034
    %v1049 = vpack.c.bf16 %v1037, %v1036
    %v1050 = vpack.c.bf16 %v1039, %v1038
    %v1051 = vpack.c.bf16 %v1041, %v1040
    %v1052 = vpack.c.bf16 %v1043, %v1042
    %v1053 = vpack.c.bf16 %v1045, %v1044
    %s1054 = scalar_lea.vmem [#allocation3], 256
    %v1055 = vld [vmem:[%s1054] sm:$0xf]
    %v1056 = vld [vmem:[%s1054 + $0x4] sm:$0xf]
    %v1057 = vld [vmem:[%s1054 + $0x8] sm:$0xf]
    %v1058 = vld [vmem:[%s1054 + $0xc] sm:$0xf]
    %v1059 = vld [vmem:[%s1054 + $0x10] sm:$0xf]
    %v1060 = vld [vmem:[%s1054 + $0x14] sm:$0xf]
    %v1061 = vld [vmem:[%s1054 + $0x18] sm:$0xf]
    %v1062 = vld [vmem:[%s1054 + $0x1c] sm:$0xf]
    %v1063 = vld [vmem:[%s1054 + $0x20] sm:$0xf]
    %v1064 = vld [vmem:[%s1054 + $0x24] sm:$0xf]
    %v1065 = vld [vmem:[%s1054 + $0x28] sm:$0xf]
    %v1066 = vld [vmem:[%s1054 + $0x2c] sm:$0xf]
    %v1067 = vld [vmem:[%s1054 + $0x30] sm:$0xf]
    %v1068 = vld [vmem:[%s1054 + $0x34] sm:$0xf]
    %v1069 = vld [vmem:[%s1054 + $0x38] sm:$0xf]
    %v1070 = vld [vmem:[%s1054 + $0x3c] sm:$0xf]
    %v1087 = vunpack.c.l.b16 %v1055
    %v1088 = vunpack.c.l.b16 %v1056
    %v1089 = vunpack.c.l.b16 %v1057
    %v1090 = vunpack.c.l.b16 %v1058
    %v1091 = vunpack.c.l.b16 %v1059
    %v1092 = vunpack.c.l.b16 %v1060
    %v1093 = vunpack.c.l.b16 %v1061
    %v1094 = vunpack.c.l.b16 %v1062
    %v1095 = vunpack.c.l.b16 %v1063
    %v1096 = vunpack.c.l.b16 %v1064
    %v1097 = vunpack.c.l.b16 %v1065
    %v1098 = vunpack.c.l.b16 %v1066
    %v1099 = vunpack.c.l.b16 %v1067
    %v1100 = vunpack.c.l.b16 %v1068
    %v1101 = vunpack.c.l.b16 %v1069
    %v1102 = vunpack.c.l.b16 %v1070
    %v1103 = vpack.c.b16 %v1088, %v1087
    %v1104 = vpack.c.b16 %v1090, %v1089
    %v1105 = vpack.c.b16 %v1092, %v1091
    %v1106 = vpack.c.b16 %v1094, %v1093
    %v1107 = vpack.c.b16 %v1096, %v1095
    %v1108 = vpack.c.b16 %v1098, %v1097
    %v1109 = vpack.c.b16 %v1100, %v1099
    %v1110 = vpack.c.b16 %v1102, %v1101
    %1119 = vmatprep.subr.bf16.mxu0 0
    %1120 = vmatpush1.bf16.msra.mxu0 %v1110
    %1121 = vmatprep.subr.bf16.mxu0 0
    %1122 = vmatpush1.bf16.msra.mxu0 %v1109
    %1123 = vmatprep.subr.bf16.mxu0 0
    %1124 = vmatpush1.bf16.msra.mxu0 %v1108
    %1125 = vmatprep.subr.bf16.mxu0 0
    %1126 = vmatpush1.bf16.msra.mxu0 %v1107
    %1127 = vmatprep.subr.bf16.mxu0 0
    %1128 = vmatpush1.bf16.msra.mxu0 %v1106
    %1129 = vmatprep.subr.bf16.mxu0 0
    %1130 = vmatpush1.bf16.msra.mxu0 %v1105
    %1131 = vmatprep.subr.bf16.mxu0 0
    %1132 = vmatpush1.bf16.msra.mxu0 %v1104
    %1133 = vmatprep.subr.bf16.mxu0 0
    %1134 = vmatpush1.bf16.msra.mxu0 %v1103
    %1135 = vmatprep.subr.bf16.mxu0 0
    %1136 = vmatpush2.bf16.msra.mxu0 0
    %1137 = vmatprep.subr.bf16.mxu0 0
    %1138 = vmatpush2.bf16.msra.mxu0 0
    %1139 = vmatprep.subr.bf16.mxu0 0
    %1140 = vmatpush2.bf16.msra.mxu0 0
    %1141 = vmatprep.subr.bf16.mxu0 0
    %1142 = vmatpush2.bf16.msra.mxu0 0
    %1143 = vmatprep.subr.bf16.mxu0 0
    %1144 = vmatpush2.bf16.msra.mxu0 0
    %1145 = vmatprep.subr.bf16.mxu0 0
    %1146 = vmatpush2.bf16.msra.mxu0 0
    %1147 = vmatprep.subr.bf16.mxu0 0
    %1148 = vmatpush2.bf16.msra.mxu0 0
    %1149 = vmatprep.subr.bf16.mxu0 0
    %1150 = vmatpush2.bf16.msra.mxu0 0
    %1151 = vmatprep.mubr.bf16.mxu0 0
    %1152 = vmatmul.mubr.bf16.gmra.mxu0 %v1046
    %v1153 = vpop.f32.mrf.mxu0
    %v1154 = vadd.f32 0.0, %v1153
    %v1155 = vpop.f32.mrf.mxu0
    %v1156 = vpop.f32.mrf.mxu0
    %v1157 = vadd.f32 0.0, %v1156
    %v1158 = vpop.f32.mrf.mxu0
    %1159 = vmatprep.mubr.bf16.mxu0 0
    %1160 = vmatmul.mubr.bf16.gmra.mxu0 %v1047
    %v1161 = vpop.f32.mrf.mxu0
    %v1162 = vadd.f32 0.0, %v1161
    %v1163 = vpop.f32.mrf.mxu0
    %v1164 = vpop.f32.mrf.mxu0
    %v1165 = vadd.f32 0.0, %v1164
    %v1166 = vpop.f32.mrf.mxu0
    %1167 = vmatprep.mubr.bf16.mxu0 0
    %1168 = vmatmul.mubr.bf16.gmra.mxu0 %v1048
    %v1169 = vpop.f32.mrf.mxu0
    %v1170 = vadd.f32 0.0, %v1169
    %v1171 = vpop.f32.mrf.mxu0
    %v1172 = vpop.f32.mrf.mxu0
    %v1173 = vadd.f32 0.0, %v1172
    %v1174 = vpop.f32.mrf.mxu0
    %1175 = vmatprep.mubr.bf16.mxu0 0
    %1176 = vmatmul.mubr.bf16.gmra.mxu0 %v1049
    %v1177 = vpop.f32.mrf.mxu0
    %v1178 = vadd.f32 0.0, %v1177
    %v1179 = vpop.f32.mrf.mxu0
    %v1180 = vpop.f32.mrf.mxu0
    %v1181 = vadd.f32 0.0, %v1180
    %v1182 = vpop.f32.mrf.mxu0
    %1183 = vmatprep.mubr.bf16.mxu0 0
    %1184 = vmatmul.mubr.bf16.gmra.mxu0 %v1050
    %v1185 = vpop.f32.mrf.mxu0
    %v1186 = vadd.f32 0.0, %v1185
    %v1187 = vpop.f32.mrf.mxu0
    %v1188 = vpop.f32.mrf.mxu0
    %v1189 = vadd.f32 0.0, %v1188
    %v1190 = vpop.f32.mrf.mxu0
    %1191 = vmatprep.mubr.bf16.mxu0 0
    %1192 = vmatmul.mubr.bf16.gmra.mxu0 %v1051
    %v1193 = vpop.f32.mrf.mxu0
    %v1194 = vadd.f32 0.0, %v1193
    %v1195 = vpop.f32.mrf.mxu0
    %v1196 = vpop.f32.mrf.mxu0
    %v1197 = vadd.f32 0.0, %v1196
    %v1198 = vpop.f32.mrf.mxu0
    %1199 = vmatprep.mubr.bf16.mxu0 0
    %1200 = vmatmul.mubr.bf16.gmra.mxu0 %v1052
    %v1201 = vpop.f32.mrf.mxu0
    %v1202 = vadd.f32 0.0, %v1201
    %v1203 = vpop.f32.mrf.mxu0
    %v1204 = vpop.f32.mrf.mxu0
    %v1205 = vadd.f32 0.0, %v1204
    %v1206 = vpop.f32.mrf.mxu0
    %1207 = vmatprep.mubr.bf16.mxu0 0
    %1208 = vmatmul.mubr.bf16.gmra.mxu0 %v1053
    %v1209 = vpop.f32.mrf.mxu0
    %v1210 = vadd.f32 0.0, %v1209
    %v1211 = vpop.f32.mrf.mxu0
    %v1212 = vpop.f32.mrf.mxu0
    %v1213 = vadd.f32 0.0, %v1212
    %v1214 = vpop.f32.mrf.mxu0
    %1215 = vdwg.mxu0
    %v1216 = vmax.f32 %v1154, 0.0
    %v1217 = vmax.f32 %v1157, 0.0
    %v1218 = vmax.f32 %v1162, 0.0
    %v1219 = vmax.f32 %v1165, 0.0
    %v1220 = vmax.f32 %v1170, 0.0
    %v1221 = vmax.f32 %v1173, 0.0
    %v1222 = vmax.f32 %v1178, 0.0
    %v1223 = vmax.f32 %v1181, 0.0
    %v1224 = vmax.f32 %v1186, 0.0
    %v1225 = vmax.f32 %v1189, 0.0
    %v1226 = vmax.f32 %v1194, 0.0
    %v1227 = vmax.f32 %v1197, 0.0
    %v1228 = vmax.f32 %v1202, 0.0
    %v1229 = vmax.f32 %v1205, 0.0
    %v1230 = vmax.f32 %v1210, 0.0
    %v1231 = vmax.f32 %v1213, 0.0
    %v1232 = vadd.f32 %v1030, %v1216
    %v1233 = vadd.f32 %v1031, %v1217
    %v1234 = vadd.f32 %v1032, %v1218
    %v1235 = vadd.f32 %v1033, %v1219
    %v1236 = vadd.f32 %v1034, %v1220
    %v1237 = vadd.f32 %v1035, %v1221
    %v1238 = vadd.f32 %v1036, %v1222
    %v1239 = vadd.f32 %v1037, %v1223
    %v1240 = vadd.f32 %v1038, %v1224
    %v1241 = vadd.f32 %v1039, %v1225
    %v1242 = vadd.f32 %v1040, %v1226
    %v1243 = vadd.f32 %v1041, %v1227
    %v1244 = vadd.f32 %v1042, %v1228
    %v1245 = vadd.f32 %v1043, %v1229
    %v1246 = vadd.f32 %v1044, %v1230
    %v1247 = vadd.f32 %v1045, %v1231
    %1248 = vst [vmem:[#allocation2] sm:$0xff] %v1232
    %1249 = vst [vmem:[#allocation2 + $0x8] sm:$0xff] %v1233
    %1250 = vst [vmem:[#allocation2 + $0x10] sm:$0xff] %v1234
    %1251 = vst [vmem:[#allocation2 + $0x18] sm:$0xff] %v1235
    %1252 = vst [vmem:[#allocation2 + $0x20] sm:$0xff] %v1236
    %1253 = vst [vmem:[#allocation2 + $0x28] sm:$0xff] %v1237
    %1254 = vst [vmem:[#allocation2 + $0x30] sm:$0xff] %v1238
    %1255 = vst [vmem:[#allocation2 + $0x38] sm:$0xff] %v1239
    %1256 = vst [vmem:[#allocation2 + $0x40] sm:$0xff] %v1240
    %1257 = vst [vmem:[#allocation2 + $0x48] sm:$0xff] %v1241
    %1258 = vst [vmem:[#allocation2 + $0x50] sm:$0xff] %v1242
    %1259 = vst [vmem:[#allocation2 + $0x58] sm:$0xff] %v1243
    %1260 = vst [vmem:[#allocation2 + $0x60] sm:$0xff] %v1244
    %1261 = vst [vmem:[#allocation2 + $0x68] sm:$0xff] %v1245
    %1262 = vst [vmem:[#allocation2 + $0x70] sm:$0xff] %v1246
    %1263 = vst [vmem:[#allocation2 + $0x78] sm:$0xff] %v1247
    %v1264 = vld [vmem:[#allocation2] sm:$0xff]
    %v1265 = vld [vmem:[#allocation2 + $0x8] sm:$0xff]
    %v1266 = vld [vmem:[#allocation2 + $0x10] sm:$0xff]
    %v1267 = vld [vmem:[#allocation2 + $0x18] sm:$0xff]
    %v1268 = vld [vmem:[#allocation2 + $0x20] sm:$0xff]
    %v1269 = vld [vmem:[#allocation2 + $0x28] sm:$0xff]
    %v1270 = vld [vmem:[#allocation2 + $0x30] sm:$0xff]
    %v1271 = vld [vmem:[#allocation2 + $0x38] sm:$0xff]
    %v1272 = vld [vmem:[#allocation2 + $0x40] sm:$0xff]
    %v1273 = vld [vmem:[#allocation2 + $0x48] sm:$0xff]
    %v1274 = vld [vmem:[#allocation2 + $0x50] sm:$0xff]
    %v1275 = vld [vmem:[#allocation2 + $0x58] sm:$0xff]
    %v1276 = vld [vmem:[#allocation2 + $0x60] sm:$0xff]
    %v1277 = vld [vmem:[#allocation2 + $0x68] sm:$0xff]
    %v1278 = vld [vmem:[#allocation2 + $0x70] sm:$0xff]
    %v1279 = vld [vmem:[#allocation2 + $0x78] sm:$0xff]
    %v1280 = vpack.c.bf16 %v1265, %v1264
    %v1281 = vpack.c.bf16 %v1267, %v1266
    %v1282 = vpack.c.bf16 %v1269, %v1268
    %v1283 = vpack.c.bf16 %v1271, %v1270
    %v1284 = vpack.c.bf16 %v1273, %v1272
    %v1285 = vpack.c.bf16 %v1275, %v1274
    %v1286 = vpack.c.bf16 %v1277, %v1276
    %v1287 = vpack.c.bf16 %v1279, %v1278
    %s1288 = scalar_lea.vmem [#allocation3], 320
    %v1289 = vld [vmem:[%s1288] sm:$0xf]
    %v1290 = vld [vmem:[%s1288 + $0x4] sm:$0xf]
    %v1291 = vld [vmem:[%s1288 + $0x8] sm:$0xf]
    %v1292 = vld [vmem:[%s1288 + $0xc] sm:$0xf]
    %v1293 = vld [vmem:[%s1288 + $0x10] sm:$0xf]
    %v1294 = vld [vmem:[%s1288 + $0x14] sm:$0xf]
    %v1295 = vld [vmem:[%s1288 + $0x18] sm:$0xf]
    %v1296 = vld [vmem:[%s1288 + $0x1c] sm:$0xf]
    %v1297 = vld [vmem:[%s1288 + $0x20] sm:$0xf]
    %v1298 = vld [vmem:[%s1288 + $0x24] sm:$0xf]
    %v1299 = vld [vmem:[%s1288 + $0x28] sm:$0xf]
    %v1300 = vld [vmem:[%s1288 + $0x2c] sm:$0xf]
    %v1301 = vld [vmem:[%s1288 + $0x30] sm:$0xf]
    %v1302 = vld [vmem:[%s1288 + $0x34] sm:$0xf]
    %v1303 = vld [vmem:[%s1288 + $0x38] sm:$0xf]
    %v1304 = vld [vmem:[%s1288 + $0x3c] sm:$0xf]
    %v1321 = vunpack.c.l.b16 %v1289
    %v1322 = vunpack.c.l.b16 %v1290
    %v1323 = vunpack.c.l.b16 %v1291
    %v1324 = vunpack.c.l.b16 %v1292
    %v1325 = vunpack.c.l.b16 %v1293
    %v1326 = vunpack.c.l.b16 %v1294
    %v1327 = vunpack.c.l.b16 %v1295
    %v1328 = vunpack.c.l.b16 %v1296
    %v1329 = vunpack.c.l.b16 %v1297
    %v1330 = vunpack.c.l.b16 %v1298
    %v1331 = vunpack.c.l.b16 %v1299
    %v1332 = vunpack.c.l.b16 %v1300
    %v1333 = vunpack.c.l.b16 %v1301
    %v1334 = vunpack.c.l.b16 %v1302
    %v1335 = vunpack.c.l.b16 %v1303
    %v1336 = vunpack.c.l.b16 %v1304
    %v1337 = vpack.c.b16 %v1322, %v1321
    %v1338 = vpack.c.b16 %v1324, %v1323
    %v1339 = vpack.c.b16 %v1326, %v1325
    %v1340 = vpack.c.b16 %v1328, %v1327
    %v1341 = vpack.c.b16 %v1330, %v1329
    %v1342 = vpack.c.b16 %v1332, %v1331
    %v1343 = vpack.c.b16 %v1334, %v1333
    %v1344 = vpack.c.b16 %v1336, %v1335
    %1353 = vmatprep.subr.bf16.mxu0 0
    %1354 = vmatpush1.bf16.msra.mxu0 %v1344
    %1355 = vmatprep.subr.bf16.mxu0 0
    %1356 = vmatpush1.bf16.msra.mxu0 %v1343
    %1357 = vmatprep.subr.bf16.mxu0 0
    %1358 = vmatpush1.bf16.msra.mxu0 %v1342
    %1359 = vmatprep.subr.bf16.mxu0 0
    %1360 = vmatpush1.bf16.msra.mxu0 %v1341
    %1361 = vmatprep.subr.bf16.mxu0 0
    %1362 = vmatpush1.bf16.msra.mxu0 %v1340
    %1363 = vmatprep.subr.bf16.mxu0 0
    %1364 = vmatpush1.bf16.msra.mxu0 %v1339
    %1365 = vmatprep.subr.bf16.mxu0 0
    %1366 = vmatpush1.bf16.msra.mxu0 %v1338
    %1367 = vmatprep.subr.bf16.mxu0 0
    %1368 = vmatpush1.bf16.msra.mxu0 %v1337
    %1369 = vmatprep.subr.bf16.mxu0 0
    %1370 = vmatpush2.bf16.msra.mxu0 0
    %1371 = vmatprep.subr.bf16.mxu0 0
    %1372 = vmatpush2.bf16.msra.mxu0 0
    %1373 = vmatprep.subr.bf16.mxu0 0
    %1374 = vmatpush2.bf16.msra.mxu0 0
    %1375 = vmatprep.subr.bf16.mxu0 0
    %1376 = vmatpush2.bf16.msra.mxu0 0
    %1377 = vmatprep.subr.bf16.mxu0 0
    %1378 = vmatpush2.bf16.msra.mxu0 0
    %1379 = vmatprep.subr.bf16.mxu0 0
    %1380 = vmatpush2.bf16.msra.mxu0 0
    %1381 = vmatprep.subr.bf16.mxu0 0
    %1382 = vmatpush2.bf16.msra.mxu0 0
    %1383 = vmatprep.subr.bf16.mxu0 0
    %1384 = vmatpush2.bf16.msra.mxu0 0
    %1385 = vmatprep.mubr.bf16.mxu0 0
    %1386 = vmatmul.mubr.bf16.gmra.mxu0 %v1280
    %v1387 = vpop.f32.mrf.mxu0
    %v1388 = vadd.f32 0.0, %v1387
    %v1389 = vpop.f32.mrf.mxu0
    %v1390 = vpop.f32.mrf.mxu0
    %v1391 = vadd.f32 0.0, %v1390
    %v1392 = vpop.f32.mrf.mxu0
    %1393 = vmatprep.mubr.bf16.mxu0 0
    %1394 = vmatmul.mubr.bf16.gmra.mxu0 %v1281
    %v1395 = vpop.f32.mrf.mxu0
    %v1396 = vadd.f32 0.0, %v1395
    %v1397 = vpop.f32.mrf.mxu0
    %v1398 = vpop.f32.mrf.mxu0
    %v1399 = vadd.f32 0.0, %v1398
    %v1400 = vpop.f32.mrf.mxu0
    %1401 = vmatprep.mubr.bf16.mxu0 0
    %1402 = vmatmul.mubr.bf16.gmra.mxu0 %v1282
    %v1403 = vpop.f32.mrf.mxu0
    %v1404 = vadd.f32 0.0, %v1403
    %v1405 = vpop.f32.mrf.mxu0
    %v1406 = vpop.f32.mrf.mxu0
    %v1407 = vadd.f32 0.0, %v1406
    %v1408 = vpop.f32.mrf.mxu0
    %1409 = vmatprep.mubr.bf16.mxu0 0
    %1410 = vmatmul.mubr.bf16.gmra.mxu0 %v1283
    %v1411 = vpop.f32.mrf.mxu0
    %v1412 = vadd.f32 0.0, %v1411
    %v1413 = vpop.f32.mrf.mxu0
    %v1414 = vpop.f32.mrf.mxu0
    %v1415 = vadd.f32 0.0, %v1414
    %v1416 = vpop.f32.mrf.mxu0
    %1417 = vmatprep.mubr.bf16.mxu0 0
    %1418 = vmatmul.mubr.bf16.gmra.mxu0 %v1284
    %v1419 = vpop.f32.mrf.mxu0
    %v1420 = vadd.f32 0.0, %v1419
    %v1421 = vpop.f32.mrf.mxu0
    %v1422 = vpop.f32.mrf.mxu0
    %v1423 = vadd.f32 0.0, %v1422
    %v1424 = vpop.f32.mrf.mxu0
    %1425 = vmatprep.mubr.bf16.mxu0 0
    %1426 = vmatmul.mubr.bf16.gmra.mxu0 %v1285
    %v1427 = vpop.f32.mrf.mxu0
    %v1428 = vadd.f32 0.0, %v1427
    %v1429 = vpop.f32.mrf.mxu0
    %v1430 = vpop.f32.mrf.mxu0
    %v1431 = vadd.f32 0.0, %v1430
    %v1432 = vpop.f32.mrf.mxu0
    %1433 = vmatprep.mubr.bf16.mxu0 0
    %1434 = vmatmul.mubr.bf16.gmra.mxu0 %v1286
    %v1435 = vpop.f32.mrf.mxu0
    %v1436 = vadd.f32 0.0, %v1435
    %v1437 = vpop.f32.mrf.mxu0
    %v1438 = vpop.f32.mrf.mxu0
    %v1439 = vadd.f32 0.0, %v1438
    %v1440 = vpop.f32.mrf.mxu0
    %1441 = vmatprep.mubr.bf16.mxu0 0
    %1442 = vmatmul.mubr.bf16.gmra.mxu0 %v1287
    %v1443 = vpop.f32.mrf.mxu0
    %v1444 = vadd.f32 0.0, %v1443
    %v1445 = vpop.f32.mrf.mxu0
    %v1446 = vpop.f32.mrf.mxu0
    %v1447 = vadd.f32 0.0, %v1446
    %v1448 = vpop.f32.mrf.mxu0
    %1449 = vdwg.mxu0
    %v1450 = vmax.f32 %v1388, 0.0
    %v1451 = vmax.f32 %v1391, 0.0
    %v1452 = vmax.f32 %v1396, 0.0
    %v1453 = vmax.f32 %v1399, 0.0
    %v1454 = vmax.f32 %v1404, 0.0
    %v1455 = vmax.f32 %v1407, 0.0
    %v1456 = vmax.f32 %v1412, 0.0
    %v1457 = vmax.f32 %v1415, 0.0
    %v1458 = vmax.f32 %v1420, 0.0
    %v1459 = vmax.f32 %v1423, 0.0
    %v1460 = vmax.f32 %v1428, 0.0
    %v1461 = vmax.f32 %v1431, 0.0
    %v1462 = vmax.f32 %v1436, 0.0
    %v1463 = vmax.f32 %v1439, 0.0
    %v1464 = vmax.f32 %v1444, 0.0
    %v1465 = vmax.f32 %v1447, 0.0
    %v1466 = vadd.f32 %v1264, %v1450
    %v1467 = vadd.f32 %v1265, %v1451
    %v1468 = vadd.f32 %v1266, %v1452
    %v1469 = vadd.f32 %v1267, %v1453
    %v1470 = vadd.f32 %v1268, %v1454
    %v1471 = vadd.f32 %v1269, %v1455
    %v1472 = vadd.f32 %v1270, %v1456
    %v1473 = vadd.f32 %v1271, %v1457
    %v1474 = vadd.f32 %v1272, %v1458
    %v1475 = vadd.f32 %v1273, %v1459
    %v1476 = vadd.f32 %v1274, %v1460
    %v1477 = vadd.f32 %v1275, %v1461
    %v1478 = vadd.f32 %v1276, %v1462
    %v1479 = vadd.f32 %v1277, %v1463
    %v1480 = vadd.f32 %v1278, %v1464
    %v1481 = vadd.f32 %v1279, %v1465
    %1482 = vst [vmem:[#allocation2] sm:$0xff] %v1466
    %1483 = vst [vmem:[#allocation2 + $0x8] sm:$0xff] %v1467
    %1484 = vst [vmem:[#allocation2 + $0x10] sm:$0xff] %v1468
    %1485 = vst [vmem:[#allocation2 + $0x18] sm:$0xff] %v1469
    %1486 = vst [vmem:[#allocation2 + $0x20] sm:$0xff] %v1470
    %1487 = vst [vmem:[#allocation2 + $0x28] sm:$0xff] %v1471
    %1488 = vst [vmem:[#allocation2 + $0x30] sm:$0xff] %v1472
    %1489 = vst [vmem:[#allocation2 + $0x38] sm:$0xff] %v1473
    %1490 = vst [vmem:[#allocation2 + $0x40] sm:$0xff] %v1474
    %1491 = vst [vmem:[#allocation2 + $0x48] sm:$0xff] %v1475
    %1492 = vst [vmem:[#allocation2 + $0x50] sm:$0xff] %v1476
    %1493 = vst [vmem:[#allocation2 + $0x58] sm:$0xff] %v1477
    %1494 = vst [vmem:[#allocation2 + $0x60] sm:$0xff] %v1478
    %1495 = vst [vmem:[#allocation2 + $0x68] sm:$0xff] %v1479
    %1496 = vst [vmem:[#allocation2 + $0x70] sm:$0xff] %v1480
    %1497 = vst [vmem:[#allocation2 + $0x78] sm:$0xff] %v1481
    %v1498 = vld [vmem:[#allocation2] sm:$0xff]
    %v1499 = vld [vmem:[#allocation2 + $0x8] sm:$0xff]
    %v1500 = vld [vmem:[#allocation2 + $0x10] sm:$0xff]
    %v1501 = vld [vmem:[#allocation2 + $0x18] sm:$0xff]
    %v1502 = vld [vmem:[#allocation2 + $0x20] sm:$0xff]
    %v1503 = vld [vmem:[#allocation2 + $0x28] sm:$0xff]
    %v1504 = vld [vmem:[#allocation2 + $0x30] sm:$0xff]
    %v1505 = vld [vmem:[#allocation2 + $0x38] sm:$0xff]
    %v1506 = vld [vmem:[#allocation2 + $0x40] sm:$0xff]
    %v1507 = vld [vmem:[#allocation2 + $0x48] sm:$0xff]
    %v1508 = vld [vmem:[#allocation2 + $0x50] sm:$0xff]
    %v1509 = vld [vmem:[#allocation2 + $0x58] sm:$0xff]
    %v1510 = vld [vmem:[#allocation2 + $0x60] sm:$0xff]
    %v1511 = vld [vmem:[#allocation2 + $0x68] sm:$0xff]
    %v1512 = vld [vmem:[#allocation2 + $0x70] sm:$0xff]
    %v1513 = vld [vmem:[#allocation2 + $0x78] sm:$0xff]
    %v1514 = vpack.c.bf16 %v1499, %v1498
    %v1515 = vpack.c.bf16 %v1501, %v1500
    %v1516 = vpack.c.bf16 %v1503, %v1502
    %v1517 = vpack.c.bf16 %v1505, %v1504
    %v1518 = vpack.c.bf16 %v1507, %v1506
    %v1519 = vpack.c.bf16 %v1509, %v1508
    %v1520 = vpack.c.bf16 %v1511, %v1510
    %v1521 = vpack.c.bf16 %v1513, %v1512
    %s1522 = scalar_lea.vmem [#allocation3], 384
    %v1523 = vld [vmem:[%s1522] sm:$0xf]
    %v1524 = vld [vmem:[%s1522 + $0x4] sm:$0xf]
    %v1525 = vld [vmem:[%s1522 + $0x8] sm:$0xf]
    %v1526 = vld [vmem:[%s1522 + $0xc] sm:$0xf]
    %v1527 = vld [vmem:[%s1522 + $0x10] sm:$0xf]
    %v1528 = vld [vmem:[%s1522 + $0x14] sm:$0xf]
    %v1529 = vld [vmem:[%s1522 + $0x18] sm:$0xf]
    %v1530 = vld [vmem:[%s1522 + $0x1c] sm:$0xf]
    %v1531 = vld [vmem:[%s1522 + $0x20] sm:$0xf]
    %v1532 = vld [vmem:[%s1522 + $0x24] sm:$0xf]
    %v1533 = vld [vmem:[%s1522 + $0x28] sm:$0xf]
    %v1534 = vld [vmem:[%s1522 + $0x2c] sm:$0xf]
    %v1535 = vld [vmem:[%s1522 + $0x30] sm:$0xf]
    %v1536 = vld [vmem:[%s1522 + $0x34] sm:$0xf]
    %v1537 = vld [vmem:[%s1522 + $0x38] sm:$0xf]
    %v1538 = vld [vmem:[%s1522 + $0x3c] sm:$0xf]
    %v1555 = vunpack.c.l.b16 %v1523
    %v1556 = vunpack.c.l.b16 %v1524
    %v1557 = vunpack.c.l.b16 %v1525
    %v1558 = vunpack.c.l.b16 %v1526
    %v1559 = vunpack.c.l.b16 %v1527
    %v1560 = vunpack.c.l.b16 %v1528
    %v1561 = vunpack.c.l.b16 %v1529
    %v1562 = vunpack.c.l.b16 %v1530
    %v1563 = vunpack.c.l.b16 %v1531
    %v1564 = vunpack.c.l.b16 %v1532
    %v1565 = vunpack.c.l.b16 %v1533
    %v1566 = vunpack.c.l.b16 %v1534
    %v1567 = vunpack.c.l.b16 %v1535
    %v1568 = vunpack.c.l.b16 %v1536
    %v1569 = vunpack.c.l.b16 %v1537
    %v1570 = vunpack.c.l.b16 %v1538
    %v1571 = vpack.c.b16 %v1556, %v1555
    %v1572 = vpack.c.b16 %v1558, %v1557
    %v1573 = vpack.c.b16 %v1560, %v1559
    %v1574 = vpack.c.b16 %v1562, %v1561
    %v1575 = vpack.c.b16 %v1564, %v1563
    %v1576 = vpack.c.b16 %v1566, %v1565
    %v1577 = vpack.c.b16 %v1568, %v1567
    %v1578 = vpack.c.b16 %v1570, %v1569
    %1587 = vmatprep.subr.bf16.mxu0 0
    %1588 = vmatpush1.bf16.msra.mxu0 %v1578
    %1589 = vmatprep.subr.bf16.mxu0 0
    %1590 = vmatpush1.bf16.msra.mxu0 %v1577
    %1591 = vmatprep.subr.bf16.mxu0 0
    %1592 = vmatpush1.bf16.msra.mxu0 %v1576
    %1593 = vmatprep.subr.bf16.mxu0 0
    %1594 = vmatpush1.bf16.msra.mxu0 %v1575
    %1595 = vmatprep.subr.bf16.mxu0 0
    %1596 = vmatpush1.bf16.msra.mxu0 %v1574
    %1597 = vmatprep.subr.bf16.mxu0 0
    %1598 = vmatpush1.bf16.msra.mxu0 %v1573
    %1599 = vmatprep.subr.bf16.mxu0 0
    %1600 = vmatpush1.bf16.msra.mxu0 %v1572
    %1601 = vmatprep.subr.bf16.mxu0 0
    %1602 = vmatpush1.bf16.msra.mxu0 %v1571
    %1603 = vmatprep.subr.bf16.mxu0 0
    %1604 = vmatpush2.bf16.msra.mxu0 0
    %1605 = vmatprep.subr.bf16.mxu0 0
    %1606 = vmatpush2.bf16.msra.mxu0 0
    %1607 = vmatprep.subr.bf16.mxu0 0
    %1608 = vmatpush2.bf16.msra.mxu0 0
    %1609 = vmatprep.subr.bf16.mxu0 0
    %1610 = vmatpush2.bf16.msra.mxu0 0
    %1611 = vmatprep.subr.bf16.mxu0 0
    %1612 = vmatpush2.bf16.msra.mxu0 0
    %1613 = vmatprep.subr.bf16.mxu0 0
    %1614 = vmatpush2.bf16.msra.mxu0 0
    %1615 = vmatprep.subr.bf16.mxu0 0
    %1616 = vmatpush2.bf16.msra.mxu0 0
    %1617 = vmatprep.subr.bf16.mxu0 0
    %1618 = vmatpush2.bf16.msra.mxu0 0
    %1619 = vmatprep.mubr.bf16.mxu0 0
    %1620 = vmatmul.mubr.bf16.gmra.mxu0 %v1514
    %v1621 = vpop.f32.mrf.mxu0
    %v1622 = vadd.f32 0.0, %v1621
    %v1623 = vpop.f32.mrf.mxu0
    %v1624 = vpop.f32.mrf.mxu0
    %v1625 = vadd.f32 0.0, %v1624
    %v1626 = vpop.f32.mrf.mxu0
    %1627 = vmatprep.mubr.bf16.mxu0 0
    %1628 = vmatmul.mubr.bf16.gmra.mxu0 %v1515
    %v1629 = vpop.f32.mrf.mxu0
    %v1630 = vadd.f32 0.0, %v1629
    %v1631 = vpop.f32.mrf.mxu0
    %v1632 = vpop.f32.mrf.mxu0
    %v1633 = vadd.f32 0.0, %v1632
    %v1634 = vpop.f32.mrf.mxu0
    %1635 = vmatprep.mubr.bf16.mxu0 0
    %1636 = vmatmul.mubr.bf16.gmra.mxu0 %v1516
    %v1637 = vpop.f32.mrf.mxu0
    %v1638 = vadd.f32 0.0, %v1637
    %v1639 = vpop.f32.mrf.mxu0
    %v1640 = vpop.f32.mrf.mxu0
    %v1641 = vadd.f32 0.0, %v1640
    %v1642 = vpop.f32.mrf.mxu0
    %1643 = vmatprep.mubr.bf16.mxu0 0
    %1644 = vmatmul.mubr.bf16.gmra.mxu0 %v1517
    %v1645 = vpop.f32.mrf.mxu0
    %v1646 = vadd.f32 0.0, %v1645
    %v1647 = vpop.f32.mrf.mxu0
    %v1648 = vpop.f32.mrf.mxu0
    %v1649 = vadd.f32 0.0, %v1648
    %v1650 = vpop.f32.mrf.mxu0
    %1651 = vmatprep.mubr.bf16.mxu0 0
    %1652 = vmatmul.mubr.bf16.gmra.mxu0 %v1518
    %v1653 = vpop.f32.mrf.mxu0
    %v1654 = vadd.f32 0.0, %v1653
    %v1655 = vpop.f32.mrf.mxu0
    %v1656 = vpop.f32.mrf.mxu0
    %v1657 = vadd.f32 0.0, %v1656
    %v1658 = vpop.f32.mrf.mxu0
    %1659 = vmatprep.mubr.bf16.mxu0 0
    %1660 = vmatmul.mubr.bf16.gmra.mxu0 %v1519
    %v1661 = vpop.f32.mrf.mxu0
    %v1662 = vadd.f32 0.0, %v1661
    %v1663 = vpop.f32.mrf.mxu0
    %v1664 = vpop.f32.mrf.mxu0
    %v1665 = vadd.f32 0.0, %v1664
    %v1666 = vpop.f32.mrf.mxu0
    %1667 = vmatprep.mubr.bf16.mxu0 0
    %1668 = vmatmul.mubr.bf16.gmra.mxu0 %v1520
    %v1669 = vpop.f32.mrf.mxu0
    %v1670 = vadd.f32 0.0, %v1669
    %v1671 = vpop.f32.mrf.mxu0
    %v1672 = vpop.f32.mrf.mxu0
    %v1673 = vadd.f32 0.0, %v1672
    %v1674 = vpop.f32.mrf.mxu0
    %1675 = vmatprep.mubr.bf16.mxu0 0
    %1676 = vmatmul.mubr.bf16.gmra.mxu0 %v1521
    %v1677 = vpop.f32.mrf.mxu0
    %v1678 = vadd.f32 0.0, %v1677
    %v1679 = vpop.f32.mrf.mxu0
    %v1680 = vpop.f32.mrf.mxu0
    %v1681 = vadd.f32 0.0, %v1680
    %v1682 = vpop.f32.mrf.mxu0
    %1683 = vdwg.mxu0
    %v1684 = vmax.f32 %v1622, 0.0
    %v1685 = vmax.f32 %v1625, 0.0
    %v1686 = vmax.f32 %v1630, 0.0
    %v1687 = vmax.f32 %v1633, 0.0
    %v1688 = vmax.f32 %v1638, 0.0
    %v1689 = vmax.f32 %v1641, 0.0
    %v1690 = vmax.f32 %v1646, 0.0
    %v1691 = vmax.f32 %v1649, 0.0
    %v1692 = vmax.f32 %v1654, 0.0
    %v1693 = vmax.f32 %v1657, 0.0
    %v1694 = vmax.f32 %v1662, 0.0
    %v1695 = vmax.f32 %v1665, 0.0
    %v1696 = vmax.f32 %v1670, 0.0
    %v1697 = vmax.f32 %v1673, 0.0
    %v1698 = vmax.f32 %v1678, 0.0
    %v1699 = vmax.f32 %v1681, 0.0
    %v1700 = vadd.f32 %v1498, %v1684
    %v1701 = vadd.f32 %v1499, %v1685
    %v1702 = vadd.f32 %v1500, %v1686
    %v1703 = vadd.f32 %v1501, %v1687
    %v1704 = vadd.f32 %v1502, %v1688
    %v1705 = vadd.f32 %v1503, %v1689
    %v1706 = vadd.f32 %v1504, %v1690
    %v1707 = vadd.f32 %v1505, %v1691
    %v1708 = vadd.f32 %v1506, %v1692
    %v1709 = vadd.f32 %v1507, %v1693
    %v1710 = vadd.f32 %v1508, %v1694
    %v1711 = vadd.f32 %v1509, %v1695
    %v1712 = vadd.f32 %v1510, %v1696
    %v1713 = vadd.f32 %v1511, %v1697
    %v1714 = vadd.f32 %v1512, %v1698
    %v1715 = vadd.f32 %v1513, %v1699
    %1716 = vst [vmem:[#allocation2] sm:$0xff] %v1700
    %1717 = vst [vmem:[#allocation2 + $0x8] sm:$0xff] %v1701
    %1718 = vst [vmem:[#allocation2 + $0x10] sm:$0xff] %v1702
    %1719 = vst [vmem:[#allocation2 + $0x18] sm:$0xff] %v1703
    %1720 = vst [vmem:[#allocation2 + $0x20] sm:$0xff] %v1704
    %1721 = vst [vmem:[#allocation2 + $0x28] sm:$0xff] %v1705
    %1722 = vst [vmem:[#allocation2 + $0x30] sm:$0xff] %v1706
    %1723 = vst [vmem:[#allocation2 + $0x38] sm:$0xff] %v1707
    %1724 = vst [vmem:[#allocation2 + $0x40] sm:$0xff] %v1708
    %1725 = vst [vmem:[#allocation2 + $0x48] sm:$0xff] %v1709
    %1726 = vst [vmem:[#allocation2 + $0x50] sm:$0xff] %v1710
    %1727 = vst [vmem:[#allocation2 + $0x58] sm:$0xff] %v1711
    %1728 = vst [vmem:[#allocation2 + $0x60] sm:$0xff] %v1712
    %1729 = vst [vmem:[#allocation2 + $0x68] sm:$0xff] %v1713
    %1730 = vst [vmem:[#allocation2 + $0x70] sm:$0xff] %v1714
    %1731 = vst [vmem:[#allocation2 + $0x78] sm:$0xff] %v1715
    %v1732 = vld [vmem:[#allocation2] sm:$0xff]
    %v1733 = vld [vmem:[#allocation2 + $0x8] sm:$0xff]
    %v1734 = vld [vmem:[#allocation2 + $0x10] sm:$0xff]
    %v1735 = vld [vmem:[#allocation2 + $0x18] sm:$0xff]
    %v1736 = vld [vmem:[#allocation2 + $0x20] sm:$0xff]
    %v1737 = vld [vmem:[#allocation2 + $0x28] sm:$0xff]
    %v1738 = vld [vmem:[#allocation2 + $0x30] sm:$0xff]
    %v1739 = vld [vmem:[#allocation2 + $0x38] sm:$0xff]
    %v1740 = vld [vmem:[#allocation2 + $0x40] sm:$0xff]
    %v1741 = vld [vmem:[#allocation2 + $0x48] sm:$0xff]
    %v1742 = vld [vmem:[#allocation2 + $0x50] sm:$0xff]
    %v1743 = vld [vmem:[#allocation2 + $0x58] sm:$0xff]
    %v1744 = vld [vmem:[#allocation2 + $0x60] sm:$0xff]
    %v1745 = vld [vmem:[#allocation2 + $0x68] sm:$0xff]
    %v1746 = vld [vmem:[#allocation2 + $0x70] sm:$0xff]
    %v1747 = vld [vmem:[#allocation2 + $0x78] sm:$0xff]
    %v1748 = vpack.c.bf16 %v1733, %v1732
    %v1749 = vpack.c.bf16 %v1735, %v1734
    %v1750 = vpack.c.bf16 %v1737, %v1736
    %v1751 = vpack.c.bf16 %v1739, %v1738
    %v1752 = vpack.c.bf16 %v1741, %v1740
    %v1753 = vpack.c.bf16 %v1743, %v1742
    %v1754 = vpack.c.bf16 %v1745, %v1744
    %v1755 = vpack.c.bf16 %v1747, %v1746
    %s1756 = scalar_lea.vmem [#allocation3], 448
    %v1757 = vld [vmem:[%s1756] sm:$0xf]
    %v1758 = vld [vmem:[%s1756 + $0x4] sm:$0xf]
    %v1759 = vld [vmem:[%s1756 + $0x8] sm:$0xf]
    %v1760 = vld [vmem:[%s1756 + $0xc] sm:$0xf]
    %v1761 = vld [vmem:[%s1756 + $0x10] sm:$0xf]
    %v1762 = vld [vmem:[%s1756 + $0x14] sm:$0xf]
    %v1763 = vld [vmem:[%s1756 + $0x18] sm:$0xf]
    %v1764 = vld [vmem:[%s1756 + $0x1c] sm:$0xf]
    %v1765 = vld [vmem:[%s1756 + $0x20] sm:$0xf]
    %v1766 = vld [vmem:[%s1756 + $0x24] sm:$0xf]
    %v1767 = vld [vmem:[%s1756 + $0x28] sm:$0xf]
    %v1768 = vld [vmem:[%s1756 + $0x2c] sm:$0xf]
    %v1769 = vld [vmem:[%s1756 + $0x30] sm:$0xf]
    %v1770 = vld [vmem:[%s1756 + $0x34] sm:$0xf]
    %v1771 = vld [vmem:[%s1756 + $0x38] sm:$0xf]
    %v1772 = vld [vmem:[%s1756 + $0x3c] sm:$0xf]
    %v1789 = vunpack.c.l.b16 %v1757
    %v1790 = vunpack.c.l.b16 %v1758
    %v1791 = vunpack.c.l.b16 %v1759
    %v1792 = vunpack.c.l.b16 %v1760
    %v1793 = vunpack.c.l.b16 %v1761
    %v1794 = vunpack.c.l.b16 %v1762
    %v1795 = vunpack.c.l.b16 %v1763
    %v1796 = vunpack.c.l.b16 %v1764
    %v1797 = vunpack.c.l.b16 %v1765
    %v1798 = vunpack.c.l.b16 %v1766
    %v1799 = vunpack.c.l.b16 %v1767
    %v1800 = vunpack.c.l.b16 %v1768
    %v1801 = vunpack.c.l.b16 %v1769
    %v1802 = vunpack.c.l.b16 %v1770
    %v1803 = vunpack.c.l.b16 %v1771
    %v1804 = vunpack.c.l.b16 %v1772
    %v1805 = vpack.c.b16 %v1790, %v1789
    %v1806 = vpack.c.b16 %v1792, %v1791
    %v1807 = vpack.c.b16 %v1794, %v1793
    %v1808 = vpack.c.b16 %v1796, %v1795
    %v1809 = vpack.c.b16 %v1798, %v1797
    %v1810 = vpack.c.b16 %v1800, %v1799
    %v1811 = vpack.c.b16 %v1802, %v1801
    %v1812 = vpack.c.b16 %v1804, %v1803
    %1821 = vmatprep.subr.bf16.mxu0 0
    %1822 = vmatpush1.bf16.msra.mxu0 %v1812
    %1823 = vmatprep.subr.bf16.mxu0 0
    %1824 = vmatpush1.bf16.msra.mxu0 %v1811
    %1825 = vmatprep.subr.bf16.mxu0 0
    %1826 = vmatpush1.bf16.msra.mxu0 %v1810
    %1827 = vmatprep.subr.bf16.mxu0 0
    %1828 = vmatpush1.bf16.msra.mxu0 %v1809
    %1829 = vmatprep.subr.bf16.mxu0 0
    %1830 = vmatpush1.bf16.msra.mxu0 %v1808
    %1831 = vmatprep.subr.bf16.mxu0 0
    %1832 = vmatpush1.bf16.msra.mxu0 %v1807
    %1833 = vmatprep.subr.bf16.mxu0 0
    %1834 = vmatpush1.bf16.msra.mxu0 %v1806
    %1835 = vmatprep.subr.bf16.mxu0 0
    %1836 = vmatpush1.bf16.msra.mxu0 %v1805
    %1837 = vmatprep.subr.bf16.mxu0 0
    %1838 = vmatpush2.bf16.msra.mxu0 0
    %1839 = vmatprep.subr.bf16.mxu0 0
    %1840 = vmatpush2.bf16.msra.mxu0 0
    %1841 = vmatprep.subr.bf16.mxu0 0
    %1842 = vmatpush2.bf16.msra.mxu0 0
    %1843 = vmatprep.subr.bf16.mxu0 0
    %1844 = vmatpush2.bf16.msra.mxu0 0
    %1845 = vmatprep.subr.bf16.mxu0 0
    %1846 = vmatpush2.bf16.msra.mxu0 0
    %1847 = vmatprep.subr.bf16.mxu0 0
    %1848 = vmatpush2.bf16.msra.mxu0 0
    %1849 = vmatprep.subr.bf16.mxu0 0
    %1850 = vmatpush2.bf16.msra.mxu0 0
    %1851 = vmatprep.subr.bf16.mxu0 0
    %1852 = vmatpush2.bf16.msra.mxu0 0
    %1853 = vmatprep.mubr.bf16.mxu0 0
    %1854 = vmatmul.mubr.bf16.gmra.mxu0 %v1748
    %v1855 = vpop.f32.mrf.mxu0
    %v1856 = vadd.f32 0.0, %v1855
    %v1857 = vpop.f32.mrf.mxu0
    %v1858 = vpop.f32.mrf.mxu0
    %v1859 = vadd.f32 0.0, %v1858
    %v1860 = vpop.f32.mrf.mxu0
    %1861 = vmatprep.mubr.bf16.mxu0 0
    %1862 = vmatmul.mubr.bf16.gmra.mxu0 %v1749
    %v1863 = vpop.f32.mrf.mxu0
    %v1864 = vadd.f32 0.0, %v1863
    %v1865 = vpop.f32.mrf.mxu0
    %v1866 = vpop.f32.mrf.mxu0
    %v1867 = vadd.f32 0.0, %v1866
    %v1868 = vpop.f32.mrf.mxu0
    %1869 = vmatprep.mubr.bf16.mxu0 0
    %1870 = vmatmul.mubr.bf16.gmra.mxu0 %v1750
    %v1871 = vpop.f32.mrf.mxu0
    %v1872 = vadd.f32 0.0, %v1871
    %v1873 = vpop.f32.mrf.mxu0
    %v1874 = vpop.f32.mrf.mxu0
    %v1875 = vadd.f32 0.0, %v1874
    %v1876 = vpop.f32.mrf.mxu0
    %1877 = vmatprep.mubr.bf16.mxu0 0
    %1878 = vmatmul.mubr.bf16.gmra.mxu0 %v1751
    %v1879 = vpop.f32.mrf.mxu0
    %v1880 = vadd.f32 0.0, %v1879
    %v1881 = vpop.f32.mrf.mxu0
    %v1882 = vpop.f32.mrf.mxu0
    %v1883 = vadd.f32 0.0, %v1882
    %v1884 = vpop.f32.mrf.mxu0
    %1885 = vmatprep.mubr.bf16.mxu0 0
    %1886 = vmatmul.mubr.bf16.gmra.mxu0 %v1752
    %v1887 = vpop.f32.mrf.mxu0
    %v1888 = vadd.f32 0.0, %v1887
    %v1889 = vpop.f32.mrf.mxu0
    %v1890 = vpop.f32.mrf.mxu0
    %v1891 = vadd.f32 0.0, %v1890
    %v1892 = vpop.f32.mrf.mxu0
    %1893 = vmatprep.mubr.bf16.mxu0 0
    %1894 = vmatmul.mubr.bf16.gmra.mxu0 %v1753
    %v1895 = vpop.f32.mrf.mxu0
    %v1896 = vadd.f32 0.0, %v1895
    %v1897 = vpop.f32.mrf.mxu0
    %v1898 = vpop.f32.mrf.mxu0
    %v1899 = vadd.f32 0.0, %v1898
    %v1900 = vpop.f32.mrf.mxu0
    %1901 = vmatprep.mubr.bf16.mxu0 0
    %1902 = vmatmul.mubr.bf16.gmra.mxu0 %v1754
    %v1903 = vpop.f32.mrf.mxu0
    %v1904 = vadd.f32 0.0, %v1903
    %v1905 = vpop.f32.mrf.mxu0
    %v1906 = vpop.f32.mrf.mxu0
    %v1907 = vadd.f32 0.0, %v1906
    %v1908 = vpop.f32.mrf.mxu0
    %1909 = vmatprep.mubr.bf16.mxu0 0
    %1910 = vmatmul.mubr.bf16.gmra.mxu0 %v1755
    %v1911 = vpop.f32.mrf.mxu0
    %v1912 = vadd.f32 0.0, %v1911
    %v1913 = vpop.f32.mrf.mxu0
    %v1914 = vpop.f32.mrf.mxu0
    %v1915 = vadd.f32 0.0, %v1914
    %v1916 = vpop.f32.mrf.mxu0
    %1917 = vdwg.mxu0
    %v1918 = vmax.f32 %v1856, 0.0
    %v1919 = vmax.f32 %v1859, 0.0
    %v1920 = vmax.f32 %v1864, 0.0
    %v1921 = vmax.f32 %v1867, 0.0
    %v1922 = vmax.f32 %v1872, 0.0
    %v1923 = vmax.f32 %v1875, 0.0
    %v1924 = vmax.f32 %v1880, 0.0
    %v1925 = vmax.f32 %v1883, 0.0
    %v1926 = vmax.f32 %v1888, 0.0
    %v1927 = vmax.f32 %v1891, 0.0
    %v1928 = vmax.f32 %v1896, 0.0
    %v1929 = vmax.f32 %v1899, 0.0
    %v1930 = vmax.f32 %v1904, 0.0
    %v1931 = vmax.f32 %v1907, 0.0
    %v1932 = vmax.f32 %v1912, 0.0
    %v1933 = vmax.f32 %v1915, 0.0
    %v1934 = vadd.f32 %v1732, %v1918
    %v1935 = vadd.f32 %v1733, %v1919
    %v1936 = vadd.f32 %v1734, %v1920
    %v1937 = vadd.f32 %v1735, %v1921
    %v1938 = vadd.f32 %v1736, %v1922
    %v1939 = vadd.f32 %v1737, %v1923
    %v1940 = vadd.f32 %v1738, %v1924
    %v1941 = vadd.f32 %v1739, %v1925
    %v1942 = vadd.f32 %v1740, %v1926
    %v1943 = vadd.f32 %v1741, %v1927
    %v1944 = vadd.f32 %v1742, %v1928
    %v1945 = vadd.f32 %v1743, %v1929
    %v1946 = vadd.f32 %v1744, %v1930
    %v1947 = vadd.f32 %v1745, %v1931
    %v1948 = vadd.f32 %v1746, %v1932
    %v1949 = vadd.f32 %v1747, %v1933
    %1950 = vst [vmem:[#allocation2] sm:$0xff] %v1934
    %1951 = vst [vmem:[#allocation2 + $0x8] sm:$0xff] %v1935
    %1952 = vst [vmem:[#allocation2 + $0x10] sm:$0xff] %v1936
    %1953 = vst [vmem:[#allocation2 + $0x18] sm:$0xff] %v1937
    %1954 = vst [vmem:[#allocation2 + $0x20] sm:$0xff] %v1938
    %1955 = vst [vmem:[#allocation2 + $0x28] sm:$0xff] %v1939
    %1956 = vst [vmem:[#allocation2 + $0x30] sm:$0xff] %v1940
    %1957 = vst [vmem:[#allocation2 + $0x38] sm:$0xff] %v1941
    %1958 = vst [vmem:[#allocation2 + $0x40] sm:$0xff] %v1942
    %1959 = vst [vmem:[#allocation2 + $0x48] sm:$0xff] %v1943
    %1960 = vst [vmem:[#allocation2 + $0x50] sm:$0xff] %v1944
    %1961 = vst [vmem:[#allocation2 + $0x58] sm:$0xff] %v1945
    %1962 = vst [vmem:[#allocation2 + $0x60] sm:$0xff] %v1946
    %1963 = vst [vmem:[#allocation2 + $0x68] sm:$0xff] %v1947
    %1964 = vst [vmem:[#allocation2 + $0x70] sm:$0xff] %v1948
    %1965 = vst [vmem:[#allocation2 + $0x78] sm:$0xff] %v1949
    %v1966 = vld [vmem:[#allocation2] sm:$0xff]
    %v1967 = vld [vmem:[#allocation2 + $0x8] sm:$0xff]
    %v1968 = vld [vmem:[#allocation2 + $0x10] sm:$0xff]
    %v1969 = vld [vmem:[#allocation2 + $0x18] sm:$0xff]
    %v1970 = vld [vmem:[#allocation2 + $0x20] sm:$0xff]
    %v1971 = vld [vmem:[#allocation2 + $0x28] sm:$0xff]
    %v1972 = vld [vmem:[#allocation2 + $0x30] sm:$0xff]
    %v1973 = vld [vmem:[#allocation2 + $0x38] sm:$0xff]
    %v1974 = vld [vmem:[#allocation2 + $0x40] sm:$0xff]
    %v1975 = vld [vmem:[#allocation2 + $0x48] sm:$0xff]
    %v1976 = vld [vmem:[#allocation2 + $0x50] sm:$0xff]
    %v1977 = vld [vmem:[#allocation2 + $0x58] sm:$0xff]
    %v1978 = vld [vmem:[#allocation2 + $0x60] sm:$0xff]
    %v1979 = vld [vmem:[#allocation2 + $0x68] sm:$0xff]
    %v1980 = vld [vmem:[#allocation2 + $0x70] sm:$0xff]
    %v1981 = vld [vmem:[#allocation2 + $0x78] sm:$0xff]
    %v1982 = vpack.c.bf16 %v1967, %v1966
    %v1983 = vpack.c.bf16 %v1969, %v1968
    %v1984 = vpack.c.bf16 %v1971, %v1970
    %v1985 = vpack.c.bf16 %v1973, %v1972
    %v1986 = vpack.c.bf16 %v1975, %v1974
    %v1987 = vpack.c.bf16 %v1977, %v1976
    %v1988 = vpack.c.bf16 %v1979, %v1978
    %v1989 = vpack.c.bf16 %v1981, %v1980
    %s1990 = scalar_lea.vmem [#allocation3], 512
    %v1991 = vld [vmem:[%s1990] sm:$0xf]
    %v1992 = vld [vmem:[%s1990 + $0x4] sm:$0xf]
    %v1993 = vld [vmem:[%s1990 + $0x8] sm:$0xf]
    %v1994 = vld [vmem:[%s1990 + $0xc] sm:$0xf]
    %v1995 = vld [vmem:[%s1990 + $0x10] sm:$0xf]
    %v1996 = vld [vmem:[%s1990 + $0x14] sm:$0xf]
    %v1997 = vld [vmem:[%s1990 + $0x18] sm:$0xf]
    %v1998 = vld [vmem:[%s1990 + $0x1c] sm:$0xf]
    %v1999 = vld [vmem:[%s1990 + $0x20] sm:$0xf]
    %v2000 = vld [vmem:[%s1990 + $0x24] sm:$0xf]
    %v2001 = vld [vmem:[%s1990 + $0x28] sm:$0xf]
    %v2002 = vld [vmem:[%s1990 + $0x2c] sm:$0xf]
    %v2003 = vld [vmem:[%s1990 + $0x30] sm:$0xf]
    %v2004 = vld [vmem:[%s1990 + $0x34] sm:$0xf]
    %v2005 = vld [vmem:[%s1990 + $0x38] sm:$0xf]
    %v2006 = vld [vmem:[%s1990 + $0x3c] sm:$0xf]
    %v2023 = vunpack.c.l.b16 %v1991
    %v2024 = vunpack.c.l.b16 %v1992
    %v2025 = vunpack.c.l.b16 %v1993
    %v2026 = vunpack.c.l.b16 %v1994
    %v2027 = vunpack.c.l.b16 %v1995
    %v2028 = vunpack.c.l.b16 %v1996
    %v2029 = vunpack.c.l.b16 %v1997
    %v2030 = vunpack.c.l.b16 %v1998
    %v2031 = vunpack.c.l.b16 %v1999
    %v2032 = vunpack.c.l.b16 %v2000
    %v2033 = vunpack.c.l.b16 %v2001
    %v2034 = vunpack.c.l.b16 %v2002
    %v2035 = vunpack.c.l.b16 %v2003
    %v2036 = vunpack.c.l.b16 %v2004
    %v2037 = vunpack.c.l.b16 %v2005
    %v2038 = vunpack.c.l.b16 %v2006
    %v2039 = vpack.c.b16 %v2024, %v2023
    %v2040 = vpack.c.b16 %v2026, %v2025
    %v2041 = vpack.c.b16 %v2028, %v2027
    %v2042 = vpack.c.b16 %v2030, %v2029
    %v2043 = vpack.c.b16 %v2032, %v2031
    %v2044 = vpack.c.b16 %v2034, %v2033
    %v2045 = vpack.c.b16 %v2036, %v2035
    %v2046 = vpack.c.b16 %v2038, %v2037
    %2055 = vmatprep.subr.bf16.mxu0 0
    %2056 = vmatpush1.bf16.msra.mxu0 %v2046
    %2057 = vmatprep.subr.bf16.mxu0 0
    %2058 = vmatpush1.bf16.msra.mxu0 %v2045
    %2059 = vmatprep.subr.bf16.mxu0 0
    %2060 = vmatpush1.bf16.msra.mxu0 %v2044
    %2061 = vmatprep.subr.bf16.mxu0 0
    %2062 = vmatpush1.bf16.msra.mxu0 %v2043
    %2063 = vmatprep.subr.bf16.mxu0 0
    %2064 = vmatpush1.bf16.msra.mxu0 %v2042
    %2065 = vmatprep.subr.bf16.mxu0 0
    %2066 = vmatpush1.bf16.msra.mxu0 %v2041
    %2067 = vmatprep.subr.bf16.mxu0 0
    %2068 = vmatpush1.bf16.msra.mxu0 %v2040
    %2069 = vmatprep.subr.bf16.mxu0 0
    %2070 = vmatpush1.bf16.msra.mxu0 %v2039
    %2071 = vmatprep.subr.bf16.mxu0 0
    %2072 = vmatpush2.bf16.msra.mxu0 0
    %2073 = vmatprep.subr.bf16.mxu0 0
    %2074 = vmatpush2.bf16.msra.mxu0 0
    %2075 = vmatprep.subr.bf16.mxu0 0
    %2076 = vmatpush2.bf16.msra.mxu0 0
    %2077 = vmatprep.subr.bf16.mxu0 0
    %2078 = vmatpush2.bf16.msra.mxu0 0
    %2079 = vmatprep.subr.bf16.mxu0 0
    %2080 = vmatpush2.bf16.msra.mxu0 0
    %2081 = vmatprep.subr.bf16.mxu0 0
    %2082 = vmatpush2.bf16.msra.mxu0 0
    %2083 = vmatprep.subr.bf16.mxu0 0
    %2084 = vmatpush2.bf16.msra.mxu0 0
    %2085 = vmatprep.subr.bf16.mxu0 0
    %2086 = vmatpush2.bf16.msra.mxu0 0
    %2087 = vmatprep.mubr.bf16.mxu0 0
    %2088 = vmatmul.mubr.bf16.gmra.mxu0 %v1982
    %v2089 = vpop.f32.mrf.mxu0
    %v2090 = vadd.f32 0.0, %v2089
    %v2091 = vpop.f32.mrf.mxu0
    %v2092 = vpop.f32.mrf.mxu0
    %v2093 = vadd.f32 0.0, %v2092
    %v2094 = vpop.f32.mrf.mxu0
    %2095 = vmatprep.mubr.bf16.mxu0 0
    %2096 = vmatmul.mubr.bf16.gmra.mxu0 %v1983
    %v2097 = vpop.f32.mrf.mxu0
    %v2098 = vadd.f32 0.0, %v2097
    %v2099 = vpop.f32.mrf.mxu0
    %v2100 = vpop.f32.mrf.mxu0
    %v2101 = vadd.f32 0.0, %v2100
    %v2102 = vpop.f32.mrf.mxu0
    %2103 = vmatprep.mubr.bf16.mxu0 0
    %2104 = vmatmul.mubr.bf16.gmra.mxu0 %v1984
    %v2105 = vpop.f32.mrf.mxu0
    %v2106 = vadd.f32 0.0, %v2105
    %v2107 = vpop.f32.mrf.mxu0
    %v2108 = vpop.f32.mrf.mxu0
    %v2109 = vadd.f32 0.0, %v2108
    %v2110 = vpop.f32.mrf.mxu0
    %2111 = vmatprep.mubr.bf16.mxu0 0
    %2112 = vmatmul.mubr.bf16.gmra.mxu0 %v1985
    %v2113 = vpop.f32.mrf.mxu0
    %v2114 = vadd.f32 0.0, %v2113
    %v2115 = vpop.f32.mrf.mxu0
    %v2116 = vpop.f32.mrf.mxu0
    %v2117 = vadd.f32 0.0, %v2116
    %v2118 = vpop.f32.mrf.mxu0
    %2119 = vmatprep.mubr.bf16.mxu0 0
    %2120 = vmatmul.mubr.bf16.gmra.mxu0 %v1986
    %v2121 = vpop.f32.mrf.mxu0
    %v2122 = vadd.f32 0.0, %v2121
    %v2123 = vpop.f32.mrf.mxu0
    %v2124 = vpop.f32.mrf.mxu0
    %v2125 = vadd.f32 0.0, %v2124
    %v2126 = vpop.f32.mrf.mxu0
    %2127 = vmatprep.mubr.bf16.mxu0 0
    %2128 = vmatmul.mubr.bf16.gmra.mxu0 %v1987
    %v2129 = vpop.f32.mrf.mxu0
    %v2130 = vadd.f32 0.0, %v2129
    %v2131 = vpop.f32.mrf.mxu0
    %v2132 = vpop.f32.mrf.mxu0
    %v2133 = vadd.f32 0.0, %v2132
    %v2134 = vpop.f32.mrf.mxu0
    %2135 = vmatprep.mubr.bf16.mxu0 0
    %2136 = vmatmul.mubr.bf16.gmra.mxu0 %v1988
    %v2137 = vpop.f32.mrf.mxu0
    %v2138 = vadd.f32 0.0, %v2137
    %v2139 = vpop.f32.mrf.mxu0
    %v2140 = vpop.f32.mrf.mxu0
    %v2141 = vadd.f32 0.0, %v2140
    %v2142 = vpop.f32.mrf.mxu0
    %2143 = vmatprep.mubr.bf16.mxu0 0
    %2144 = vmatmul.mubr.bf16.gmra.mxu0 %v1989
    %v2145 = vpop.f32.mrf.mxu0
    %v2146 = vadd.f32 0.0, %v2145
    %v2147 = vpop.f32.mrf.mxu0
    %v2148 = vpop.f32.mrf.mxu0
    %v2149 = vadd.f32 0.0, %v2148
    %v2150 = vpop.f32.mrf.mxu0
    %2151 = vdwg.mxu0
    %v2152 = vmax.f32 %v2090, 0.0
    %v2153 = vmax.f32 %v2093, 0.0
    %v2154 = vmax.f32 %v2098, 0.0
    %v2155 = vmax.f32 %v2101, 0.0
    %v2156 = vmax.f32 %v2106, 0.0
    %v2157 = vmax.f32 %v2109, 0.0
    %v2158 = vmax.f32 %v2114, 0.0
    %v2159 = vmax.f32 %v2117, 0.0
    %v2160 = vmax.f32 %v2122, 0.0
    %v2161 = vmax.f32 %v2125, 0.0
    %v2162 = vmax.f32 %v2130, 0.0
    %v2163 = vmax.f32 %v2133, 0.0
    %v2164 = vmax.f32 %v2138, 0.0
    %v2165 = vmax.f32 %v2141, 0.0
    %v2166 = vmax.f32 %v2146, 0.0
    %v2167 = vmax.f32 %v2149, 0.0
    %v2168 = vadd.f32 %v1966, %v2152
    %v2169 = vadd.f32 %v1967, %v2153
    %v2170 = vadd.f32 %v1968, %v2154
    %v2171 = vadd.f32 %v1969, %v2155
    %v2172 = vadd.f32 %v1970, %v2156
    %v2173 = vadd.f32 %v1971, %v2157
    %v2174 = vadd.f32 %v1972, %v2158
    %v2175 = vadd.f32 %v1973, %v2159
    %v2176 = vadd.f32 %v1974, %v2160
    %v2177 = vadd.f32 %v1975, %v2161
    %v2178 = vadd.f32 %v1976, %v2162
    %v2179 = vadd.f32 %v1977, %v2163
    %v2180 = vadd.f32 %v1978, %v2164
    %v2181 = vadd.f32 %v1979, %v2165
    %v2182 = vadd.f32 %v1980, %v2166
    %v2183 = vadd.f32 %v1981, %v2167
    %2184 = vst [vmem:[#allocation2] sm:$0xff] %v2168
    %2185 = vst [vmem:[#allocation2 + $0x8] sm:$0xff] %v2169
    %2186 = vst [vmem:[#allocation2 + $0x10] sm:$0xff] %v2170
    %2187 = vst [vmem:[#allocation2 + $0x18] sm:$0xff] %v2171
    %2188 = vst [vmem:[#allocation2 + $0x20] sm:$0xff] %v2172
    %2189 = vst [vmem:[#allocation2 + $0x28] sm:$0xff] %v2173
    %2190 = vst [vmem:[#allocation2 + $0x30] sm:$0xff] %v2174
    %2191 = vst [vmem:[#allocation2 + $0x38] sm:$0xff] %v2175
    %2192 = vst [vmem:[#allocation2 + $0x40] sm:$0xff] %v2176
    %2193 = vst [vmem:[#allocation2 + $0x48] sm:$0xff] %v2177
    %2194 = vst [vmem:[#allocation2 + $0x50] sm:$0xff] %v2178
    %2195 = vst [vmem:[#allocation2 + $0x58] sm:$0xff] %v2179
    %2196 = vst [vmem:[#allocation2 + $0x60] sm:$0xff] %v2180
    %2197 = vst [vmem:[#allocation2 + $0x68] sm:$0xff] %v2181
    %2198 = vst [vmem:[#allocation2 + $0x70] sm:$0xff] %v2182
    %2199 = vst [vmem:[#allocation2 + $0x78] sm:$0xff] %v2183
    %v2200 = vld [vmem:[#allocation2] sm:$0xff]
    %v2201 = vld [vmem:[#allocation2 + $0x8] sm:$0xff]
    %v2202 = vld [vmem:[#allocation2 + $0x10] sm:$0xff]
    %v2203 = vld [vmem:[#allocation2 + $0x18] sm:$0xff]
    %v2204 = vld [vmem:[#allocation2 + $0x20] sm:$0xff]
    %v2205 = vld [vmem:[#allocation2 + $0x28] sm:$0xff]
    %v2206 = vld [vmem:[#allocation2 + $0x30] sm:$0xff]
    %v2207 = vld [vmem:[#allocation2 + $0x38] sm:$0xff]
    %v2208 = vld [vmem:[#allocation2 + $0x40] sm:$0xff]
    %v2209 = vld [vmem:[#allocation2 + $0x48] sm:$0xff]
    %v2210 = vld [vmem:[#allocation2 + $0x50] sm:$0xff]
    %v2211 = vld [vmem:[#allocation2 + $0x58] sm:$0xff]
    %v2212 = vld [vmem:[#allocation2 + $0x60] sm:$0xff]
    %v2213 = vld [vmem:[#allocation2 + $0x68] sm:$0xff]
    %v2214 = vld [vmem:[#allocation2 + $0x70] sm:$0xff]
    %v2215 = vld [vmem:[#allocation2 + $0x78] sm:$0xff]
    %v2216 = vpack.c.bf16 %v2201, %v2200
    %v2217 = vpack.c.bf16 %v2203, %v2202
    %v2218 = vpack.c.bf16 %v2205, %v2204
    %v2219 = vpack.c.bf16 %v2207, %v2206
    %v2220 = vpack.c.bf16 %v2209, %v2208
    %v2221 = vpack.c.bf16 %v2211, %v2210
    %v2222 = vpack.c.bf16 %v2213, %v2212
    %v2223 = vpack.c.bf16 %v2215, %v2214
    %s2224 = scalar_lea.vmem [#allocation3], 576
    %v2225 = vld [vmem:[%s2224] sm:$0xf]
    %v2226 = vld [vmem:[%s2224 + $0x4] sm:$0xf]
    %v2227 = vld [vmem:[%s2224 + $0x8] sm:$0xf]
    %v2228 = vld [vmem:[%s2224 + $0xc] sm:$0xf]
    %v2229 = vld [vmem:[%s2224 + $0x10] sm:$0xf]
    %v2230 = vld [vmem:[%s2224 + $0x14] sm:$0xf]
    %v2231 = vld [vmem:[%s2224 + $0x18] sm:$0xf]
    %v2232 = vld [vmem:[%s2224 + $0x1c] sm:$0xf]
    %v2233 = vld [vmem:[%s2224 + $0x20] sm:$0xf]
    %v2234 = vld [vmem:[%s2224 + $0x24] sm:$0xf]
    %v2235 = vld [vmem:[%s2224 + $0x28] sm:$0xf]
    %v2236 = vld [vmem:[%s2224 + $0x2c] sm:$0xf]
    %v2237 = vld [vmem:[%s2224 + $0x30] sm:$0xf]
    %v2238 = vld [vmem:[%s2224 + $0x34] sm:$0xf]
    %v2239 = vld [vmem:[%s2224 + $0x38] sm:$0xf]
    %v2240 = vld [vmem:[%s2224 + $0x3c] sm:$0xf]
    %v2257 = vunpack.c.l.b16 %v2225
    %v2258 = vunpack.c.l.b16 %v2226
    %v2259 = vunpack.c.l.b16 %v2227
    %v2260 = vunpack.c.l.b16 %v2228
    %v2261 = vunpack.c.l.b16 %v2229
    %v2262 = vunpack.c.l.b16 %v2230
    %v2263 = vunpack.c.l.b16 %v2231
    %v2264 = vunpack.c.l.b16 %v2232
    %v2265 = vunpack.c.l.b16 %v2233
    %v2266 = vunpack.c.l.b16 %v2234
    %v2267 = vunpack.c.l.b16 %v2235
    %v2268 = vunpack.c.l.b16 %v2236
    %v2269 = vunpack.c.l.b16 %v2237
    %v2270 = vunpack.c.l.b16 %v2238
    %v2271 = vunpack.c.l.b16 %v2239
    %v2272 = vunpack.c.l.b16 %v2240
    %v2273 = vpack.c.b16 %v2258, %v2257
    %v2274 = vpack.c.b16 %v2260, %v2259
    %v2275 = vpack.c.b16 %v2262, %v2261
    %v2276 = vpack.c.b16 %v2264, %v2263
    %v2277 = vpack.c.b16 %v2266, %v2265
    %v2278 = vpack.c.b16 %v2268, %v2267
    %v2279 = vpack.c.b16 %v2270, %v2269
    %v2280 = vpack.c.b16 %v2272, %v2271
    %2289 = vmatprep.subr.bf16.mxu0 0
    %2290 = vmatpush1.bf16.msra.mxu0 %v2280
    %2291 = vmatprep.subr.bf16.mxu0 0
    %2292 = vmatpush1.bf16.msra.mxu0 %v2279
    %2293 = vmatprep.subr.bf16.mxu0 0
    %2294 = vmatpush1.bf16.msra.mxu0 %v2278
    %2295 = vmatprep.subr.bf16.mxu0 0
    %2296 = vmatpush1.bf16.msra.mxu0 %v2277
    %2297 = vmatprep.subr.bf16.mxu0 0
    %2298 = vmatpush1.bf16.msra.mxu0 %v2276
    %2299 = vmatprep.subr.bf16.mxu0 0
    %2300 = vmatpush1.bf16.msra.mxu0 %v2275
    %2301 = vmatprep.subr.bf16.mxu0 0
    %2302 = vmatpush1.bf16.msra.mxu0 %v2274
    %2303 = vmatprep.subr.bf16.mxu0 0
    %2304 = vmatpush1.bf16.msra.mxu0 %v2273
    %2305 = vmatprep.subr.bf16.mxu0 0
    %2306 = vmatpush2.bf16.msra.mxu0 0
    %2307 = vmatprep.subr.bf16.mxu0 0
    %2308 = vmatpush2.bf16.msra.mxu0 0
    %2309 = vmatprep.subr.bf16.mxu0 0
    %2310 = vmatpush2.bf16.msra.mxu0 0
    %2311 = vmatprep.subr.bf16.mxu0 0
    %2312 = vmatpush2.bf16.msra.mxu0 0
    %2313 = vmatprep.subr.bf16.mxu0 0
    %2314 = vmatpush2.bf16.msra.mxu0 0
    %2315 = vmatprep.subr.bf16.mxu0 0
    %2316 = vmatpush2.bf16.msra.mxu0 0
    %2317 = vmatprep.subr.bf16.mxu0 0
    %2318 = vmatpush2.bf16.msra.mxu0 0
    %2319 = vmatprep.subr.bf16.mxu0 0
    %2320 = vmatpush2.bf16.msra.mxu0 0
    %2321 = vmatprep.mubr.bf16.mxu0 0
    %2322 = vmatmul.mubr.bf16.gmra.mxu0 %v2216
    %v2323 = vpop.f32.mrf.mxu0
    %v2324 = vadd.f32 0.0, %v2323
    %v2325 = vpop.f32.mrf.mxu0
    %v2326 = vpop.f32.mrf.mxu0
    %v2327 = vadd.f32 0.0, %v2326
    %v2328 = vpop.f32.mrf.mxu0
    %2329 = vmatprep.mubr.bf16.mxu0 0
    %2330 = vmatmul.mubr.bf16.gmra.mxu0 %v2217
    %v2331 = vpop.f32.mrf.mxu0
    %v2332 = vadd.f32 0.0, %v2331
    %v2333 = vpop.f32.mrf.mxu0
    %v2334 = vpop.f32.mrf.mxu0
    %v2335 = vadd.f32 0.0, %v2334
    %v2336 = vpop.f32.mrf.mxu0
    %2337 = vmatprep.mubr.bf16.mxu0 0
    %2338 = vmatmul.mubr.bf16.gmra.mxu0 %v2218
    %v2339 = vpop.f32.mrf.mxu0
    %v2340 = vadd.f32 0.0, %v2339
    %v2341 = vpop.f32.mrf.mxu0
    %v2342 = vpop.f32.mrf.mxu0
    %v2343 = vadd.f32 0.0, %v2342
    %v2344 = vpop.f32.mrf.mxu0
    %2345 = vmatprep.mubr.bf16.mxu0 0
    %2346 = vmatmul.mubr.bf16.gmra.mxu0 %v2219
    %v2347 = vpop.f32.mrf.mxu0
    %v2348 = vadd.f32 0.0, %v2347
    %v2349 = vpop.f32.mrf.mxu0
    %v2350 = vpop.f32.mrf.mxu0
    %v2351 = vadd.f32 0.0, %v2350
    %v2352 = vpop.f32.mrf.mxu0
    %2353 = vmatprep.mubr.bf16.mxu0 0
    %2354 = vmatmul.mubr.bf16.gmra.mxu0 %v2220
    %v2355 = vpop.f32.mrf.mxu0
    %v2356 = vadd.f32 0.0, %v2355
    %v2357 = vpop.f32.mrf.mxu0
    %v2358 = vpop.f32.mrf.mxu0
    %v2359 = vadd.f32 0.0, %v2358
    %v2360 = vpop.f32.mrf.mxu0
    %2361 = vmatprep.mubr.bf16.mxu0 0
    %2362 = vmatmul.mubr.bf16.gmra.mxu0 %v2221
    %v2363 = vpop.f32.mrf.mxu0
    %v2364 = vadd.f32 0.0, %v2363
    %v2365 = vpop.f32.mrf.mxu0
    %v2366 = vpop.f32.mrf.mxu0
    %v2367 = vadd.f32 0.0, %v2366
    %v2368 = vpop.f32.mrf.mxu0
    %2369 = vmatprep.mubr.bf16.mxu0 0
    %2370 = vmatmul.mubr.bf16.gmra.mxu0 %v2222
    %v2371 = vpop.f32.mrf.mxu0
    %v2372 = vadd.f32 0.0, %v2371
    %v2373 = vpop.f32.mrf.mxu0
    %v2374 = vpop.f32.mrf.mxu0
    %v2375 = vadd.f32 0.0, %v2374
    %v2376 = vpop.f32.mrf.mxu0
    %2377 = vmatprep.mubr.bf16.mxu0 0
    %2378 = vmatmul.mubr.bf16.gmra.mxu0 %v2223
    %v2379 = vpop.f32.mrf.mxu0
    %v2380 = vadd.f32 0.0, %v2379
    %v2381 = vpop.f32.mrf.mxu0
    %v2382 = vpop.f32.mrf.mxu0
    %v2383 = vadd.f32 0.0, %v2382
    %v2384 = vpop.f32.mrf.mxu0
    %2385 = vdwg.mxu0
    %v2386 = vtanh.pop %v2324
    %v2387 = vtanh.pop %v2327
    %v2388 = vtanh.pop %v2332
    %v2389 = vtanh.pop %v2335
    %v2390 = vtanh.pop %v2340
    %v2391 = vtanh.pop %v2343
    %v2392 = vtanh.pop %v2348
    %v2393 = vtanh.pop %v2351
    %v2394 = vtanh.pop %v2356
    %v2395 = vtanh.pop %v2359
    %v2396 = vtanh.pop %v2364
    %v2397 = vtanh.pop %v2367
    %v2398 = vtanh.pop %v2372
    %v2399 = vtanh.pop %v2375
    %v2400 = vtanh.pop %v2380
    %v2401 = vtanh.pop %v2383
    %v2402 = vld [vmem:[%s2] sm:$0xff]
    %v2403 = vld [vmem:[%s2 + $0x8] sm:$0xff]
    %v2404 = vld [vmem:[%s2 + $0x10] sm:$0xff]
    %v2405 = vld [vmem:[%s2 + $0x18] sm:$0xff]
    %v2406 = vld [vmem:[%s2 + $0x20] sm:$0xff]
    %v2407 = vld [vmem:[%s2 + $0x28] sm:$0xff]
    %v2408 = vld [vmem:[%s2 + $0x30] sm:$0xff]
    %v2409 = vld [vmem:[%s2 + $0x38] sm:$0xff]
    %v2410 = vld [vmem:[%s2 + $0x40] sm:$0xff]
    %v2411 = vld [vmem:[%s2 + $0x48] sm:$0xff]
    %v2412 = vld [vmem:[%s2 + $0x50] sm:$0xff]
    %v2413 = vld [vmem:[%s2 + $0x58] sm:$0xff]
    %v2414 = vld [vmem:[%s2 + $0x60] sm:$0xff]
    %v2415 = vld [vmem:[%s2 + $0x68] sm:$0xff]
    %v2416 = vld [vmem:[%s2 + $0x70] sm:$0xff]
    %v2417 = vld [vmem:[%s2 + $0x78] sm:$0xff]
    %v2418 = vadd.f32 %v2402, %v2386
    %v2419 = vadd.f32 %v2403, %v2387
    %v2420 = vadd.f32 %v2404, %v2388
    %v2421 = vadd.f32 %v2405, %v2389
    %v2422 = vadd.f32 %v2406, %v2390
    %v2423 = vadd.f32 %v2407, %v2391
    %v2424 = vadd.f32 %v2408, %v2392
    %v2425 = vadd.f32 %v2409, %v2393
    %v2426 = vadd.f32 %v2410, %v2394
    %v2427 = vadd.f32 %v2411, %v2395
    %v2428 = vadd.f32 %v2412, %v2396
    %v2429 = vadd.f32 %v2413, %v2397
    %v2430 = vadd.f32 %v2414, %v2398
    %v2431 = vadd.f32 %v2415, %v2399
    %v2432 = vadd.f32 %v2416, %v2400
    %v2433 = vadd.f32 %v2417, %v2401
    %2434 = vst [vmem:[%s2] sm:$0xff] %v2418
    %2435 = vst [vmem:[%s2 + $0x8] sm:$0xff] %v2419
    %2436 = vst [vmem:[%s2 + $0x10] sm:$0xff] %v2420
    %2437 = vst [vmem:[%s2 + $0x18] sm:$0xff] %v2421
    %2438 = vst [vmem:[%s2 + $0x20] sm:$0xff] %v2422
    %2439 = vst [vmem:[%s2 + $0x28] sm:$0xff] %v2423
    %2440 = vst [vmem:[%s2 + $0x30] sm:$0xff] %v2424
    %2441 = vst [vmem:[%s2 + $0x38] sm:$0xff] %v2425
    %2442 = vst [vmem:[%s2 + $0x40] sm:$0xff] %v2426
    %2443 = vst [vmem:[%s2 + $0x48] sm:$0xff] %v2427
    %2444 = vst [vmem:[%s2 + $0x50] sm:$0xff] %v2428
    %2445 = vst [vmem:[%s2 + $0x58] sm:$0xff] %v2429
    %2446 = vst [vmem:[%s2 + $0x60] sm:$0xff] %v2430
    %2447 = vst [vmem:[%s2 + $0x68] sm:$0xff] %v2431
    %2448 = vst [vmem:[%s2 + $0x70] sm:$0xff] %v2432
    %2449 = vst [vmem:[%s2 + $0x78] sm:$0xff] %v2433
    %v2450 = vld [vmem:[#allocation2] sm:$0xff]
    %v2451 = vld [vmem:[#allocation2 + $0x8] sm:$0xff]
    %v2452 = vld [vmem:[#allocation2 + $0x10] sm:$0xff]
    %v2453 = vld [vmem:[#allocation2 + $0x18] sm:$0xff]
    %v2454 = vld [vmem:[#allocation2 + $0x20] sm:$0xff]
    %v2455 = vld [vmem:[#allocation2 + $0x28] sm:$0xff]
    %v2456 = vld [vmem:[#allocation2 + $0x30] sm:$0xff]
    %v2457 = vld [vmem:[#allocation2 + $0x38] sm:$0xff]
    %v2458 = vld [vmem:[#allocation2 + $0x40] sm:$0xff]
    %v2459 = vld [vmem:[#allocation2 + $0x48] sm:$0xff]
    %v2460 = vld [vmem:[#allocation2 + $0x50] sm:$0xff]
    %v2461 = vld [vmem:[#allocation2 + $0x58] sm:$0xff]
    %v2462 = vld [vmem:[#allocation2 + $0x60] sm:$0xff]
    %v2463 = vld [vmem:[#allocation2 + $0x68] sm:$0xff]
    %v2464 = vld [vmem:[#allocation2 + $0x70] sm:$0xff]
    %v2465 = vld [vmem:[#allocation2 + $0x78] sm:$0xff]
    %v2466 = vpack.c.bf16 %v2451, %v2450
    %v2467 = vpack.c.bf16 %v2453, %v2452
    %v2468 = vpack.c.bf16 %v2455, %v2454
    %v2469 = vpack.c.bf16 %v2457, %v2456
    %v2470 = vpack.c.bf16 %v2459, %v2458
    %v2471 = vpack.c.bf16 %v2461, %v2460
    %v2472 = vpack.c.bf16 %v2463, %v2462
    %v2473 = vpack.c.bf16 %v2465, %v2464
    %s2474 = scalar_lea.vmem [#allocation3], 640
    %v2475 = vld [vmem:[%s2474] sm:$0xf]
    %v2476 = vld [vmem:[%s2474 + $0x4] sm:$0xf]
    %v2477 = vld [vmem:[%s2474 + $0x8] sm:$0xf]
    %v2478 = vld [vmem:[%s2474 + $0xc] sm:$0xf]
    %v2479 = vld [vmem:[%s2474 + $0x10] sm:$0xf]
    %v2480 = vld [vmem:[%s2474 + $0x14] sm:$0xf]
    %v2481 = vld [vmem:[%s2474 + $0x18] sm:$0xf]
    %v2482 = vld [vmem:[%s2474 + $0x1c] sm:$0xf]
    %v2483 = vld [vmem:[%s2474 + $0x20] sm:$0xf]
    %v2484 = vld [vmem:[%s2474 + $0x24] sm:$0xf]
    %v2485 = vld [vmem:[%s2474 + $0x28] sm:$0xf]
    %v2486 = vld [vmem:[%s2474 + $0x2c] sm:$0xf]
    %v2487 = vld [vmem:[%s2474 + $0x30] sm:$0xf]
    %v2488 = vld [vmem:[%s2474 + $0x34] sm:$0xf]
    %v2489 = vld [vmem:[%s2474 + $0x38] sm:$0xf]
    %v2490 = vld [vmem:[%s2474 + $0x3c] sm:$0xf]
    %v2491 = vld [vmem:[%s2] sm:$0xff]
    %v2492 = vld [vmem:[%s2 + $0x8] sm:$0xff]
    %v2493 = vld [vmem:[%s2 + $0x10] sm:$0xff]
    %v2494 = vld [vmem:[%s2 + $0x18] sm:$0xff]
    %v2495 = vld [vmem:[%s2 + $0x20] sm:$0xff]
    %v2496 = vld [vmem:[%s2 + $0x28] sm:$0xff]
    %v2497 = vld [vmem:[%s2 + $0x30] sm:$0xff]
    %v2498 = vld [vmem:[%s2 + $0x38] sm:$0xff]
    %v2499 = vld [vmem:[%s2 + $0x40] sm:$0xff]
    %v2500 = vld [vmem:[%s2 + $0x48] sm:$0xff]
    %v2501 = vld [vmem:[%s2 + $0x50] sm:$0xff]
    %v2502 = vld [vmem:[%s2 + $0x58] sm:$0xff]
    %v2503 = vld [vmem:[%s2 + $0x60] sm:$0xff]
    %v2504 = vld [vmem:[%s2 + $0x68] sm:$0xff]
    %v2505 = vld [vmem:[%s2 + $0x70] sm:$0xff]
    %v2506 = vld [vmem:[%s2 + $0x78] sm:$0xff]
    %v2507 = vpack.c.bf16 %v2492, %v2491
    %v2508 = vpack.c.bf16 %v2494, %v2493
    %v2509 = vpack.c.bf16 %v2496, %v2495
    %v2510 = vpack.c.bf16 %v2498, %v2497
    %v2511 = vpack.c.bf16 %v2500, %v2499
    %v2512 = vpack.c.bf16 %v2502, %v2501
    %v2513 = vpack.c.bf16 %v2504, %v2503
    %v2514 = vpack.c.bf16 %v2506, %v2505
    %s2515 = scalar_lea.vmem [#allocation3], 704
    %v2516 = vld [vmem:[%s2515] sm:$0xf]
    %v2517 = vld [vmem:[%s2515 + $0x4] sm:$0xf]
    %v2518 = vld [vmem:[%s2515 + $0x8] sm:$0xf]
    %v2519 = vld [vmem:[%s2515 + $0xc] sm:$0xf]
    %v2520 = vld [vmem:[%s2515 + $0x10] sm:$0xf]
    %v2521 = vld [vmem:[%s2515 + $0x14] sm:$0xf]
    %v2522 = vld [vmem:[%s2515 + $0x18] sm:$0xf]
    %v2523 = vld [vmem:[%s2515 + $0x1c] sm:$0xf]
    %v2524 = vld [vmem:[%s2515 + $0x20] sm:$0xf]
    %v2525 = vld [vmem:[%s2515 + $0x24] sm:$0xf]
    %v2526 = vld [vmem:[%s2515 + $0x28] sm:$0xf]
    %v2527 = vld [vmem:[%s2515 + $0x2c] sm:$0xf]
    %v2528 = vld [vmem:[%s2515 + $0x30] sm:$0xf]
    %v2529 = vld [vmem:[%s2515 + $0x34] sm:$0xf]
    %v2530 = vld [vmem:[%s2515 + $0x38] sm:$0xf]
    %v2531 = vld [vmem:[%s2515 + $0x3c] sm:$0xf]
    %v2548 = vunpack.c.l.b16 %v2516
    %v2549 = vunpack.c.l.b16 %v2517
    %v2550 = vunpack.c.l.b16 %v2518
    %v2551 = vunpack.c.l.b16 %v2519
    %v2552 = vunpack.c.l.b16 %v2520
    %v2553 = vunpack.c.l.b16 %v2521
    %v2554 = vunpack.c.l.b16 %v2522
    %v2555 = vunpack.c.l.b16 %v2523
    %v2556 = vunpack.c.l.b16 %v2524
    %v2557 = vunpack.c.l.b16 %v2525
    %v2558 = vunpack.c.l.b16 %v2526
    %v2559 = vunpack.c.l.b16 %v2527
    %v2560 = vunpack.c.l.b16 %v2528
    %v2561 = vunpack.c.l.b16 %v2529
    %v2562 = vunpack.c.l.b16 %v2530
    %v2563 = vunpack.c.l.b16 %v2531
    %v2564 = vpack.c.b16 %v2549, %v2548
    %v2565 = vpack.c.b16 %v2551, %v2550
    %v2566 = vpack.c.b16 %v2553, %v2552
    %v2567 = vpack.c.b16 %v2555, %v2554
    %v2568 = vpack.c.b16 %v2557, %v2556
    %v2569 = vpack.c.b16 %v2559, %v2558
    %v2570 = vpack.c.b16 %v2561, %v2560
    %v2571 = vpack.c.b16 %v2563, %v2562
    %2580 = vmatprep.subr.bf16.mxu0 0
    %2581 = vmatpush1.bf16.msra.mxu0 %v2571
    %2582 = vmatprep.subr.bf16.mxu0 0
    %2583 = vmatpush1.bf16.msra.mxu0 %v2570
    %2584 = vmatprep.subr.bf16.mxu0 0
    %2585 = vmatpush1.bf16.msra.mxu0 %v2569
    %2586 = vmatprep.subr.bf16.mxu0 0
    %2587 = vmatpush1.bf16.msra.mxu0 %v2568
    %2588 = vmatprep.subr.bf16.mxu0 0
    %2589 = vmatpush1.bf16.msra.mxu0 %v2567
    %2590 = vmatprep.subr.bf16.mxu0 0
    %2591 = vmatpush1.bf16.msra.mxu0 %v2566
    %2592 = vmatprep.subr.bf16.mxu0 0
    %2593 = vmatpush1.bf16.msra.mxu0 %v2565
    %2594 = vmatprep.subr.bf16.mxu0 0
    %2595 = vmatpush1.bf16.msra.mxu0 %v2564
    %2596 = vmatprep.subr.bf16.mxu0 0
    %2597 = vmatpush2.bf16.msra.mxu0 0
    %2598 = vmatprep.subr.bf16.mxu0 0
    %2599 = vmatpush2.bf16.msra.mxu0 0
    %2600 = vmatprep.subr.bf16.mxu0 0
    %2601 = vmatpush2.bf16.msra.mxu0 0
    %2602 = vmatprep.subr.bf16.mxu0 0
    %2603 = vmatpush2.bf16.msra.mxu0 0
    %2604 = vmatprep.subr.bf16.mxu0 0
    %2605 = vmatpush2.bf16.msra.mxu0 0
    %2606 = vmatprep.subr.bf16.mxu0 0
    %2607 = vmatpush2.bf16.msra.mxu0 0
    %2608 = vmatprep.subr.bf16.mxu0 0
    %2609 = vmatpush2.bf16.msra.mxu0 0
    %2610 = vmatprep.subr.bf16.mxu0 0
    %2611 = vmatpush2.bf16.msra.mxu0 0
    %2612 = vmatprep.mubr.bf16.mxu0 0
    %2613 = vmatmul.mubr.bf16.gmra.mxu0 %v2507
    %v2614 = vpop.f32.mrf.mxu0
    %v2615 = vadd.f32 0.0, %v2614
    %v2616 = vpop.f32.mrf.mxu0
    %v2617 = vpop.f32.mrf.mxu0
    %v2618 = vadd.f32 0.0, %v2617
    %v2619 = vpop.f32.mrf.mxu0
    %2620 = vmatprep.mubr.bf16.mxu0 0
    %2621 = vmatmul.mubr.bf16.gmra.mxu0 %v2508
    %v2622 = vpop.f32.mrf.mxu0
    %v2623 = vadd.f32 0.0, %v2622
    %v2624 = vpop.f32.mrf.mxu0
    %v2625 = vpop.f32.mrf.mxu0
    %v2626 = vadd.f32 0.0, %v2625
    %v2627 = vpop.f32.mrf.mxu0
    %2628 = vmatprep.mubr.bf16.mxu0 0
    %2629 = vmatmul.mubr.bf16.gmra.mxu0 %v2509
    %v2630 = vpop.f32.mrf.mxu0
    %v2631 = vadd.f32 0.0, %v2630
    %v2632 = vpop.f32.mrf.mxu0
    %v2633 = vpop.f32.mrf.mxu0
    %v2634 = vadd.f32 0.0, %v2633
    %v2635 = vpop.f32.mrf.mxu0
    %2636 = vmatprep.mubr.bf16.mxu0 0
    %2637 = vmatmul.mubr.bf16.gmra.mxu0 %v2510
    %v2638 = vpop.f32.mrf.mxu0
    %v2639 = vadd.f32 0.0, %v2638
    %v2640 = vpop.f32.mrf.mxu0
    %v2641 = vpop.f32.mrf.mxu0
    %v2642 = vadd.f32 0.0, %v2641
    %v2643 = vpop.f32.mrf.mxu0
    %2644 = vmatprep.mubr.bf16.mxu0 0
    %2645 = vmatmul.mubr.bf16.gmra.mxu0 %v2511
    %v2646 = vpop.f32.mrf.mxu0
    %v2647 = vadd.f32 0.0, %v2646
    %v2648 = vpop.f32.mrf.mxu0
    %v2649 = vpop.f32.mrf.mxu0
    %v2650 = vadd.f32 0.0, %v2649
    %v2651 = vpop.f32.mrf.mxu0
    %2652 = vmatprep.mubr.bf16.mxu0 0
    %2653 = vmatmul.mubr.bf16.gmra.mxu0 %v2512
    %v2654 = vpop.f32.mrf.mxu0
    %v2655 = vadd.f32 0.0, %v2654
    %v2656 = vpop.f32.mrf.mxu0
    %v2657 = vpop.f32.mrf.mxu0
    %v2658 = vadd.f32 0.0, %v2657
    %v2659 = vpop.f32.mrf.mxu0
    %2660 = vmatprep.mubr.bf16.mxu0 0
    %2661 = vmatmul.mubr.bf16.gmra.mxu0 %v2513
    %v2662 = vpop.f32.mrf.mxu0
    %v2663 = vadd.f32 0.0, %v2662
    %v2664 = vpop.f32.mrf.mxu0
    %v2665 = vpop.f32.mrf.mxu0
    %v2666 = vadd.f32 0.0, %v2665
    %v2667 = vpop.f32.mrf.mxu0
    %2668 = vmatprep.mubr.bf16.mxu0 0
    %2669 = vmatmul.mubr.bf16.gmra.mxu0 %v2514
    %v2670 = vpop.f32.mrf.mxu0
    %v2671 = vadd.f32 0.0, %v2670
    %v2672 = vpop.f32.mrf.mxu0
    %v2673 = vpop.f32.mrf.mxu0
    %v2674 = vadd.f32 0.0, %v2673
    %v2675 = vpop.f32.mrf.mxu0
    %2676 = vdwg.mxu0
    %v2693 = vunpack.c.l.b16 %v2475
    %v2694 = vunpack.c.l.b16 %v2476
    %v2695 = vunpack.c.l.b16 %v2477
    %v2696 = vunpack.c.l.b16 %v2478
    %v2697 = vunpack.c.l.b16 %v2479
    %v2698 = vunpack.c.l.b16 %v2480
    %v2699 = vunpack.c.l.b16 %v2481
    %v2700 = vunpack.c.l.b16 %v2482
    %v2701 = vunpack.c.l.b16 %v2483
    %v2702 = vunpack.c.l.b16 %v2484
    %v2703 = vunpack.c.l.b16 %v2485
    %v2704 = vunpack.c.l.b16 %v2486
    %v2705 = vunpack.c.l.b16 %v2487
    %v2706 = vunpack.c.l.b16 %v2488
    %v2707 = vunpack.c.l.b16 %v2489
    %v2708 = vunpack.c.l.b16 %v2490
    %v2709 = vpack.c.b16 %v2694, %v2693
    %v2710 = vpack.c.b16 %v2696, %v2695
    %v2711 = vpack.c.b16 %v2698, %v2697
    %v2712 = vpack.c.b16 %v2700, %v2699
    %v2713 = vpack.c.b16 %v2702, %v2701
    %v2714 = vpack.c.b16 %v2704, %v2703
    %v2715 = vpack.c.b16 %v2706, %v2705
    %v2716 = vpack.c.b16 %v2708, %v2707
    %2725 = vmatprep.subr.bf16.mxu0 0
    %2726 = vmatpush1.bf16.msra.mxu0 %v2716
    %2727 = vmatprep.subr.bf16.mxu0 0
    %2728 = vmatpush1.bf16.msra.mxu0 %v2715
    %2729 = vmatprep.subr.bf16.mxu0 0
    %2730 = vmatpush1.bf16.msra.mxu0 %v2714
    %2731 = vmatprep.subr.bf16.mxu0 0
    %2732 = vmatpush1.bf16.msra.mxu0 %v2713
    %2733 = vmatprep.subr.bf16.mxu0 0
    %2734 = vmatpush1.bf16.msra.mxu0 %v2712
    %2735 = vmatprep.subr.bf16.mxu0 0
    %2736 = vmatpush1.bf16.msra.mxu0 %v2711
    %2737 = vmatprep.subr.bf16.mxu0 0
    %2738 = vmatpush1.bf16.msra.mxu0 %v2710
    %2739 = vmatprep.subr.bf16.mxu0 0
    %2740 = vmatpush1.bf16.msra.mxu0 %v2709
    %2741 = vmatprep.subr.bf16.mxu0 0
    %2742 = vmatpush2.bf16.msra.mxu0 0
    %2743 = vmatprep.subr.bf16.mxu0 0
    %2744 = vmatpush2.bf16.msra.mxu0 0
    %2745 = vmatprep.subr.bf16.mxu0 0
    %2746 = vmatpush2.bf16.msra.mxu0 0
    %2747 = vmatprep.subr.bf16.mxu0 0
    %2748 = vmatpush2.bf16.msra.mxu0 0
    %2749 = vmatprep.subr.bf16.mxu0 0
    %2750 = vmatpush2.bf16.msra.mxu0 0
    %2751 = vmatprep.subr.bf16.mxu0 0
    %2752 = vmatpush2.bf16.msra.mxu0 0
    %2753 = vmatprep.subr.bf16.mxu0 0
    %2754 = vmatpush2.bf16.msra.mxu0 0
    %2755 = vmatprep.subr.bf16.mxu0 0
    %2756 = vmatpush2.bf16.msra.mxu0 0
    %2757 = vmatprep.mubr.bf16.mxu0 0
    %2758 = vmatmul.mubr.bf16.gmra.mxu0 %v2466
    %v2759 = vpop.f32.mrf.mxu0
    %v2760 = vadd.f32 %v2615, %v2759
    %v2761 = vpop.f32.mrf.mxu0
    %v2762 = vpop.f32.mrf.mxu0
    %v2763 = vadd.f32 %v2618, %v2762
    %v2764 = vpop.f32.mrf.mxu0
    %2765 = vmatprep.mubr.bf16.mxu0 0
    %2766 = vmatmul.mubr.bf16.gmra.mxu0 %v2467
    %v2767 = vpop.f32.mrf.mxu0
    %v2768 = vadd.f32 %v2623, %v2767
    %v2769 = vpop.f32.mrf.mxu0
    %v2770 = vpop.f32.mrf.mxu0
    %v2771 = vadd.f32 %v2626, %v2770
    %v2772 = vpop.f32.mrf.mxu0
    %2773 = vmatprep.mubr.bf16.mxu0 0
    %2774 = vmatmul.mubr.bf16.gmra.mxu0 %v2468
    %v2775 = vpop.f32.mrf.mxu0
    %v2776 = vadd.f32 %v2631, %v2775
    %v2777 = vpop.f32.mrf.mxu0
    %v2778 = vpop.f32.mrf.mxu0
    %v2779 = vadd.f32 %v2634, %v2778
    %v2780 = vpop.f32.mrf.mxu0
    %2781 = vmatprep.mubr.bf16.mxu0 0
    %2782 = vmatmul.mubr.bf16.gmra.mxu0 %v2469
    %v2783 = vpop.f32.mrf.mxu0
    %v2784 = vadd.f32 %v2639, %v2783
    %v2785 = vpop.f32.mrf.mxu0
    %v2786 = vpop.f32.mrf.mxu0
    %v2787 = vadd.f32 %v2642, %v2786
    %v2788 = vpop.f32.mrf.mxu0
    %2789 = vmatprep.mubr.bf16.mxu0 0
    %2790 = vmatmul.mubr.bf16.gmra.mxu0 %v2470
    %v2791 = vpop.f32.mrf.mxu0
    %v2792 = vadd.f32 %v2647, %v2791
    %v2793 = vpop.f32.mrf.mxu0
    %v2794 = vpop.f32.mrf.mxu0
    %v2795 = vadd.f32 %v2650, %v2794
    %v2796 = vpop.f32.mrf.mxu0
    %2797 = vmatprep.mubr.bf16.mxu0 0
    %2798 = vmatmul.mubr.bf16.gmra.mxu0 %v2471
    %v2799 = vpop.f32.mrf.mxu0
    %v2800 = vadd.f32 %v2655, %v2799
    %v2801 = vpop.f32.mrf.mxu0
    %v2802 = vpop.f32.mrf.mxu0
    %v2803 = vadd.f32 %v2658, %v2802
    %v2804 = vpop.f32.mrf.mxu0
    %2805 = vmatprep.mubr.bf16.mxu0 0
    %2806 = vmatmul.mubr.bf16.gmra.mxu0 %v2472
    %v2807 = vpop.f32.mrf.mxu0
    %v2808 = vadd.f32 %v2663, %v2807
    %v2809 = vpop.f32.mrf.mxu0
    %v2810 = vpop.f32.mrf.mxu0
    %v2811 = vadd.f32 %v2666, %v2810
    %v2812 = vpop.f32.mrf.mxu0
    %2813 = vmatprep.mubr.bf16.mxu0 0
    %2814 = vmatmul.mubr.bf16.gmra.mxu0 %v2473
    %v2815 = vpop.f32.mrf.mxu0
    %v2816 = vadd.f32 %v2671, %v2815
    %v2817 = vpop.f32.mrf.mxu0
    %v2818 = vpop.f32.mrf.mxu0
    %v2819 = vadd.f32 %v2674, %v2818
    %v2820 = vpop.f32.mrf.mxu0
    %2821 = vdwg.mxu0
    %v2822 = vmax.f32 %v2760, 0.0
    %v2823 = vmax.f32 %v2763, 0.0
    %v2824 = vmax.f32 %v2768, 0.0
    %v2825 = vmax.f32 %v2771, 0.0
    %v2826 = vmax.f32 %v2776, 0.0
    %v2827 = vmax.f32 %v2779, 0.0
    %v2828 = vmax.f32 %v2784, 0.0
    %v2829 = vmax.f32 %v2787, 0.0
    %v2830 = vmax.f32 %v2792, 0.0
    %v2831 = vmax.f32 %v2795, 0.0
    %v2832 = vmax.f32 %v2800, 0.0
    %v2833 = vmax.f32 %v2803, 0.0
    %v2834 = vmax.f32 %v2808, 0.0
    %v2835 = vmax.f32 %v2811, 0.0
    %v2836 = vmax.f32 %v2816, 0.0
    %v2837 = vmax.f32 %v2819, 0.0
    %v2838 = vadd.f32 %v2491, %v2822
    %v2839 = vadd.f32 %v2492, %v2823
    %v2840 = vadd.f32 %v2493, %v2824
    %v2841 = vadd.f32 %v2494, %v2825
    %v2842 = vadd.f32 %v2495, %v2826
    %v2843 = vadd.f32 %v2496, %v2827
    %v2844 = vadd.f32 %v2497, %v2828
    %v2845 = vadd.f32 %v2498, %v2829
    %v2846 = vadd.f32 %v2499, %v2830
    %v2847 = vadd.f32 %v2500, %v2831
    %v2848 = vadd.f32 %v2501, %v2832
    %v2849 = vadd.f32 %v2502, %v2833
    %v2850 = vadd.f32 %v2503, %v2834
    %v2851 = vadd.f32 %v2504, %v2835
    %v2852 = vadd.f32 %v2505, %v2836
    %v2853 = vadd.f32 %v2506, %v2837
    %2854 = vst [vmem:[%s2] sm:$0xff] %v2838
    %2855 = vst [vmem:[%s2 + $0x8] sm:$0xff] %v2839
    %2856 = vst [vmem:[%s2 + $0x10] sm:$0xff] %v2840
    %2857 = vst [vmem:[%s2 + $0x18] sm:$0xff] %v2841
    %2858 = vst [vmem:[%s2 + $0x20] sm:$0xff] %v2842
    %2859 = vst [vmem:[%s2 + $0x28] sm:$0xff] %v2843
    %2860 = vst [vmem:[%s2 + $0x30] sm:$0xff] %v2844
    %2861 = vst [vmem:[%s2 + $0x38] sm:$0xff] %v2845
    %2862 = vst [vmem:[%s2 + $0x40] sm:$0xff] %v2846
    %2863 = vst [vmem:[%s2 + $0x48] sm:$0xff] %v2847
    %2864 = vst [vmem:[%s2 + $0x50] sm:$0xff] %v2848
    %2865 = vst [vmem:[%s2 + $0x58] sm:$0xff] %v2849
    %2866 = vst [vmem:[%s2 + $0x60] sm:$0xff] %v2850
    %2867 = vst [vmem:[%s2 + $0x68] sm:$0xff] %v2851
    %2868 = vst [vmem:[%s2 + $0x70] sm:$0xff] %v2852
    %2869 = vst [vmem:[%s2 + $0x78] sm:$0xff] %v2853
    %v2870 = vld [vmem:[%s2] sm:$0xff]
    %v2871 = vld [vmem:[%s2 + $0x8] sm:$0xff]
    %v2872 = vld [vmem:[%s2 + $0x10] sm:$0xff]
    %v2873 = vld [vmem:[%s2 + $0x18] sm:$0xff]
    %v2874 = vld [vmem:[%s2 + $0x20] sm:$0xff]
    %v2875 = vld [vmem:[%s2 + $0x28] sm:$0xff]
    %v2876 = vld [vmem:[%s2 + $0x30] sm:$0xff]
    %v2877 = vld [vmem:[%s2 + $0x38] sm:$0xff]
    %v2878 = vld [vmem:[%s2 + $0x40] sm:$0xff]
    %v2879 = vld [vmem:[%s2 + $0x48] sm:$0xff]
    %v2880 = vld [vmem:[%s2 + $0x50] sm:$0xff]
    %v2881 = vld [vmem:[%s2 + $0x58] sm:$0xff]
    %v2882 = vld [vmem:[%s2 + $0x60] sm:$0xff]
    %v2883 = vld [vmem:[%s2 + $0x68] sm:$0xff]
    %v2884 = vld [vmem:[%s2 + $0x70] sm:$0xff]
    %v2885 = vld [vmem:[%s2 + $0x78] sm:$0xff]
    %v2886 = vpack.c.bf16 %v2871, %v2870
    %v2887 = vpack.c.bf16 %v2873, %v2872
    %v2888 = vpack.c.bf16 %v2875, %v2874
    %v2889 = vpack.c.bf16 %v2877, %v2876
    %v2890 = vpack.c.bf16 %v2879, %v2878
    %v2891 = vpack.c.bf16 %v2881, %v2880
    %v2892 = vpack.c.bf16 %v2883, %v2882
    %v2893 = vpack.c.bf16 %v2885, %v2884
    %s2894 = scalar_lea.vmem [#allocation3], 768
    %v2895 = vld [vmem:[%s2894] sm:$0xf]
    %v2896 = vld [vmem:[%s2894 + $0x4] sm:$0xf]
    %v2897 = vld [vmem:[%s2894 + $0x8] sm:$0xf]
    %v2898 = vld [vmem:[%s2894 + $0xc] sm:$0xf]
    %v2899 = vld [vmem:[%s2894 + $0x10] sm:$0xf]
    %v2900 = vld [vmem:[%s2894 + $0x14] sm:$0xf]
    %v2901 = vld [vmem:[%s2894 + $0x18] sm:$0xf]
    %v2902 = vld [vmem:[%s2894 + $0x1c] sm:$0xf]
    %v2903 = vld [vmem:[%s2894 + $0x20] sm:$0xf]
    %v2904 = vld [vmem:[%s2894 + $0x24] sm:$0xf]
    %v2905 = vld [vmem:[%s2894 + $0x28] sm:$0xf]
    %v2906 = vld [vmem:[%s2894 + $0x2c] sm:$0xf]
    %v2907 = vld [vmem:[%s2894 + $0x30] sm:$0xf]
    %v2908 = vld [vmem:[%s2894 + $0x34] sm:$0xf]
    %v2909 = vld [vmem:[%s2894 + $0x38] sm:$0xf]
    %v2910 = vld [vmem:[%s2894 + $0x3c] sm:$0xf]
    %v2927 = vunpack.c.l.b16 %v2895
    %v2928 = vunpack.c.l.b16 %v2896
    %v2929 = vunpack.c.l.b16 %v2897
    %v2930 = vunpack.c.l.b16 %v2898
    %v2931 = vunpack.c.l.b16 %v2899
    %v2932 = vunpack.c.l.b16 %v2900
    %v2933 = vunpack.c.l.b16 %v2901
    %v2934 = vunpack.c.l.b16 %v2902
    %v2935 = vunpack.c.l.b16 %v2903
    %v2936 = vunpack.c.l.b16 %v2904
    %v2937 = vunpack.c.l.b16 %v2905
    %v2938 = vunpack.c.l.b16 %v2906
    %v2939 = vunpack.c.l.b16 %v2907
    %v2940 = vunpack.c.l.b16 %v2908
    %v2941 = vunpack.c.l.b16 %v2909
    %v2942 = vunpack.c.l.b16 %v2910
    %v2943 = vpack.c.b16 %v2928, %v2927
    %v2944 = vpack.c.b16 %v2930, %v2929
    %v2945 = vpack.c.b16 %v2932, %v2931
    %v2946 = vpack.c.b16 %v2934, %v2933
    %v2947 = vpack.c.b16 %v2936, %v2935
    %v2948 = vpack.c.b16 %v2938, %v2937
    %v2949 = vpack.c.b16 %v2940, %v2939
    %v2950 = vpack.c.b16 %v2942, %v2941
    %2959 = vmatprep.subr.bf16.mxu0 0
    %2960 = vmatpush1.bf16.msra.mxu0 %v2950
    %2961 = vmatprep.subr.bf16.mxu0 0
    %2962 = vmatpush1.bf16.msra.mxu0 %v2949
    %2963 = vmatprep.subr.bf16.mxu0 0
    %2964 = vmatpush1.bf16.msra.mxu0 %v2948
    %2965 = vmatprep.subr.bf16.mxu0 0
    %2966 = vmatpush1.bf16.msra.mxu0 %v2947
    %2967 = vmatprep.subr.bf16.mxu0 0
    %2968 = vmatpush1.bf16.msra.mxu0 %v2946
    %2969 = vmatprep.subr.bf16.mxu0 0
    %2970 = vmatpush1.bf16.msra.mxu0 %v2945
    %2971 = vmatprep.subr.bf16.mxu0 0
    %2972 = vmatpush1.bf16.msra.mxu0 %v2944
    %2973 = vmatprep.subr.bf16.mxu0 0
    %2974 = vmatpush1.bf16.msra.mxu0 %v2943
    %2975 = vmatprep.subr.bf16.mxu0 0
    %2976 = vmatpush2.bf16.msra.mxu0 0
    %2977 = vmatprep.subr.bf16.mxu0 0
    %2978 = vmatpush2.bf16.msra.mxu0 0
    %2979 = vmatprep.subr.bf16.mxu0 0
    %2980 = vmatpush2.bf16.msra.mxu0 0
    %2981 = vmatprep.subr.bf16.mxu0 0
    %2982 = vmatpush2.bf16.msra.mxu0 0
    %2983 = vmatprep.subr.bf16.mxu0 0
    %2984 = vmatpush2.bf16.msra.mxu0 0
    %2985 = vmatprep.subr.bf16.mxu0 0
    %2986 = vmatpush2.bf16.msra.mxu0 0
    %2987 = vmatprep.subr.bf16.mxu0 0
    %2988 = vmatpush2.bf16.msra.mxu0 0
    %2989 = vmatprep.subr.bf16.mxu0 0
    %2990 = vmatpush2.bf16.msra.mxu0 0
    %2991 = vmatprep.mubr.bf16.mxu0 0
    %2992 = vmatmul.mubr.bf16.gmra.mxu0 %v2886
    %v2993 = vpop.f32.mrf.mxu0
    %v2994 = vadd.f32 0.0, %v2993
    %v2995 = vpop.f32.mrf.mxu0
    %v2996 = vpop.f32.mrf.mxu0
    %v2997 = vadd.f32 0.0, %v2996
    %v2998 = vpop.f32.mrf.mxu0
    %2999 = vmatprep.mubr.bf16.mxu0 0
    %3000 = vmatmul.mubr.bf16.gmra.mxu0 %v2887
    %v3001 = vpop.f32.mrf.mxu0
    %v3002 = vadd.f32 0.0, %v3001
    %v3003 = vpop.f32.mrf.mxu0
    %v3004 = vpop.f32.mrf.mxu0
    %v3005 = vadd.f32 0.0, %v3004
    %v3006 = vpop.f32.mrf.mxu0
    %3007 = vmatprep.mubr.bf16.mxu0 0
    %3008 = vmatmul.mubr.bf16.gmra.mxu0 %v2888
    %v3009 = vpop.f32.mrf.mxu0
    %v3010 = vadd.f32 0.0, %v3009
    %v3011 = vpop.f32.mrf.mxu0
    %v3012 = vpop.f32.mrf.mxu0
    %v3013 = vadd.f32 0.0, %v3012
    %v3014 = vpop.f32.mrf.mxu0
    %3015 = vmatprep.mubr.bf16.mxu0 0
    %3016 = vmatmul.mubr.bf16.gmra.mxu0 %v2889
    %v3017 = vpop.f32.mrf.mxu0
    %v3018 = vadd.f32 0.0, %v3017
    %v3019 = vpop.f32.mrf.mxu0
    %v3020 = vpop.f32.mrf.mxu0
    %v3021 = vadd.f32 0.0, %v3020
    %v3022 = vpop.f32.mrf.mxu0
    %3023 = vmatprep.mubr.bf16.mxu0 0
    %3024 = vmatmul.mubr.bf16.gmra.mxu0 %v2890
    %v3025 = vpop.f32.mrf.mxu0
    %v3026 = vadd.f32 0.0, %v3025
    %v3027 = vpop.f32.mrf.mxu0
    %v3028 = vpop.f32.mrf.mxu0
    %v3029 = vadd.f32 0.0, %v3028
    %v3030 = vpop.f32.mrf.mxu0
    %3031 = vmatprep.mubr.bf16.mxu0 0
    %3032 = vmatmul.mubr.bf16.gmra.mxu0 %v2891
    %v3033 = vpop.f32.mrf.mxu0
    %v3034 = vadd.f32 0.0, %v3033
    %v3035 = vpop.f32.mrf.mxu0
    %v3036 = vpop.f32.mrf.mxu0
    %v3037 = vadd.f32 0.0, %v3036
    %v3038 = vpop.f32.mrf.mxu0
    %3039 = vmatprep.mubr.bf16.mxu0 0
    %3040 = vmatmul.mubr.bf16.gmra.mxu0 %v2892
    %v3041 = vpop.f32.mrf.mxu0
    %v3042 = vadd.f32 0.0, %v3041
    %v3043 = vpop.f32.mrf.mxu0
    %v3044 = vpop.f32.mrf.mxu0
    %v3045 = vadd.f32 0.0, %v3044
    %v3046 = vpop.f32.mrf.mxu0
    %3047 = vmatprep.mubr.bf16.mxu0 0
    %3048 = vmatmul.mubr.bf16.gmra.mxu0 %v2893
    %v3049 = vpop.f32.mrf.mxu0
    %v3050 = vadd.f32 0.0, %v3049
    %v3051 = vpop.f32.mrf.mxu0
    %v3052 = vpop.f32.mrf.mxu0
    %v3053 = vadd.f32 0.0, %v3052
    %v3054 = vpop.f32.mrf.mxu0
    %3055 = vdwg.mxu0
    %v3056 = vtanh.pop %v2994
    %v3057 = vtanh.pop %v2997
    %v3058 = vtanh.pop %v3002
    %v3059 = vtanh.pop %v3005
    %v3060 = vtanh.pop %v3010
    %v3061 = vtanh.pop %v3013
    %v3062 = vtanh.pop %v3018
    %v3063 = vtanh.pop %v3021
    %v3064 = vtanh.pop %v3026
    %v3065 = vtanh.pop %v3029
    %v3066 = vtanh.pop %v3034
    %v3067 = vtanh.pop %v3037
    %v3068 = vtanh.pop %v3042
    %v3069 = vtanh.pop %v3045
    %v3070 = vtanh.pop %v3050
    %v3071 = vtanh.pop %v3053
    %v3072 = vadd.f32 %v2870, %v3056
    %v3073 = vadd.f32 %v2871, %v3057
    %v3074 = vadd.f32 %v2872, %v3058
    %v3075 = vadd.f32 %v2873, %v3059
    %v3076 = vadd.f32 %v2874, %v3060
    %v3077 = vadd.f32 %v2875, %v3061
    %v3078 = vadd.f32 %v2876, %v3062
    %v3079 = vadd.f32 %v2877, %v3063
    %v3080 = vadd.f32 %v2878, %v3064
    %v3081 = vadd.f32 %v2879, %v3065
    %v3082 = vadd.f32 %v2880, %v3066
    %v3083 = vadd.f32 %v2881, %v3067
    %v3084 = vadd.f32 %v2882, %v3068
    %v3085 = vadd.f32 %v2883, %v3069
    %v3086 = vadd.f32 %v2884, %v3070
    %v3087 = vadd.f32 %v2885, %v3071
    %3088 = vst [vmem:[%s2] sm:$0xff] %v3072
    %3089 = vst [vmem:[%s2 + $0x8] sm:$0xff] %v3073
    %3090 = vst [vmem:[%s2 + $0x10] sm:$0xff] %v3074
    %3091 = vst [vmem:[%s2 + $0x18] sm:$0xff] %v3075
    %3092 = vst [vmem:[%s2 + $0x20] sm:$0xff] %v3076
    %3093 = vst [vmem:[%s2 + $0x28] sm:$0xff] %v3077
    %3094 = vst [vmem:[%s2 + $0x30] sm:$0xff] %v3078
    %3095 = vst [vmem:[%s2 + $0x38] sm:$0xff] %v3079
    %3096 = vst [vmem:[%s2 + $0x40] sm:$0xff] %v3080
    %3097 = vst [vmem:[%s2 + $0x48] sm:$0xff] %v3081
    %3098 = vst [vmem:[%s2 + $0x50] sm:$0xff] %v3082
    %3099 = vst [vmem:[%s2 + $0x58] sm:$0xff] %v3083
    %3100 = vst [vmem:[%s2 + $0x60] sm:$0xff] %v3084
    %3101 = vst [vmem:[%s2 + $0x68] sm:$0xff] %v3085
    %3102 = vst [vmem:[%s2 + $0x70] sm:$0xff] %v3086
    %3103 = vst [vmem:[%s2 + $0x78] sm:$0xff] %v3087
    %v3104 = vld [vmem:[#allocation2] sm:$0xff]
    %v3105 = vld [vmem:[#allocation2 + $0x8] sm:$0xff]
    %v3106 = vld [vmem:[#allocation2 + $0x10] sm:$0xff]
    %v3107 = vld [vmem:[#allocation2 + $0x18] sm:$0xff]
    %v3108 = vld [vmem:[#allocation2 + $0x20] sm:$0xff]
    %v3109 = vld [vmem:[#allocation2 + $0x28] sm:$0xff]
    %v3110 = vld [vmem:[#allocation2 + $0x30] sm:$0xff]
    %v3111 = vld [vmem:[#allocation2 + $0x38] sm:$0xff]
    %v3112 = vld [vmem:[#allocation2 + $0x40] sm:$0xff]
    %v3113 = vld [vmem:[#allocation2 + $0x48] sm:$0xff]
    %v3114 = vld [vmem:[#allocation2 + $0x50] sm:$0xff]
    %v3115 = vld [vmem:[#allocation2 + $0x58] sm:$0xff]
    %v3116 = vld [vmem:[#allocation2 + $0x60] sm:$0xff]
    %v3117 = vld [vmem:[#allocation2 + $0x68] sm:$0xff]
    %v3118 = vld [vmem:[#allocation2 + $0x70] sm:$0xff]
    %v3119 = vld [vmem:[#allocation2 + $0x78] sm:$0xff]
    %v3120 = vpack.c.bf16 %v3105, %v3104
    %v3121 = vpack.c.bf16 %v3107, %v3106
    %v3122 = vpack.c.bf16 %v3109, %v3108
    %v3123 = vpack.c.bf16 %v3111, %v3110
    %v3124 = vpack.c.bf16 %v3113, %v3112
    %v3125 = vpack.c.bf16 %v3115, %v3114
    %v3126 = vpack.c.bf16 %v3117, %v3116
    %v3127 = vpack.c.bf16 %v3119, %v3118
    %s3128 = scalar_lea.vmem [#allocation3], 832
    %v3129 = vld [vmem:[%s3128] sm:$0xf]
    %v3130 = vld [vmem:[%s3128 + $0x4] sm:$0xf]
    %v3131 = vld [vmem:[%s3128 + $0x8] sm:$0xf]
    %v3132 = vld [vmem:[%s3128 + $0xc] sm:$0xf]
    %v3133 = vld [vmem:[%s3128 + $0x10] sm:$0xf]
    %v3134 = vld [vmem:[%s3128 + $0x14] sm:$0xf]
    %v3135 = vld [vmem:[%s3128 + $0x18] sm:$0xf]
    %v3136 = vld [vmem:[%s3128 + $0x1c] sm:$0xf]
    %v3137 = vld [vmem:[%s3128 + $0x20] sm:$0xf]
    %v3138 = vld [vmem:[%s3128 + $0x24] sm:$0xf]
    %v3139 = vld [vmem:[%s3128 + $0x28] sm:$0xf]
    %v3140 = vld [vmem:[%s3128 + $0x2c] sm:$0xf]
    %v3141 = vld [vmem:[%s3128 + $0x30] sm:$0xf]
    %v3142 = vld [vmem:[%s3128 + $0x34] sm:$0xf]
    %v3143 = vld [vmem:[%s3128 + $0x38] sm:$0xf]
    %v3144 = vld [vmem:[%s3128 + $0x3c] sm:$0xf]
    %v3145 = vld [vmem:[%s2] sm:$0xff]
    %v3146 = vld [vmem:[%s2 + $0x8] sm:$0xff]
    %v3147 = vld [vmem:[%s2 + $0x10] sm:$0xff]
    %v3148 = vld [vmem:[%s2 + $0x18] sm:$0xff]
    %v3149 = vld [vmem:[%s2 + $0x20] sm:$0xff]
    %v3150 = vld [vmem:[%s2 + $0x28] sm:$0xff]
    %v3151 = vld [vmem:[%s2 + $0x30] sm:$0xff]
    %v3152 = vld [vmem:[%s2 + $0x38] sm:$0xff]
    %v3153 = vld [vmem:[%s2 + $0x40] sm:$0xff]
    %v3154 = vld [vmem:[%s2 + $0x48] sm:$0xff]
    %v3155 = vld [vmem:[%s2 + $0x50] sm:$0xff]
    %v3156 = vld [vmem:[%s2 + $0x58] sm:$0xff]
    %v3157 = vld [vmem:[%s2 + $0x60] sm:$0xff]
    %v3158 = vld [vmem:[%s2 + $0x68] sm:$0xff]
    %v3159 = vld [vmem:[%s2 + $0x70] sm:$0xff]
    %v3160 = vld [vmem:[%s2 + $0x78] sm:$0xff]
    %v3161 = vpack.c.bf16 %v3146, %v3145
    %v3162 = vpack.c.bf16 %v3148, %v3147
    %v3163 = vpack.c.bf16 %v3150, %v3149
    %v3164 = vpack.c.bf16 %v3152, %v3151
    %v3165 = vpack.c.bf16 %v3154, %v3153
    %v3166 = vpack.c.bf16 %v3156, %v3155
    %v3167 = vpack.c.bf16 %v3158, %v3157
    %v3168 = vpack.c.bf16 %v3160, %v3159
    %s3169 = scalar_lea.vmem [#allocation3], 896
    %v3170 = vld [vmem:[%s3169] sm:$0xf]
    %v3171 = vld [vmem:[%s3169 + $0x4] sm:$0xf]
    %v3172 = vld [vmem:[%s3169 + $0x8] sm:$0xf]
    %v3173 = vld [vmem:[%s3169 + $0xc] sm:$0xf]
    %v3174 = vld [vmem:[%s3169 + $0x10] sm:$0xf]
    %v3175 = vld [vmem:[%s3169 + $0x14] sm:$0xf]
    %v3176 = vld [vmem:[%s3169 + $0x18] sm:$0xf]
    %v3177 = vld [vmem:[%s3169 + $0x1c] sm:$0xf]
    %v3178 = vld [vmem:[%s3169 + $0x20] sm:$0xf]
    %v3179 = vld [vmem:[%s3169 + $0x24] sm:$0xf]
    %v3180 = vld [vmem:[%s3169 + $0x28] sm:$0xf]
    %v3181 = vld [vmem:[%s3169 + $0x2c] sm:$0xf]
    %v3182 = vld [vmem:[%s3169 + $0x30] sm:$0xf]
    %v3183 = vld [vmem:[%s3169 + $0x34] sm:$0xf]
    %v3184 = vld [vmem:[%s3169 + $0x38] sm:$0xf]
    %v3185 = vld [vmem:[%s3169 + $0x3c] sm:$0xf]
    %v3202 = vunpack.c.l.b16 %v3170
    %v3203 = vunpack.c.l.b16 %v3171
    %v3204 = vunpack.c.l.b16 %v3172
    %v3205 = vunpack.c.l.b16 %v3173
    %v3206 = vunpack.c.l.b16 %v3174
    %v3207 = vunpack.c.l.b16 %v3175
    %v3208 = vunpack.c.l.b16 %v3176
    %v3209 = vunpack.c.l.b16 %v3177
    %v3210 = vunpack.c.l.b16 %v3178
    %v3211 = vunpack.c.l.b16 %v3179
    %v3212 = vunpack.c.l.b16 %v3180
    %v3213 = vunpack.c.l.b16 %v3181
    %v3214 = vunpack.c.l.b16 %v3182
    %v3215 = vunpack.c.l.b16 %v3183
    %v3216 = vunpack.c.l.b16 %v3184
    %v3217 = vunpack.c.l.b16 %v3185
    %v3218 = vpack.c.b16 %v3203, %v3202
    %v3219 = vpack.c.b16 %v3205, %v3204
    %v3220 = vpack.c.b16 %v3207, %v3206
    %v3221 = vpack.c.b16 %v3209, %v3208
    %v3222 = vpack.c.b16 %v3211, %v3210
    %v3223 = vpack.c.b16 %v3213, %v3212
    %v3224 = vpack.c.b16 %v3215, %v3214
    %v3225 = vpack.c.b16 %v3217, %v3216
    %3234 = vmatprep.subr.bf16.mxu0 0
    %3235 = vmatpush1.bf16.msra.mxu0 %v3225
    %3236 = vmatprep.subr.bf16.mxu0 0
    %3237 = vmatpush1.bf16.msra.mxu0 %v3224
    %3238 = vmatprep.subr.bf16.mxu0 0
    %3239 = vmatpush1.bf16.msra.mxu0 %v3223
    %3240 = vmatprep.subr.bf16.mxu0 0
    %3241 = vmatpush1.bf16.msra.mxu0 %v3222
    %3242 = vmatprep.subr.bf16.mxu0 0
    %3243 = vmatpush1.bf16.msra.mxu0 %v3221
    %3244 = vmatprep.subr.bf16.mxu0 0
    %3245 = vmatpush1.bf16.msra.mxu0 %v3220
    %3246 = vmatprep.subr.bf16.mxu0 0
    %3247 = vmatpush1.bf16.msra.mxu0 %v3219
    %3248 = vmatprep.subr.bf16.mxu0 0
    %3249 = vmatpush1.bf16.msra.mxu0 %v3218
    %3250 = vmatprep.subr.bf16.mxu0 0
    %3251 = vmatpush2.bf16.msra.mxu0 0
    %3252 = vmatprep.subr.bf16.mxu0 0
    %3253 = vmatpush2.bf16.msra.mxu0 0
    %3254 = vmatprep.subr.bf16.mxu0 0
    %3255 = vmatpush2.bf16.msra.mxu0 0
    %3256 = vmatprep.subr.bf16.mxu0 0
    %3257 = vmatpush2.bf16.msra.mxu0 0
    %3258 = vmatprep.subr.bf16.mxu0 0
    %3259 = vmatpush2.bf16.msra.mxu0 0
    %3260 = vmatprep.subr.bf16.mxu0 0
    %3261 = vmatpush2.bf16.msra.mxu0 0
    %3262 = vmatprep.subr.bf16.mxu0 0
    %3263 = vmatpush2.bf16.msra.mxu0 0
    %3264 = vmatprep.subr.bf16.mxu0 0
    %3265 = vmatpush2.bf16.msra.mxu0 0
    %3266 = vmatprep.mubr.bf16.mxu0 0
    %3267 = vmatmul.mubr.bf16.gmra.mxu0 %v3161
    %v3268 = vpop.f32.mrf.mxu0
    %v3269 = vadd.f32 0.0, %v3268
    %v3270 = vpop.f32.mrf.mxu0
    %v3271 = vpop.f32.mrf.mxu0
    %v3272 = vadd.f32 0.0, %v3271
    %v3273 = vpop.f32.mrf.mxu0
    %3274 = vmatprep.mubr.bf16.mxu0 0
    %3275 = vmatmul.mubr.bf16.gmra.mxu0 %v3162
    %v3276 = vpop.f32.mrf.mxu0
    %v3277 = vadd.f32 0.0, %v3276
    %v3278 = vpop.f32.mrf.mxu0
    %v3279 = vpop.f32.mrf.mxu0
    %v3280 = vadd.f32 0.0, %v3279
    %v3281 = vpop.f32.mrf.mxu0
    %3282 = vmatprep.mubr.bf16.mxu0 0
    %3283 = vmatmul.mubr.bf16.gmra.mxu0 %v3163
    %v3284 = vpop.f32.mrf.mxu0
    %v3285 = vadd.f32 0.0, %v3284
    %v3286 = vpop.f32.mrf.mxu0
    %v3287 = vpop.f32.mrf.mxu0
    %v3288 = vadd.f32 0.0, %v3287
    %v3289 = vpop.f32.mrf.mxu0
    %3290 = vmatprep.mubr.bf16.mxu0 0
    %3291 = vmatmul.mubr.bf16.gmra.mxu0 %v3164
    %v3292 = vpop.f32.mrf.mxu0
    %v3293 = vadd.f32 0.0, %v3292
    %v3294 = vpop.f32.mrf.mxu0
    %v3295 = vpop.f32.mrf.mxu0
    %v3296 = vadd.f32 0.0, %v3295
    %v3297 = vpop.f32.mrf.mxu0
    %3298 = vmatprep.mubr.bf16.mxu0 0
    %3299 = vmatmul.mubr.bf16.gmra.mxu0 %v3165
    %v3300 = vpop.f32.mrf.mxu0
    %v3301 = vadd.f32 0.0, %v3300
    %v3302 = vpop.f32.mrf.mxu0
    %v3303 = vpop.f32.mrf.mxu0
    %v3304 = vadd.f32 0.0, %v3303
    %v3305 = vpop.f32.mrf.mxu0
    %3306 = vmatprep.mubr.bf16.mxu0 0
    %3307 = vmatmul.mubr.bf16.gmra.mxu0 %v3166
    %v3308 = vpop.f32.mrf.mxu0
    %v3309 = vadd.f32 0.0, %v3308
    %v3310 = vpop.f32.mrf.mxu0
    %v3311 = vpop.f32.mrf.mxu0
    %v3312 = vadd.f32 0.0, %v3311
    %v3313 = vpop.f32.mrf.mxu0
    %3314 = vmatprep.mubr.bf16.mxu0 0
    %3315 = vmatmul.mubr.bf16.gmra.mxu0 %v3167
    %v3316 = vpop.f32.mrf.mxu0
    %v3317 = vadd.f32 0.0, %v3316
    %v3318 = vpop.f32.mrf.mxu0
    %v3319 = vpop.f32.mrf.mxu0
    %v3320 = vadd.f32 0.0, %v3319
    %v3321 = vpop.f32.mrf.mxu0
    %3322 = vmatprep.mubr.bf16.mxu0 0
    %3323 = vmatmul.mubr.bf16.gmra.mxu0 %v3168
    %v3324 = vpop.f32.mrf.mxu0
    %v3325 = vadd.f32 0.0, %v3324
    %v3326 = vpop.f32.mrf.mxu0
    %v3327 = vpop.f32.mrf.mxu0
    %v3328 = vadd.f32 0.0, %v3327
    %v3329 = vpop.f32.mrf.mxu0
    %3330 = vdwg.mxu0
    %v3347 = vunpack.c.l.b16 %v3129
    %v3348 = vunpack.c.l.b16 %v3130
    %v3349 = vunpack.c.l.b16 %v3131
    %v3350 = vunpack.c.l.b16 %v3132
    %v3351 = vunpack.c.l.b16 %v3133
    %v3352 = vunpack.c.l.b16 %v3134
    %v3353 = vunpack.c.l.b16 %v3135
    %v3354 = vunpack.c.l.b16 %v3136
    %v3355 = vunpack.c.l.b16 %v3137
    %v3356 = vunpack.c.l.b16 %v3138
    %v3357 = vunpack.c.l.b16 %v3139
    %v3358 = vunpack.c.l.b16 %v3140
    %v3359 = vunpack.c.l.b16 %v3141
    %v3360 = vunpack.c.l.b16 %v3142
    %v3361 = vunpack.c.l.b16 %v3143
    %v3362 = vunpack.c.l.b16 %v3144
    %v3363 = vpack.c.b16 %v3348, %v3347
    %v3364 = vpack.c.b16 %v3350, %v3349
    %v3365 = vpack.c.b16 %v3352, %v3351
    %v3366 = vpack.c.b16 %v3354, %v3353
    %v3367 = vpack.c.b16 %v3356, %v3355
    %v3368 = vpack.c.b16 %v3358, %v3357
    %v3369 = vpack.c.b16 %v3360, %v3359
    %v3370 = vpack.c.b16 %v3362, %v3361
    %3379 = vmatprep.subr.bf16.mxu0 0
    %3380 = vmatpush1.bf16.msra.mxu0 %v3370
    %3381 = vmatprep.subr.bf16.mxu0 0
    %3382 = vmatpush1.bf16.msra.mxu0 %v3369
    %3383 = vmatprep.subr.bf16.mxu0 0
    %3384 = vmatpush1.bf16.msra.mxu0 %v3368
    %3385 = vmatprep.subr.bf16.mxu0 0
    %3386 = vmatpush1.bf16.msra.mxu0 %v3367
    %3387 = vmatprep.subr.bf16.mxu0 0
    %3388 = vmatpush1.bf16.msra.mxu0 %v3366
    %3389 = vmatprep.subr.bf16.mxu0 0
    %3390 = vmatpush1.bf16.msra.mxu0 %v3365
    %3391 = vmatprep.subr.bf16.mxu0 0
    %3392 = vmatpush1.bf16.msra.mxu0 %v3364
    %3393 = vmatprep.subr.bf16.mxu0 0
    %3394 = vmatpush1.bf16.msra.mxu0 %v3363
    %3395 = vmatprep.subr.bf16.mxu0 0
    %3396 = vmatpush2.bf16.msra.mxu0 0
    %3397 = vmatprep.subr.bf16.mxu0 0
    %3398 = vmatpush2.bf16.msra.mxu0 0
    %3399 = vmatprep.subr.bf16.mxu0 0
    %3400 = vmatpush2.bf16.msra.mxu0 0
    %3401 = vmatprep.subr.bf16.mxu0 0
    %3402 = vmatpush2.bf16.msra.mxu0 0
    %3403 = vmatprep.subr.bf16.mxu0 0
    %3404 = vmatpush2.bf16.msra.mxu0 0
    %3405 = vmatprep.subr.bf16.mxu0 0
    %3406 = vmatpush2.bf16.msra.mxu0 0
    %3407 = vmatprep.subr.bf16.mxu0 0
    %3408 = vmatpush2.bf16.msra.mxu0 0
    %3409 = vmatprep.subr.bf16.mxu0 0
    %3410 = vmatpush2.bf16.msra.mxu0 0
    %3411 = vmatprep.mubr.bf16.mxu0 0
    %3412 = vmatmul.mubr.bf16.gmra.mxu0 %v3120
    %v3413 = vpop.f32.mrf.mxu0
    %v3414 = vadd.f32 %v3269, %v3413
    %v3415 = vpop.f32.mrf.mxu0
    %v3416 = vpop.f32.mrf.mxu0
    %v3417 = vadd.f32 %v3272, %v3416
    %v3418 = vpop.f32.mrf.mxu0
    %3419 = vmatprep.mubr.bf16.mxu0 0
    %3420 = vmatmul.mubr.bf16.gmra.mxu0 %v3121
    %v3421 = vpop.f32.mrf.mxu0
    %v3422 = vadd.f32 %v3277, %v3421
    %v3423 = vpop.f32.mrf.mxu0
    %v3424 = vpop.f32.mrf.mxu0
    %v3425 = vadd.f32 %v3280, %v3424
    %v3426 = vpop.f32.mrf.mxu0
    %3427 = vmatprep.mubr.bf16.mxu0 0
    %3428 = vmatmul.mubr.bf16.gmra.mxu0 %v3122
    %v3429 = vpop.f32.mrf.mxu0
    %v3430 = vadd.f32 %v3285, %v3429
    %v3431 = vpop.f32.mrf.mxu0
    %v3432 = vpop.f32.mrf.mxu0
    %v3433 = vadd.f32 %v3288, %v3432
    %v3434 = vpop.f32.mrf.mxu0
    %3435 = vmatprep.mubr.bf16.mxu0 0
    %3436 = vmatmul.mubr.bf16.gmra.mxu0 %v3123
    %v3437 = vpop.f32.mrf.mxu0
    %v3438 = vadd.f32 %v3293, %v3437
    %v3439 = vpop.f32.mrf.mxu0
    %v3440 = vpop.f32.mrf.mxu0
    %v3441 = vadd.f32 %v3296, %v3440
    %v3442 = vpop.f32.mrf.mxu0
    %3443 = vmatprep.mubr.bf16.mxu0 0
    %3444 = vmatmul.mubr.bf16.gmra.mxu0 %v3124
    %v3445 = vpop.f32.mrf.mxu0
    %v3446 = vadd.f32 %v3301, %v3445
    %v3447 = vpop.f32.mrf.mxu0
    %v3448 = vpop.f32.mrf.mxu0
    %v3449 = vadd.f32 %v3304, %v3448
    %v3450 = vpop.f32.mrf.mxu0
    %3451 = vmatprep.mubr.bf16.mxu0 0
    %3452 = vmatmul.mubr.bf16.gmra.mxu0 %v3125
    %v3453 = vpop.f32.mrf.mxu0
    %v3454 = vadd.f32 %v3309, %v3453
    %v3455 = vpop.f32.mrf.mxu0
    %v3456 = vpop.f32.mrf.mxu0
    %v3457 = vadd.f32 %v3312, %v3456
    %v3458 = vpop.f32.mrf.mxu0
    %3459 = vmatprep.mubr.bf16.mxu0 0
    %3460 = vmatmul.mubr.bf16.gmra.mxu0 %v3126
    %v3461 = vpop.f32.mrf.mxu0
    %v3462 = vadd.f32 %v3317, %v3461
    %v3463 = vpop.f32.mrf.mxu0
    %v3464 = vpop.f32.mrf.mxu0
    %v3465 = vadd.f32 %v3320, %v3464
    %v3466 = vpop.f32.mrf.mxu0
    %3467 = vmatprep.mubr.bf16.mxu0 0
    %3468 = vmatmul.mubr.bf16.gmra.mxu0 %v3127
    %v3469 = vpop.f32.mrf.mxu0
    %v3470 = vadd.f32 %v3325, %v3469
    %v3471 = vpop.f32.mrf.mxu0
    %v3472 = vpop.f32.mrf.mxu0
    %v3473 = vadd.f32 %v3328, %v3472
    %v3474 = vpop.f32.mrf.mxu0
    %3475 = vdwg.mxu0
    %v3476 = vmax.f32 %v3414, 0.0
    %v3477 = vmax.f32 %v3417, 0.0
    %v3478 = vmax.f32 %v3422, 0.0
    %v3479 = vmax.f32 %v3425, 0.0
    %v3480 = vmax.f32 %v3430, 0.0
    %v3481 = vmax.f32 %v3433, 0.0
    %v3482 = vmax.f32 %v3438, 0.0
    %v3483 = vmax.f32 %v3441, 0.0
    %v3484 = vmax.f32 %v3446, 0.0
    %v3485 = vmax.f32 %v3449, 0.0
    %v3486 = vmax.f32 %v3454, 0.0
    %v3487 = vmax.f32 %v3457, 0.0
    %v3488 = vmax.f32 %v3462, 0.0
    %v3489 = vmax.f32 %v3465, 0.0
    %v3490 = vmax.f32 %v3470, 0.0
    %v3491 = vmax.f32 %v3473, 0.0
    %v3492 = vadd.f32 %v3145, %v3476
    %v3493 = vadd.f32 %v3146, %v3477
    %v3494 = vadd.f32 %v3147, %v3478
    %v3495 = vadd.f32 %v3148, %v3479
    %v3496 = vadd.f32 %v3149, %v3480
    %v3497 = vadd.f32 %v3150, %v3481
    %v3498 = vadd.f32 %v3151, %v3482
    %v3499 = vadd.f32 %v3152, %v3483
    %v3500 = vadd.f32 %v3153, %v3484
    %v3501 = vadd.f32 %v3154, %v3485
    %v3502 = vadd.f32 %v3155, %v3486
    %v3503 = vadd.f32 %v3156, %v3487
    %v3504 = vadd.f32 %v3157, %v3488
    %v3505 = vadd.f32 %v3158, %v3489
    %v3506 = vadd.f32 %v3159, %v3490
    %v3507 = vadd.f32 %v3160, %v3491
    %3508 = vst [vmem:[%s2] sm:$0xff] %v3492
    %3509 = vst [vmem:[%s2 + $0x8] sm:$0xff] %v3493
    %3510 = vst [vmem:[%s2 + $0x10] sm:$0xff] %v3494
    %3511 = vst [vmem:[%s2 + $0x18] sm:$0xff] %v3495
    %3512 = vst [vmem:[%s2 + $0x20] sm:$0xff] %v3496
    %3513 = vst [vmem:[%s2 + $0x28] sm:$0xff] %v3497
    %3514 = vst [vmem:[%s2 + $0x30] sm:$0xff] %v3498
    %3515 = vst [vmem:[%s2 + $0x38] sm:$0xff] %v3499
    %3516 = vst [vmem:[%s2 + $0x40] sm:$0xff] %v3500
    %3517 = vst [vmem:[%s2 + $0x48] sm:$0xff] %v3501
    %3518 = vst [vmem:[%s2 + $0x50] sm:$0xff] %v3502
    %3519 = vst [vmem:[%s2 + $0x58] sm:$0xff] %v3503
    %3520 = vst [vmem:[%s2 + $0x60] sm:$0xff] %v3504
    %3521 = vst [vmem:[%s2 + $0x68] sm:$0xff] %v3505
    %3522 = vst [vmem:[%s2 + $0x70] sm:$0xff] %v3506
    %3523 = vst [vmem:[%s2 + $0x78] sm:$0xff] %v3507
    %v3524 = vld [vmem:[#allocation2] sm:$0xff]
    %v3525 = vld [vmem:[#allocation2 + $0x8] sm:$0xff]
    %v3526 = vld [vmem:[#allocation2 + $0x10] sm:$0xff]
    %v3527 = vld [vmem:[#allocation2 + $0x18] sm:$0xff]
    %v3528 = vld [vmem:[#allocation2 + $0x20] sm:$0xff]
    %v3529 = vld [vmem:[#allocation2 + $0x28] sm:$0xff]
    %v3530 = vld [vmem:[#allocation2 + $0x30] sm:$0xff]
    %v3531 = vld [vmem:[#allocation2 + $0x38] sm:$0xff]
    %v3532 = vld [vmem:[#allocation2 + $0x40] sm:$0xff]
    %v3533 = vld [vmem:[#allocation2 + $0x48] sm:$0xff]
    %v3534 = vld [vmem:[#allocation2 + $0x50] sm:$0xff]
    %v3535 = vld [vmem:[#allocation2 + $0x58] sm:$0xff]
    %v3536 = vld [vmem:[#allocation2 + $0x60] sm:$0xff]
    %v3537 = vld [vmem:[#allocation2 + $0x68] sm:$0xff]
    %v3538 = vld [vmem:[#allocation2 + $0x70] sm:$0xff]
    %v3539 = vld [vmem:[#allocation2 + $0x78] sm:$0xff]
    %v3540 = vpack.c.bf16 %v3525, %v3524
    %v3541 = vpack.c.bf16 %v3527, %v3526
    %v3542 = vpack.c.bf16 %v3529, %v3528
    %v3543 = vpack.c.bf16 %v3531, %v3530
    %v3544 = vpack.c.bf16 %v3533, %v3532
    %v3545 = vpack.c.bf16 %v3535, %v3534
    %v3546 = vpack.c.bf16 %v3537, %v3536
    %v3547 = vpack.c.bf16 %v3539, %v3538
    %s3548 = scalar_lea.vmem [#allocation3], 960
    %v3549 = vld [vmem:[%s3548] sm:$0xf]
    %v3550 = vld [vmem:[%s3548 + $0x4] sm:$0xf]
    %v3551 = vld [vmem:[%s3548 + $0x8] sm:$0xf]
    %v3552 = vld [vmem:[%s3548 + $0xc] sm:$0xf]
    %v3553 = vld [vmem:[%s3548 + $0x10] sm:$0xf]
    %v3554 = vld [vmem:[%s3548 + $0x14] sm:$0xf]
    %v3555 = vld [vmem:[%s3548 + $0x18] sm:$0xf]
    %v3556 = vld [vmem:[%s3548 + $0x1c] sm:$0xf]
    %v3557 = vld [vmem:[%s3548 + $0x20] sm:$0xf]
    %v3558 = vld [vmem:[%s3548 + $0x24] sm:$0xf]
    %v3559 = vld [vmem:[%s3548 + $0x28] sm:$0xf]
    %v3560 = vld [vmem:[%s3548 + $0x2c] sm:$0xf]
    %v3561 = vld [vmem:[%s3548 + $0x30] sm:$0xf]
    %v3562 = vld [vmem:[%s3548 + $0x34] sm:$0xf]
    %v3563 = vld [vmem:[%s3548 + $0x38] sm:$0xf]
    %v3564 = vld [vmem:[%s3548 + $0x3c] sm:$0xf]
    %v3565 = vld [vmem:[%s2] sm:$0xff]
    %v3566 = vld [vmem:[%s2 + $0x8] sm:$0xff]
    %v3567 = vld [vmem:[%s2 + $0x10] sm:$0xff]
    %v3568 = vld [vmem:[%s2 + $0x18] sm:$0xff]
    %v3569 = vld [vmem:[%s2 + $0x20] sm:$0xff]
    %v3570 = vld [vmem:[%s2 + $0x28] sm:$0xff]
    %v3571 = vld [vmem:[%s2 + $0x30] sm:$0xff]
    %v3572 = vld [vmem:[%s2 + $0x38] sm:$0xff]
    %v3573 = vld [vmem:[%s2 + $0x40] sm:$0xff]
    %v3574 = vld [vmem:[%s2 + $0x48] sm:$0xff]
    %v3575 = vld [vmem:[%s2 + $0x50] sm:$0xff]
    %v3576 = vld [vmem:[%s2 + $0x58] sm:$0xff]
    %v3577 = vld [vmem:[%s2 + $0x60] sm:$0xff]
    %v3578 = vld [vmem:[%s2 + $0x68] sm:$0xff]
    %v3579 = vld [vmem:[%s2 + $0x70] sm:$0xff]
    %v3580 = vld [vmem:[%s2 + $0x78] sm:$0xff]
    %v3581 = vpack.c.bf16 %v3566, %v3565
    %v3582 = vpack.c.bf16 %v3568, %v3567
    %v3583 = vpack.c.bf16 %v3570, %v3569
    %v3584 = vpack.c.bf16 %v3572, %v3571
    %v3585 = vpack.c.bf16 %v3574, %v3573
    %v3586 = vpack.c.bf16 %v3576, %v3575
    %v3587 = vpack.c.bf16 %v3578, %v3577
    %v3588 = vpack.c.bf16 %v3580, %v3579
    %s3589 = scalar_lea.vmem [#allocation3], 1024
    %v3590 = vld [vmem:[%s3589] sm:$0xf]
    %v3591 = vld [vmem:[%s3589 + $0x4] sm:$0xf]
    %v3592 = vld [vmem:[%s3589 + $0x8] sm:$0xf]
    %v3593 = vld [vmem:[%s3589 + $0xc] sm:$0xf]
    %v3594 = vld [vmem:[%s3589 + $0x10] sm:$0xf]
    %v3595 = vld [vmem:[%s3589 + $0x14] sm:$0xf]
    %v3596 = vld [vmem:[%s3589 + $0x18] sm:$0xf]
    %v3597 = vld [vmem:[%s3589 + $0x1c] sm:$0xf]
    %v3598 = vld [vmem:[%s3589 + $0x20] sm:$0xf]
    %v3599 = vld [vmem:[%s3589 + $0x24] sm:$0xf]
    %v3600 = vld [vmem:[%s3589 + $0x28] sm:$0xf]
    %v3601 = vld [vmem:[%s3589 + $0x2c] sm:$0xf]
    %v3602 = vld [vmem:[%s3589 + $0x30] sm:$0xf]
    %v3603 = vld [vmem:[%s3589 + $0x34] sm:$0xf]
    %v3604 = vld [vmem:[%s3589 + $0x38] sm:$0xf]
    %v3605 = vld [vmem:[%s3589 + $0x3c] sm:$0xf]
    %v3622 = vunpack.c.l.b16 %v3590
    %v3623 = vunpack.c.l.b16 %v3591
    %v3624 = vunpack.c.l.b16 %v3592
    %v3625 = vunpack.c.l.b16 %v3593
    %v3626 = vunpack.c.l.b16 %v3594
    %v3627 = vunpack.c.l.b16 %v3595
    %v3628 = vunpack.c.l.b16 %v3596
    %v3629 = vunpack.c.l.b16 %v3597
    %v3630 = vunpack.c.l.b16 %v3598
    %v3631 = vunpack.c.l.b16 %v3599
    %v3632 = vunpack.c.l.b16 %v3600
    %v3633 = vunpack.c.l.b16 %v3601
    %v3634 = vunpack.c.l.b16 %v3602
    %v3635 = vunpack.c.l.b16 %v3603
    %v3636 = vunpack.c.l.b16 %v3604
    %v3637 = vunpack.c.l.b16 %v3605
    %v3638 = vpack.c.b16 %v3623, %v3622
    %v3639 = vpack.c.b16 %v3625, %v3624
    %v3640 = vpack.c.b16 %v3627, %v3626
    %v3641 = vpack.c.b16 %v3629, %v3628
    %v3642 = vpack.c.b16 %v3631, %v3630
    %v3643 = vpack.c.b16 %v3633, %v3632
    %v3644 = vpack.c.b16 %v3635, %v3634
    %v3645 = vpack.c.b16 %v3637, %v3636
    %3654 = vmatprep.subr.bf16.mxu0 0
    %3655 = vmatpush1.bf16.msra.mxu0 %v3645
    %3656 = vmatprep.subr.bf16.mxu0 0
    %3657 = vmatpush1.bf16.msra.mxu0 %v3644
    %3658 = vmatprep.subr.bf16.mxu0 0
    %3659 = vmatpush1.bf16.msra.mxu0 %v3643
    %3660 = vmatprep.subr.bf16.mxu0 0
    %3661 = vmatpush1.bf16.msra.mxu0 %v3642
    %3662 = vmatprep.subr.bf16.mxu0 0
    %3663 = vmatpush1.bf16.msra.mxu0 %v3641
    %3664 = vmatprep.subr.bf16.mxu0 0
    %3665 = vmatpush1.bf16.msra.mxu0 %v3640
    %3666 = vmatprep.subr.bf16.mxu0 0
    %3667 = vmatpush1.bf16.msra.mxu0 %v3639
    %3668 = vmatprep.subr.bf16.mxu0 0
    %3669 = vmatpush1.bf16.msra.mxu0 %v3638
    %3670 = vmatprep.subr.bf16.mxu0 0
    %3671 = vmatpush2.bf16.msra.mxu0 0
    %3672 = vmatprep.subr.bf16.mxu0 0
    %3673 = vmatpush2.bf16.msra.mxu0 0
    %3674 = vmatprep.subr.bf16.mxu0 0
    %3675 = vmatpush2.bf16.msra.mxu0 0
    %3676 = vmatprep.subr.bf16.mxu0 0
    %3677 = vmatpush2.bf16.msra.mxu0 0
    %3678 = vmatprep.subr.bf16.mxu0 0
    %3679 = vmatpush2.bf16.msra.mxu0 0
    %3680 = vmatprep.subr.bf16.mxu0 0
    %3681 = vmatpush2.bf16.msra.mxu0 0
    %3682 = vmatprep.subr.bf16.mxu0 0
    %3683 = vmatpush2.bf16.msra.mxu0 0
    %3684 = vmatprep.subr.bf16.mxu0 0
    %3685 = vmatpush2.bf16.msra.mxu0 0
    %3686 = vmatprep.mubr.bf16.mxu0 0
    %3687 = vmatmul.mubr.bf16.gmra.mxu0 %v3581
    %v3688 = vpop.f32.mrf.mxu0
    %v3689 = vadd.f32 0.0, %v3688
    %v3690 = vpop.f32.mrf.mxu0
    %v3691 = vpop.f32.mrf.mxu0
    %v3692 = vadd.f32 0.0, %v3691
    %v3693 = vpop.f32.mrf.mxu0
    %3694 = vmatprep.mubr.bf16.mxu0 0
    %3695 = vmatmul.mubr.bf16.gmra.mxu0 %v3582
    %v3696 = vpop.f32.mrf.mxu0
    %v3697 = vadd.f32 0.0, %v3696
    %v3698 = vpop.f32.mrf.mxu0
    %v3699 = vpop.f32.mrf.mxu0
    %v3700 = vadd.f32 0.0, %v3699
    %v3701 = vpop.f32.mrf.mxu0
    %3702 = vmatprep.mubr.bf16.mxu0 0
    %3703 = vmatmul.mubr.bf16.gmra.mxu0 %v3583
    %v3704 = vpop.f32.mrf.mxu0
    %v3705 = vadd.f32 0.0, %v3704
    %v3706 = vpop.f32.mrf.mxu0
    %v3707 = vpop.f32.mrf.mxu0
    %v3708 = vadd.f32 0.0, %v3707
    %v3709 = vpop.f32.mrf.mxu0
    %3710 = vmatprep.mubr.bf16.mxu0 0
    %3711 = vmatmul.mubr.bf16.gmra.mxu0 %v3584
    %v3712 = vpop.f32.mrf.mxu0
    %v3713 = vadd.f32 0.0, %v3712
    %v3714 = vpop.f32.mrf.mxu0
    %v3715 = vpop.f32.mrf.mxu0
    %v3716 = vadd.f32 0.0, %v3715
    %v3717 = vpop.f32.mrf.mxu0
    %3718 = vmatprep.mubr.bf16.mxu0 0
    %3719 = vmatmul.mubr.bf16.gmra.mxu0 %v3585
    %v3720 = vpop.f32.mrf.mxu0
    %v3721 = vadd.f32 0.0, %v3720
    %v3722 = vpop.f32.mrf.mxu0
    %v3723 = vpop.f32.mrf.mxu0
    %v3724 = vadd.f32 0.0, %v3723
    %v3725 = vpop.f32.mrf.mxu0
    %3726 = vmatprep.mubr.bf16.mxu0 0
    %3727 = vmatmul.mubr.bf16.gmra.mxu0 %v3586
    %v3728 = vpop.f32.mrf.mxu0
    %v3729 = vadd.f32 0.0, %v3728
    %v3730 = vpop.f32.mrf.mxu0
    %v3731 = vpop.f32.mrf.mxu0
    %v3732 = vadd.f32 0.0, %v3731
    %v3733 = vpop.f32.mrf.mxu0
    %3734 = vmatprep.mubr.bf16.mxu0 0
    %3735 = vmatmul.mubr.bf16.gmra.mxu0 %v3587
    %v3736 = vpop.f32.mrf.mxu0
    %v3737 = vadd.f32 0.0, %v3736
    %v3738 = vpop.f32.mrf.mxu0
    %v3739 = vpop.f32.mrf.mxu0
    %v3740 = vadd.f32 0.0, %v3739
    %v3741 = vpop.f32.mrf.mxu0
    %3742 = vmatprep.mubr.bf16.mxu0 0
    %3743 = vmatmul.mubr.bf16.gmra.mxu0 %v3588
    %v3744 = vpop.f32.mrf.mxu0
    %v3745 = vadd.f32 0.0, %v3744
    %v3746 = vpop.f32.mrf.mxu0
    %v3747 = vpop.f32.mrf.mxu0
    %v3748 = vadd.f32 0.0, %v3747
    %v3749 = vpop.f32.mrf.mxu0
    %3750 = vdwg.mxu0
    %v3767 = vunpack.c.l.b16 %v3549
    %v3768 = vunpack.c.l.b16 %v3550
    %v3769 = vunpack.c.l.b16 %v3551
    %v3770 = vunpack.c.l.b16 %v3552
    %v3771 = vunpack.c.l.b16 %v3553
    %v3772 = vunpack.c.l.b16 %v3554
    %v3773 = vunpack.c.l.b16 %v3555
    %v3774 = vunpack.c.l.b16 %v3556
    %v3775 = vunpack.c.l.b16 %v3557
    %v3776 = vunpack.c.l.b16 %v3558
    %v3777 = vunpack.c.l.b16 %v3559
    %v3778 = vunpack.c.l.b16 %v3560
    %v3779 = vunpack.c.l.b16 %v3561
    %v3780 = vunpack.c.l.b16 %v3562
    %v3781 = vunpack.c.l.b16 %v3563
    %v3782 = vunpack.c.l.b16 %v3564
    %v3783 = vpack.c.b16 %v3768, %v3767
    %v3784 = vpack.c.b16 %v3770, %v3769
    %v3785 = vpack.c.b16 %v3772, %v3771
    %v3786 = vpack.c.b16 %v3774, %v3773
    %v3787 = vpack.c.b16 %v3776, %v3775
    %v3788 = vpack.c.b16 %v3778, %v3777
    %v3789 = vpack.c.b16 %v3780, %v3779
    %v3790 = vpack.c.b16 %v3782, %v3781
    %3799 = vmatprep.subr.bf16.mxu0 0
    %3800 = vmatpush1.bf16.msra.mxu0 %v3790
    %3801 = vmatprep.subr.bf16.mxu0 0
    %3802 = vmatpush1.bf16.msra.mxu0 %v3789
    %3803 = vmatprep.subr.bf16.mxu0 0
    %3804 = vmatpush1.bf16.msra.mxu0 %v3788
    %3805 = vmatprep.subr.bf16.mxu0 0
    %3806 = vmatpush1.bf16.msra.mxu0 %v3787
    %3807 = vmatprep.subr.bf16.mxu0 0
    %3808 = vmatpush1.bf16.msra.mxu0 %v3786
    %3809 = vmatprep.subr.bf16.mxu0 0
    %3810 = vmatpush1.bf16.msra.mxu0 %v3785
    %3811 = vmatprep.subr.bf16.mxu0 0
    %3812 = vmatpush1.bf16.msra.mxu0 %v3784
    %3813 = vmatprep.subr.bf16.mxu0 0
    %3814 = vmatpush1.bf16.msra.mxu0 %v3783
    %3815 = vmatprep.subr.bf16.mxu0 0
    %3816 = vmatpush2.bf16.msra.mxu0 0
    %3817 = vmatprep.subr.bf16.mxu0 0
    %3818 = vmatpush2.bf16.msra.mxu0 0
    %3819 = vmatprep.subr.bf16.mxu0 0
    %3820 = vmatpush2.bf16.msra.mxu0 0
    %3821 = vmatprep.subr.bf16.mxu0 0
    %3822 = vmatpush2.bf16.msra.mxu0 0
    %3823 = vmatprep.subr.bf16.mxu0 0
    %3824 = vmatpush2.bf16.msra.mxu0 0
    %3825 = vmatprep.subr.bf16.mxu0 0
    %3826 = vmatpush2.bf16.msra.mxu0 0
    %3827 = vmatprep.subr.bf16.mxu0 0
    %3828 = vmatpush2.bf16.msra.mxu0 0
    %3829 = vmatprep.subr.bf16.mxu0 0
    %3830 = vmatpush2.bf16.msra.mxu0 0
    %3831 = vmatprep.mubr.bf16.mxu0 0
    %3832 = vmatmul.mubr.bf16.gmra.mxu0 %v3540
    %v3833 = vpop.f32.mrf.mxu0
    %v3834 = vadd.f32 %v3689, %v3833
    %v3835 = vpop.f32.mrf.mxu0
    %v3836 = vpop.f32.mrf.mxu0
    %v3837 = vadd.f32 %v3692, %v3836
    %v3838 = vpop.f32.mrf.mxu0
    %3839 = vmatprep.mubr.bf16.mxu0 0
    %3840 = vmatmul.mubr.bf16.gmra.mxu0 %v3541
    %v3841 = vpop.f32.mrf.mxu0
    %v3842 = vadd.f32 %v3697, %v3841
    %v3843 = vpop.f32.mrf.mxu0
    %v3844 = vpop.f32.mrf.mxu0
    %v3845 = vadd.f32 %v3700, %v3844
    %v3846 = vpop.f32.mrf.mxu0
    %3847 = vmatprep.mubr.bf16.mxu0 0
    %3848 = vmatmul.mubr.bf16.gmra.mxu0 %v3542
    %v3849 = vpop.f32.mrf.mxu0
    %v3850 = vadd.f32 %v3705, %v3849
    %v3851 = vpop.f32.mrf.mxu0
    %v3852 = vpop.f32.mrf.mxu0
    %v3853 = vadd.f32 %v3708, %v3852
    %v3854 = vpop.f32.mrf.mxu0
    %3855 = vmatprep.mubr.bf16.mxu0 0
    %3856 = vmatmul.mubr.bf16.gmra.mxu0 %v3543
    %v3857 = vpop.f32.mrf.mxu0
    %v3858 = vadd.f32 %v3713, %v3857
    %v3859 = vpop.f32.mrf.mxu0
    %v3860 = vpop.f32.mrf.mxu0
    %v3861 = vadd.f32 %v3716, %v3860
    %v3862 = vpop.f32.mrf.mxu0
    %3863 = vmatprep.mubr.bf16.mxu0 0
    %3864 = vmatmul.mubr.bf16.gmra.mxu0 %v3544
    %v3865 = vpop.f32.mrf.mxu0
    %v3866 = vadd.f32 %v3721, %v3865
    %v3867 = vpop.f32.mrf.mxu0
    %v3868 = vpop.f32.mrf.mxu0
    %v3869 = vadd.f32 %v3724, %v3868
    %v3870 = vpop.f32.mrf.mxu0
    %3871 = vmatprep.mubr.bf16.mxu0 0
    %3872 = vmatmul.mubr.bf16.gmra.mxu0 %v3545
    %v3873 = vpop.f32.mrf.mxu0
    %v3874 = vadd.f32 %v3729, %v3873
    %v3875 = vpop.f32.mrf.mxu0
    %v3876 = vpop.f32.mrf.mxu0
    %v3877 = vadd.f32 %v3732, %v3876
    %v3878 = vpop.f32.mrf.mxu0
    %3879 = vmatprep.mubr.bf16.mxu0 0
    %3880 = vmatmul.mubr.bf16.gmra.mxu0 %v3546
    %v3881 = vpop.f32.mrf.mxu0
    %v3882 = vadd.f32 %v3737, %v3881
    %v3883 = vpop.f32.mrf.mxu0
    %v3884 = vpop.f32.mrf.mxu0
    %v3885 = vadd.f32 %v3740, %v3884
    %v3886 = vpop.f32.mrf.mxu0
    %3887 = vmatprep.mubr.bf16.mxu0 0
    %3888 = vmatmul.mubr.bf16.gmra.mxu0 %v3547
    %v3889 = vpop.f32.mrf.mxu0
    %v3890 = vadd.f32 %v3745, %v3889
    %v3891 = vpop.f32.mrf.mxu0
    %v3892 = vpop.f32.mrf.mxu0
    %v3893 = vadd.f32 %v3748, %v3892
    %v3894 = vpop.f32.mrf.mxu0
    %3895 = vdwg.mxu0
    %v3896 = vmax.f32 %v3834, 0.0
    %v3897 = vmax.f32 %v3837, 0.0
    %v3898 = vmax.f32 %v3842, 0.0
    %v3899 = vmax.f32 %v3845, 0.0
    %v3900 = vmax.f32 %v3850, 0.0
    %v3901 = vmax.f32 %v3853, 0.0
    %v3902 = vmax.f32 %v3858, 0.0
    %v3903 = vmax.f32 %v3861, 0.0
    %v3904 = vmax.f32 %v3866, 0.0
    %v3905 = vmax.f32 %v3869, 0.0
    %v3906 = vmax.f32 %v3874, 0.0
    %v3907 = vmax.f32 %v3877, 0.0
    %v3908 = vmax.f32 %v3882, 0.0
    %v3909 = vmax.f32 %v3885, 0.0
    %v3910 = vmax.f32 %v3890, 0.0
    %v3911 = vmax.f32 %v3893, 0.0
    %v3912 = vadd.f32 %v3565, %v3896
    %v3913 = vadd.f32 %v3566, %v3897
    %v3914 = vadd.f32 %v3567, %v3898
    %v3915 = vadd.f32 %v3568, %v3899
    %v3916 = vadd.f32 %v3569, %v3900
    %v3917 = vadd.f32 %v3570, %v3901
    %v3918 = vadd.f32 %v3571, %v3902
    %v3919 = vadd.f32 %v3572, %v3903
    %v3920 = vadd.f32 %v3573, %v3904
    %v3921 = vadd.f32 %v3574, %v3905
    %v3922 = vadd.f32 %v3575, %v3906
    %v3923 = vadd.f32 %v3576, %v3907
    %v3924 = vadd.f32 %v3577, %v3908
    %v3925 = vadd.f32 %v3578, %v3909
    %v3926 = vadd.f32 %v3579, %v3910
    %v3927 = vadd.f32 %v3580, %v3911
    %3928 = vst [vmem:[%s2] sm:$0xff] %v3912
    %3929 = vst [vmem:[%s2 + $0x8] sm:$0xff] %v3913
    %3930 = vst [vmem:[%s2 + $0x10] sm:$0xff] %v3914
    %3931 = vst [vmem:[%s2 + $0x18] sm:$0xff] %v3915
    %3932 = vst [vmem:[%s2 + $0x20] sm:$0xff] %v3916
    %3933 = vst [vmem:[%s2 + $0x28] sm:$0xff] %v3917
    %3934 = vst [vmem:[%s2 + $0x30] sm:$0xff] %v3918
    %3935 = vst [vmem:[%s2 + $0x38] sm:$0xff] %v3919
    %3936 = vst [vmem:[%s2 + $0x40] sm:$0xff] %v3920
    %3937 = vst [vmem:[%s2 + $0x48] sm:$0xff] %v3921
    %3938 = vst [vmem:[%s2 + $0x50] sm:$0xff] %v3922
    %3939 = vst [vmem:[%s2 + $0x58] sm:$0xff] %v3923
    %3940 = vst [vmem:[%s2 + $0x60] sm:$0xff] %v3924
    %3941 = vst [vmem:[%s2 + $0x68] sm:$0xff] %v3925
    %3942 = vst [vmem:[%s2 + $0x70] sm:$0xff] %v3926
    %3943 = vst [vmem:[%s2 + $0x78] sm:$0xff] %v3927
    %v3944 = vld [vmem:[%s2] sm:$0xff]
    %v3945 = vld [vmem:[%s2 + $0x8] sm:$0xff]
    %v3946 = vld [vmem:[%s2 + $0x10] sm:$0xff]
    %v3947 = vld [vmem:[%s2 + $0x18] sm:$0xff]
    %v3948 = vld [vmem:[%s2 + $0x20] sm:$0xff]
    %v3949 = vld [vmem:[%s2 + $0x28] sm:$0xff]
    %v3950 = vld [vmem:[%s2 + $0x30] sm:$0xff]
    %v3951 = vld [vmem:[%s2 + $0x38] sm:$0xff]
    %v3952 = vld [vmem:[%s2 + $0x40] sm:$0xff]
    %v3953 = vld [vmem:[%s2 + $0x48] sm:$0xff]
    %v3954 = vld [vmem:[%s2 + $0x50] sm:$0xff]
    %v3955 = vld [vmem:[%s2 + $0x58] sm:$0xff]
    %v3956 = vld [vmem:[%s2 + $0x60] sm:$0xff]
    %v3957 = vld [vmem:[%s2 + $0x68] sm:$0xff]
    %v3958 = vld [vmem:[%s2 + $0x70] sm:$0xff]
    %v3959 = vld [vmem:[%s2 + $0x78] sm:$0xff]
    %v3960 = vpack.c.bf16 %v3945, %v3944
    %v3961 = vpack.c.bf16 %v3947, %v3946
    %v3962 = vpack.c.bf16 %v3949, %v3948
    %v3963 = vpack.c.bf16 %v3951, %v3950
    %v3964 = vpack.c.bf16 %v3953, %v3952
    %v3965 = vpack.c.bf16 %v3955, %v3954
    %v3966 = vpack.c.bf16 %v3957, %v3956
    %v3967 = vpack.c.bf16 %v3959, %v3958
    %s3968 = scalar_lea.vmem [#allocation3], 1088
    %v3969 = vld [vmem:[%s3968] sm:$0xf]
    %v3970 = vld [vmem:[%s3968 + $0x4] sm:$0xf]
    %v3971 = vld [vmem:[%s3968 + $0x8] sm:$0xf]
    %v3972 = vld [vmem:[%s3968 + $0xc] sm:$0xf]
    %v3973 = vld [vmem:[%s3968 + $0x10] sm:$0xf]
    %v3974 = vld [vmem:[%s3968 + $0x14] sm:$0xf]
    %v3975 = vld [vmem:[%s3968 + $0x18] sm:$0xf]
    %v3976 = vld [vmem:[%s3968 + $0x1c] sm:$0xf]
    %v3977 = vld [vmem:[%s3968 + $0x20] sm:$0xf]
    %v3978 = vld [vmem:[%s3968 + $0x24] sm:$0xf]
    %v3979 = vld [vmem:[%s3968 + $0x28] sm:$0xf]
    %v3980 = vld [vmem:[%s3968 + $0x2c] sm:$0xf]
    %v3981 = vld [vmem:[%s3968 + $0x30] sm:$0xf]
    %v3982 = vld [vmem:[%s3968 + $0x34] sm:$0xf]
    %v3983 = vld [vmem:[%s3968 + $0x38] sm:$0xf]
    %v3984 = vld [vmem:[%s3968 + $0x3c] sm:$0xf]
    %v4001 = vunpack.c.l.b16 %v3969
    %v4002 = vunpack.c.l.b16 %v3970
    %v4003 = vunpack.c.l.b16 %v3971
    %v4004 = vunpack.c.l.b16 %v3972
    %v4005 = vunpack.c.l.b16 %v3973
    %v4006 = vunpack.c.l.b16 %v3974
    %v4007 = vunpack.c.l.b16 %v3975
    %v4008 = vunpack.c.l.b16 %v3976
    %v4009 = vunpack.c.l.b16 %v3977
    %v4010 = vunpack.c.l.b16 %v3978
    %v4011 = vunpack.c.l.b16 %v3979
    %v4012 = vunpack.c.l.b16 %v3980
    %v4013 = vunpack.c.l.b16 %v3981
    %v4014 = vunpack.c.l.b16 %v3982
    %v4015 = vunpack.c.l.b16 %v3983
    %v4016 = vunpack.c.l.b16 %v3984
    %v4017 = vpack.c.b16 %v4002, %v4001
    %v4018 = vpack.c.b16 %v4004, %v4003
    %v4019 = vpack.c.b16 %v4006, %v4005
    %v4020 = vpack.c.b16 %v4008, %v4007
    %v4021 = vpack.c.b16 %v4010, %v4009
    %v4022 = vpack.c.b16 %v4012, %v4011
    %v4023 = vpack.c.b16 %v4014, %v4013
    %v4024 = vpack.c.b16 %v4016, %v4015
    %4033 = vmatprep.subr.bf16.mxu0 0
    %4034 = vmatpush1.bf16.msra.mxu0 %v4024
    %4035 = vmatprep.subr.bf16.mxu0 0
    %4036 = vmatpush1.bf16.msra.mxu0 %v4023
    %4037 = vmatprep.subr.bf16.mxu0 0
    %4038 = vmatpush1.bf16.msra.mxu0 %v4022
    %4039 = vmatprep.subr.bf16.mxu0 0
    %4040 = vmatpush1.bf16.msra.mxu0 %v4021
    %4041 = vmatprep.subr.bf16.mxu0 0
    %4042 = vmatpush1.bf16.msra.mxu0 %v4020
    %4043 = vmatprep.subr.bf16.mxu0 0
    %4044 = vmatpush1.bf16.msra.mxu0 %v4019
    %4045 = vmatprep.subr.bf16.mxu0 0
    %4046 = vmatpush1.bf16.msra.mxu0 %v4018
    %4047 = vmatprep.subr.bf16.mxu0 0
    %4048 = vmatpush1.bf16.msra.mxu0 %v4017
    %4049 = vmatprep.subr.bf16.mxu0 0
    %4050 = vmatpush2.bf16.msra.mxu0 0
    %4051 = vmatprep.subr.bf16.mxu0 0
    %4052 = vmatpush2.bf16.msra.mxu0 0
    %4053 = vmatprep.subr.bf16.mxu0 0
    %4054 = vmatpush2.bf16.msra.mxu0 0
    %4055 = vmatprep.subr.bf16.mxu0 0
    %4056 = vmatpush2.bf16.msra.mxu0 0
    %4057 = vmatprep.subr.bf16.mxu0 0
    %4058 = vmatpush2.bf16.msra.mxu0 0
    %4059 = vmatprep.subr.bf16.mxu0 0
    %4060 = vmatpush2.bf16.msra.mxu0 0
    %4061 = vmatprep.subr.bf16.mxu0 0
    %4062 = vmatpush2.bf16.msra.mxu0 0
    %4063 = vmatprep.subr.bf16.mxu0 0
    %4064 = vmatpush2.bf16.msra.mxu0 0
    %4065 = vmatprep.mubr.bf16.mxu0 0
    %4066 = vmatmul.mubr.bf16.gmra.mxu0 %v3960
    %v4067 = vpop.f32.mrf.mxu0
    %v4068 = vadd.f32 0.0, %v4067
    %v4069 = vpop.f32.mrf.mxu0
    %v4070 = vpop.f32.mrf.mxu0
    %v4071 = vadd.f32 0.0, %v4070
    %v4072 = vpop.f32.mrf.mxu0
    %4073 = vmatprep.mubr.bf16.mxu0 0
    %4074 = vmatmul.mubr.bf16.gmra.mxu0 %v3961
    %v4075 = vpop.f32.mrf.mxu0
    %v4076 = vadd.f32 0.0, %v4075
    %v4077 = vpop.f32.mrf.mxu0
    %v4078 = vpop.f32.mrf.mxu0
    %v4079 = vadd.f32 0.0, %v4078
    %v4080 = vpop.f32.mrf.mxu0
    %4081 = vmatprep.mubr.bf16.mxu0 0
    %4082 = vmatmul.mubr.bf16.gmra.mxu0 %v3962
    %v4083 = vpop.f32.mrf.mxu0
    %v4084 = vadd.f32 0.0, %v4083
    %v4085 = vpop.f32.mrf.mxu0
    %v4086 = vpop.f32.mrf.mxu0
    %v4087 = vadd.f32 0.0, %v4086
    %v4088 = vpop.f32.mrf.mxu0
    %4089 = vmatprep.mubr.bf16.mxu0 0
    %4090 = vmatmul.mubr.bf16.gmra.mxu0 %v3963
    %v4091 = vpop.f32.mrf.mxu0
    %v4092 = vadd.f32 0.0, %v4091
    %v4093 = vpop.f32.mrf.mxu0
    %v4094 = vpop.f32.mrf.mxu0
    %v4095 = vadd.f32 0.0, %v4094
    %v4096 = vpop.f32.mrf.mxu0
    %4097 = vmatprep.mubr.bf16.mxu0 0
    %4098 = vmatmul.mubr.bf16.gmra.mxu0 %v3964
    %v4099 = vpop.f32.mrf.mxu0
    %v4100 = vadd.f32 0.0, %v4099
    %v4101 = vpop.f32.mrf.mxu0
    %v4102 = vpop.f32.mrf.mxu0
    %v4103 = vadd.f32 0.0, %v4102
    %v4104 = vpop.f32.mrf.mxu0
    %4105 = vmatprep.mubr.bf16.mxu0 0
    %4106 = vmatmul.mubr.bf16.gmra.mxu0 %v3965
    %v4107 = vpop.f32.mrf.mxu0
    %v4108 = vadd.f32 0.0, %v4107
    %v4109 = vpop.f32.mrf.mxu0
    %v4110 = vpop.f32.mrf.mxu0
    %v4111 = vadd.f32 0.0, %v4110
    %v4112 = vpop.f32.mrf.mxu0
    %4113 = vmatprep.mubr.bf16.mxu0 0
    %4114 = vmatmul.mubr.bf16.gmra.mxu0 %v3966
    %v4115 = vpop.f32.mrf.mxu0
    %v4116 = vadd.f32 0.0, %v4115
    %v4117 = vpop.f32.mrf.mxu0
    %v4118 = vpop.f32.mrf.mxu0
    %v4119 = vadd.f32 0.0, %v4118
    %v4120 = vpop.f32.mrf.mxu0
    %4121 = vmatprep.mubr.bf16.mxu0 0
    %4122 = vmatmul.mubr.bf16.gmra.mxu0 %v3967
    %v4123 = vpop.f32.mrf.mxu0
    %v4124 = vadd.f32 0.0, %v4123
    %v4125 = vpop.f32.mrf.mxu0
    %v4126 = vpop.f32.mrf.mxu0
    %v4127 = vadd.f32 0.0, %v4126
    %v4128 = vpop.f32.mrf.mxu0
    %4129 = vdwg.mxu0
    %v4130 = vadd.f32 %v3944, %v4068
    %v4131 = vadd.f32 %v3945, %v4071
    %v4132 = vadd.f32 %v3946, %v4076
    %v4133 = vadd.f32 %v3947, %v4079
    %v4134 = vadd.f32 %v3948, %v4084
    %v4135 = vadd.f32 %v3949, %v4087
    %v4136 = vadd.f32 %v3950, %v4092
    %v4137 = vadd.f32 %v3951, %v4095
    %v4138 = vadd.f32 %v3952, %v4100
    %v4139 = vadd.f32 %v3953, %v4103
    %v4140 = vadd.f32 %v3954, %v4108
    %v4141 = vadd.f32 %v3955, %v4111
    %v4142 = vadd.f32 %v3956, %v4116
    %v4143 = vadd.f32 %v3957, %v4119
    %v4144 = vadd.f32 %v3958, %v4124
    %v4145 = vadd.f32 %v3959, %v4127
    %4146 = vst [vmem:[%s2] sm:$0xff] %v4130
    %4147 = vst [vmem:[%s2 + $0x8] sm:$0xff] %v4131
    %4148 = vst [vmem:[%s2 + $0x10] sm:$0xff] %v4132
    %4149 = vst [vmem:[%s2 + $0x18] sm:$0xff] %v4133
    %4150 = vst [vmem:[%s2 + $0x20] sm:$0xff] %v4134
    %4151 = vst [vmem:[%s2 + $0x28] sm:$0xff] %v4135
    %4152 = vst [vmem:[%s2 + $0x30] sm:$0xff] %v4136
    %4153 = vst [vmem:[%s2 + $0x38] sm:$0xff] %v4137
    %4154 = vst [vmem:[%s2 + $0x40] sm:$0xff] %v4138
    %4155 = vst [vmem:[%s2 + $0x48] sm:$0xff] %v4139
    %4156 = vst [vmem:[%s2 + $0x50] sm:$0xff] %v4140
    %4157 = vst [vmem:[%s2 + $0x58] sm:$0xff] %v4141
    %4158 = vst [vmem:[%s2 + $0x60] sm:$0xff] %v4142
    %4159 = vst [vmem:[%s2 + $0x68] sm:$0xff] %v4143
    %4160 = vst [vmem:[%s2 + $0x70] sm:$0xff] %v4144
    %4161 = vst [vmem:[%s2 + $0x78] sm:$0xff] %v4145
    // Predicated region
    $region14: #{pnet2_apply.1} parent=1 // pred_check
      _
    $region15: #{pnet2_apply.1} parent=1 // pred_check_branch
      %4163 = sbr.rel (0) target = $region17
    $region16: #{pnet2_apply.1} parent=1 // pred_region
      _
    $region17: #{pnet2_apply.1} parent=1 // pred_fallthru
      _
    // Predicated region
    $region18: #{pnet2_apply.1} parent=1 // pred_check
      _
    $region19: #{pnet2_apply.1} parent=1 // pred_check_branch
      %4165 = sbr.rel (0) target = $region21
    $region20: #{pnet2_apply.1} parent=1 // pred_region
      _
    $region21: #{pnet2_apply.1} parent=1 // pred_fallthru
      _
    %4166 = vsyncpa [#allocation4], 1

</llo_original>
